<compile_context>
chip_gen: v7x
topology: tpu7x:2x2x1
jax: 0.10.0
libtpu: 0.0.40
codegen_flags: <defaults>
</compile_context>

<pallas_src>
import jax
import jax.numpy as jnp
from jax.experimental import pallas as pl
from jax.experimental.pallas import tpu as pltpu

# ----------------------------- model config ---------------------------------
NUM_FEATURES = 4      # num_features
HIDDEN = 32           # hidden_size
NUM_LAYERS = 2        # num_layers (hard-wired to 2 below)
OUTPUT_WINDOW = 4     # output_window
OUTPUT_DIM = 2        # output_dim (must be 2: decoder seed is src[:, -1, [0, 2]])
SEQ_LEN = 8           # input sequence length
BATCH = 2             # batch size

H4 = 4 * HIDDEN       # 128 = gate width = lane width
IN_PAD = HIDDEN       # every weight block padded to (32, 128) so slab slices are tile-aligned

# weight-slab indices: each w_slab[k] is a (IN_PAD, 4H) bf16 block (zero-padded rows)
W_E_X0, W_E_H0, W_E_X1, W_E_H1 = 0, 1, 2, 3
W_D_H0, W_D_XS, W_D_XF, W_D_X1, W_D_H1, W_HEAD = 4, 5, 6, 7, 8, 9
# bias-slab rows: each b_slab[k] is a (1, 128) f32 row
B_E0, B_E1, B_D0S, B_D0F, B_D1, B_HEAD = 0, 1, 2, 3, 4, 5


# ------------------------------ kernel helpers --------------------------------
def _step(pre, c):
    """LSTM gate math from (B, 4H) pre-activations whose g-gate columns were
    pre-scaled by 2: ONE full-width sigmoid EUP pass; tanh(g) recovered as
    2*sigmoid(2g)-1 on the VPU.  Cell state stays f32; the new hidden state is
    returned directly in bf16 (its only consumers are MXU matmuls)."""
    H = HIDDEN
    sig = jax.nn.sigmoid(pre)
    i = sig[:, 0 * H:1 * H]
    f = sig[:, 1 * H:2 * H]
    g = 2.0 * sig[:, 2 * H:3 * H] - 1.0
    o = sig[:, 3 * H:4 * H]
    c_new = f * c + i * g
    h_bf = (o * jnp.tanh(c_new)).astype(jnp.bfloat16)
    return h_bf, c_new


# ------------------------------ kernel body ------------------------------------
def forecast_kernel(x_ref, w_ref, b_ref, out_ref):
    f32 = jnp.float32
    B, T, H = BATCH, SEQ_LEN, HIDDEN
    TB = T * B

    # ---- bulk, off-recurrence work -------------------------------------------
    # encoder layer-0 input gates for all T steps: one (T*B, 32) @ (32, 128) matmul
    xg = (jnp.dot(x_ref[0:TB, :], w_ref[W_E_X0], preferred_element_type=f32)
          + b_ref[B_E0:B_E0 + 1, :])                                   # (T*B, 4H)
    # decoder step-0 input gates (proj folded into the weight), recurrence-independent
    seed_g = (jnp.dot(x_ref[TB:TB + B, :], w_ref[W_D_XS],
                      preferred_element_type=f32)
              + b_ref[B_D0S:B_D0S + 1, :])                             # (B, 4H)

    # ---- encoder: wavefront schedule over (layer, time) diagonals -------------
    e_wh0 = w_ref[W_E_H0]
    e_wx1 = w_ref[W_E_X1]
    e_wh1 = w_ref[W_E_H1]
    e_b1 = b_ref[B_E1:B_E1 + 1, :]

    c0 = jnp.zeros((B, H), f32)
    c1 = jnp.zeros((B, H), f32)

    # wave 0: layer-0 @ t=0 (h0 = 0 -> recurrent matmul skipped, exact)
    h0, c0 = _step(xg[0:B, :], c0)

    # wave 1: layer-0 @ t=1 and layer-1 @ t=0 (h1 = 0 -> Wh1 matmul skipped).
    # Both pre-activations depend only on the same h0 from wave 0, so their
    # matmuls are independent and pipeline back-to-back in the MXU.
    pre0 = xg[B:2 * B, :] + jnp.dot(h0, e_wh0, preferred_element_type=f32)
    pre1 = jnp.dot(h0, e_wx1, preferred_element_type=f32) + e_b1
    h0, c0 = _step(pre0, c0)
    h1, c1 = _step(pre1, c1)

    # waves 2..T-1: layer-0 @ t and layer-1 @ t-1 (independent within a wave)
    for t in range(2, T):
        pre0 = (xg[t * B:(t + 1) * B, :]
                + jnp.dot(h0, e_wh0, preferred_element_type=f32))
        pre1 = (jnp.dot(h0, e_wx1, preferred_element_type=f32)
                + jnp.dot(h1, e_wh1, preferred_element_type=f32) + e_b1)
        h0, c0 = _step(pre0, c0)
        h1, c1 = _step(pre1, c1)

    # final wave: layer-1 @ t=T-1
    pre1 = (jnp.dot(h0, e_wx1, preferred_element_type=f32)
            + jnp.dot(h1, e_wh1, preferred_element_type=f32) + e_b1)
    h1, c1 = _step(pre1, c1)

    # ---- decoder: strictly serial (autoregressive through h1); head folded ----
    d_wh0 = w_ref[W_D_H0]
    d_wxf = w_ref[W_D_XF]
    d_wx1 = w_ref[W_D_X1]
    d_wh1 = w_ref[W_D_H1]
    d_b0f = b_ref[B_D0F:B_D0F + 1, :]
    d_b1 = b_ref[B_D1:B_D1 + 1, :]

    h1_steps = []
    # step 0: input projection already computed in seed_g
    pre0 = seed_g + jnp.dot(h0, d_wh0, preferred_element_type=f32)
    h0, c0 = _step(pre0, c0)
    pre1 = (jnp.dot(h0, d_wx1, preferred_element_type=f32)
            + jnp.dot(h1, d_wh1, preferred_element_type=f32) + d_b1)
    h1, c1 = _step(pre1, c1)
    h1_steps.append(h1)

    # steps 1..OW-1: fc + proj folded into layer-0 input weight -> the critical
    # path is cell -> cell only (no per-step head matmul / slice / concat)
    for _ in range(1, OUTPUT_WINDOW):
        pre0 = (jnp.dot(h1, d_wxf, preferred_element_type=f32)
                + jnp.dot(h0, d_wh0, preferred_element_type=f32) + d_b0f)
        h0, c0 = _step(pre0, c0)
        pre1 = (jnp.dot(h0, d_wx1, preferred_element_type=f32)
                + jnp.dot(h1, d_wh1, preferred_element_type=f32) + d_b1)
        h1, c1 = _step(pre1, c1)
        h1_steps.append(h1)

    # ---- batched multi-task head: one (OW*B, H) @ (H, 128) matmul and a single
    #      lane-dense (8, 128) store (only cols 0:3 are meaningful) -------------
    h1_all = jnp.concatenate(h1_steps, axis=0)                         # (OW*B, H) bf16
    out_ref[...] = (jnp.dot(h1_all, w_ref[W_HEAD], preferred_element_type=f32)
                    + b_ref[B_HEAD:B_HEAD + 1, :])


# --------------------- parameter fusion / folding for the kernel ---------------
def _scale_g(m):
    """Pre-scale the g-gate columns (2H:3H) by 2 (exact: power of two) so the
    kernel can recover tanh(g) from its single sigmoid pass as 2*sigmoid(2g)-1."""
    return m.at[..., 2 * HIDDEN:3 * HIDDEN].mul(2.0)


def _pad_rows(m):
    return jnp.pad(m, ((0, IN_PAD - m.shape[0]), (0, 0)))


def prepare_kernel_params(p):
    """Raw (x @ W layout) parameters -> (w_slab (10,32,128) bf16, b_slab (6,128) f32).

    Decoder layer-0 input foldings (all composed in f32 before the bf16 cast):
      step 0 :  seed @ (proj_w @ d0_wih)        + (proj_b @ d0_wih + d0_b)
      step s>0: h1   @ (fc_w @ proj_w @ d0_wih) + ((fc_b @ proj_w + proj_b) @ d0_wih + d0_b)
    fc and cls_fc are fused into one head, zero-padded to 128 output lanes."""
    (e0_wih, e0_whh, e0_b, e1_wih, e1_whh, e1_b,
     d0_wih, d0_whh, d0_b, d1_wih, d1_whh, d1_b,
     fc_w, fc_b, cls_w, cls_b, proj_w, proj_b) = p

    d_wx_seed = proj_w @ d0_wih                                        # (OD, 4H)
    d_b_seed = proj_b @ d0_wih + d0_b                                  # (1, 4H)
    d_wx_fold = fc_w @ proj_w @ d0_wih                                 # (H, 4H)
    d_b_fold = (fc_b @ proj_w + proj_b) @ d0_wih + d0_b                # (1, 4H)

    head_w = jnp.pad(jnp.concatenate([fc_w, cls_w], axis=1),
                     ((0, 0), (0, H4 - (OUTPUT_DIM + 1))))             # (H, 128)
    head_b = jnp.pad(jnp.concatenate([fc_b, cls_b], axis=1),
                     ((0, 0), (0, H4 - (OUTPUT_DIM + 1))))             # (1, 128)

    gate_ws = [e0_wih, e0_whh, e1_wih, e1_whh,
               d0_whh, d_wx_seed, d_wx_fold, d1_wih, d1_whh]
    w_slab = jnp.stack([_pad_rows(_scale_g(w)) for w in gate_ws]
                       + [_pad_rows(head_w)], axis=0).astype(jnp.bfloat16)

    gate_bs = [e0_b, e1_b, d_b_seed, d_b_fold, d1_b]
    b_slab = jnp.concatenate([_scale_g(b) for b in gate_bs] + [head_b],
                             axis=0).astype(jnp.float32)
    return w_slab, b_slab


# ------------------------------ wrapper -----------------------------------------
def forecast_net_mt(src, params):
    """src: (B, T, F) batch-first (PyTorch convention).  Returns
    (outputs (B, OW, OUTPUT_DIM), cls_outputs (B, OW, 1))."""
    B, T, F = src.shape
    src = src.astype(jnp.float32)

    # data slab: time-major src rows + decoder-seed rows (src[:, -1, [0, 2]]),
    # zero-padded to IN_PAD columns and pre-cast to bf16 in the wrapper.
    src_tm = jnp.transpose(src, (1, 0, 2)).reshape(T * B, F)
    seed = jnp.stack([src[:, -1, 0], src[:, -1, 2]], axis=-1)          # (B, 2)
    seed = jnp.pad(seed, ((0, 0), (0, F - OUTPUT_DIM)))
    x_slab = jnp.pad(jnp.concatenate([src_tm, seed], axis=0),
                     ((0, 0), (0, IN_PAD - F))).astype(jnp.bfloat16)   # (T*B+B, 32)

    w_slab, b_slab = prepare_kernel_params(params)

    vmem = pl.BlockSpec(memory_space=pltpu.MemorySpace.VMEM)
    packed = pl.pallas_call(
        forecast_kernel,
        out_shape=jax.ShapeDtypeStruct((OUTPUT_WINDOW * B, H4), jnp.float32),
        in_specs=[vmem, vmem, vmem],
        out_specs=vmem,
    )(x_slab, w_slab, b_slab)

    packed = jnp.transpose(packed.reshape(OUTPUT_WINDOW, B, H4), (1, 0, 2))
    return packed[:, :, :OUTPUT_DIM], packed[:, :, OUTPUT_DIM:OUTPUT_DIM + 1]


# ------------------------- deterministic parameter init -------------------------
def init_params(key):
    """PyTorch-style uniform(-1/sqrt(H), 1/sqrt(H)) init.  Weights stored
    pre-transposed (in_dim, out_dim) so the math is x @ W.  LSTM biases
    b_ih + b_hh are pre-summed into a single (1, 4H) bias."""
    s = 1.0 / float(jnp.sqrt(jnp.float32(HIDDEN)))
    keys = iter(jax.random.split(key, 32))

    def u(shape):
        return jax.random.uniform(next(keys), shape, jnp.float32, -s, s)

    params = []
    for _lstm in range(2):                       # encoder then decoder
        for in_dim in (NUM_FEATURES, HIDDEN):    # layer 0 then layer 1
            w_ih = u((in_dim, 4 * HIDDEN))
            w_hh = u((HIDDEN, 4 * HIDDEN))
            b = u((1, 4 * HIDDEN)) + u((1, 4 * HIDDEN))   # b_ih + b_hh
            params += [w_ih, w_hh, b]
    params += [u((HIDDEN, OUTPUT_DIM)), u((1, OUTPUT_DIM))]          # fc
    params += [u((HIDDEN, 1)), u((1, 1))]                            # cls_fc
    params += [u((OUTPUT_DIM, NUM_FEATURES)), u((1, NUM_FEATURES))]  # proj
    return params


# ------------------------------ pure-JAX reference ------------------------------
def reference_forward(src, p):
    (e0_wih, e0_whh, e0_b, e1_wih, e1_whh, e1_b,
     d0_wih, d0_whh, d0_b, d1_wih, d1_whh, d1_b,
     fc_w, fc_b, cls_w, cls_b, proj_w, proj_b) = p
    B, T, F = src.shape
    H = HIDDEN

    def cell(x, h, c, wih, whh, b):
        g = x @ wih + h @ whh + b
        i = jax.nn.sigmoid(g[:, :H])
        f = jax.nn.sigmoid(g[:, H:2 * H])
        gg = jnp.tanh(g[:, 2 * H:3 * H])
        o = jax.nn.sigmoid(g[:, 3 * H:])
        c = f * c + i * gg
        return o * jnp.tanh(c), c

    h0 = c0 = h1 = c1 = jnp.zeros((B, H), jnp.float32)
    for t in range(T):
        x = src[:, t, :]
        h0, c0 = cell(x, h0, c0, e0_wih, e0_whh, e0_b)
        h1, c1 = cell(h0, h1, c1, e1_wih, e1_whh, e1_b)
    dec_in = src[:, -1, :][:, jnp.array([0, 2])]
    outs, clss = [], []
    for _ in range(OUTPUT_WINDOW):
        xp = dec_in @ proj_w + proj_b
        h0, c0 = cell(xp, h0, c0, d0_wih, d0_whh, d0_b)
        h1, c1 = cell(h0, h1, c1, d1_wih, d1_whh, d1_b)
        pred = h1 @ fc_w + fc_b
        cls = h1 @ cls_w + cls_b
        outs.append(pred)
        clss.append(cls)
        dec_in = pred
    return jnp.stack(outs, axis=1), jnp.stack(clss, axis=1)


# ---------------------------------- main ----------------------------------------
if __name__ == "__main__":
    key = jax.random.PRNGKey(0)
    k_src, k_par = jax.random.split(key)

    src = jax.random.normal(k_src, (BATCH, SEQ_LEN, NUM_FEATURES), jnp.float32)
    params = init_params(k_par)

    outputs, cls_outputs = forecast_net_mt(src, params)
    outputs = jax.block_until_ready(outputs)
    cls_outputs = jax.block_until_ready(cls_outputs)

    assert outputs.shape == (BATCH, OUTPUT_WINDOW, OUTPUT_DIM)
    assert cls_outputs.shape == (BATCH, OUTPUT_WINDOW, 1)

    # sanity check against a pure-JAX f32 reference of the same math
    ref_out, ref_cls = reference_forward(src, params)
    assert jnp.allclose(outputs, ref_out, atol=5e-2, rtol=5e-2)
    assert jnp.allclose(cls_outputs, ref_cls, atol=5e-2, rtol=5e-2)

    print("KERNEL_OK")
</pallas_src>

<mosaic_0001>
module attributes {stable_mosaic.version = 11 : i64} {
  func.func @forecast_kernel(%arg0: memref<18x32xbf16, #tpu.memory_space<vmem>>, %arg1: memref<10x32x128xbf16, #tpu.memory_space<vmem>>, %arg2: memref<6x128xf32, #tpu.memory_space<vmem>>, %arg3: memref<8x128xf32, #tpu.memory_space<vmem>>) attributes {dimension_semantics = [], scalar_prefetch = 0 : i64, scratch_operands = 0 : i64, tpu.core_type = #tpu.core_type<tc>} {
    %c0 = arith.constant 0 : index
    %c0_0 = arith.constant 0 : index
    %0 = vector.load %arg0[%c0, %c0_0] : memref<18x32xbf16, #tpu.memory_space<vmem>>, vector<16x32xbf16>
    %c0_1 = arith.constant 0 : index
    %c0_2 = arith.constant 0 : index
    %c0_3 = arith.constant 0 : index
    %1 = vector.load %arg1[%c0_1, %c0_2, %c0_3] : memref<10x32x128xbf16, #tpu.memory_space<vmem>>, vector<1x32x128xbf16>
    %2 = vector.shape_cast %1 : vector<1x32x128xbf16> to vector<32x128xbf16>
    %cst = arith.constant dense<0.000000e+00> : vector<16x128xf32>
    %3 = tpu.matmul %0, %2, %cst {dimension_numbers = #tpu.dot_dimension_numbers<[1], [0], [0], [1], [0, 0, 1, 1], [], []>} : vector<16x32xbf16>, vector<32x128xbf16>, vector<16x128xf32> -> vector<16x128xf32>
    %c0_4 = arith.constant 0 : index
    %c0_5 = arith.constant 0 : index
    %4 = vector.load %arg2[%c0_4, %c0_5] : memref<6x128xf32, #tpu.memory_space<vmem>>, vector<1x128xf32>
    %5 = vector.broadcast %4 : vector<1x128xf32> to vector<16x128xf32>
    %6 = arith.addf %3, %5 : vector<16x128xf32>
    %c16 = arith.constant 16 : index
    %c0_6 = arith.constant 0 : index
    %7 = vector.load %arg0[%c16, %c0_6] : memref<18x32xbf16, #tpu.memory_space<vmem>>, vector<2x32xbf16>
    %c5 = arith.constant 5 : index
    %c0_7 = arith.constant 0 : index
    %c0_8 = arith.constant 0 : index
    %8 = vector.load %arg1[%c5, %c0_7, %c0_8] : memref<10x32x128xbf16, #tpu.memory_space<vmem>>, vector<1x32x128xbf16>
    %9 = vector.shape_cast %8 : vector<1x32x128xbf16> to vector<32x128xbf16>
    %cst_9 = arith.constant dense<0.000000e+00> : vector<2x128xf32>
    %10 = tpu.matmul %7, %9, %cst_9 {dimension_numbers = #tpu.dot_dimension_numbers<[1], [0], [0], [1], [0, 0, 1, 1], [], []>} : vector<2x32xbf16>, vector<32x128xbf16>, vector<2x128xf32> -> vector<2x128xf32>
    %c2 = arith.constant 2 : index
    %c0_10 = arith.constant 0 : index
    %11 = vector.load %arg2[%c2, %c0_10] : memref<6x128xf32, #tpu.memory_space<vmem>>, vector<1x128xf32>
    %12 = vector.broadcast %11 : vector<1x128xf32> to vector<2x128xf32>
    %13 = arith.addf %10, %12 : vector<2x128xf32>
    %c1 = arith.constant 1 : index
    %c0_11 = arith.constant 0 : index
    %c0_12 = arith.constant 0 : index
    %14 = vector.load %arg1[%c1, %c0_11, %c0_12] : memref<10x32x128xbf16, #tpu.memory_space<vmem>>, vector<1x32x128xbf16>
    %15 = vector.shape_cast %14 : vector<1x32x128xbf16> to vector<32x128xbf16>
    %c2_13 = arith.constant 2 : index
    %c0_14 = arith.constant 0 : index
    %c0_15 = arith.constant 0 : index
    %16 = vector.load %arg1[%c2_13, %c0_14, %c0_15] : memref<10x32x128xbf16, #tpu.memory_space<vmem>>, vector<1x32x128xbf16>
    %17 = vector.shape_cast %16 : vector<1x32x128xbf16> to vector<32x128xbf16>
    %c3 = arith.constant 3 : index
    %c0_16 = arith.constant 0 : index
    %c0_17 = arith.constant 0 : index
    %18 = vector.load %arg1[%c3, %c0_16, %c0_17] : memref<10x32x128xbf16, #tpu.memory_space<vmem>>, vector<1x32x128xbf16>
    %19 = vector.shape_cast %18 : vector<1x32x128xbf16> to vector<32x128xbf16>
    %c1_18 = arith.constant 1 : index
    %c0_19 = arith.constant 0 : index
    %20 = vector.load %arg2[%c1_18, %c0_19] : memref<6x128xf32, #tpu.memory_space<vmem>>, vector<1x128xf32>
    %cst_20 = arith.constant 0.000000e+00 : f32
    %21 = vector.broadcast %cst_20 : f32 to vector<2x32xf32>
    %cst_21 = arith.constant 0.000000e+00 : f32
    %22 = vector.broadcast %cst_21 : f32 to vector<2x32xf32>
    %23 = vector.extract_strided_slice %6 {offsets = [0, 0], sizes = [2, 128], strides = [1, 1]} : vector<16x128xf32> to vector<2x128xf32>
    %24 = arith.negf %23 : vector<2x128xf32>
    %25 = math.exp %24 : vector<2x128xf32>
    %cst_22 = arith.constant 1.000000e+00 : f32
    %26 = vector.broadcast %cst_22 : f32 to vector<2x128xf32>
    %27 = arith.addf %26, %25 : vector<2x128xf32>
    %28 = arith.divf %26, %27 : vector<2x128xf32>
    %29 = vector.extract_strided_slice %28 {offsets = [0, 0], sizes = [2, 32], strides = [1, 1]} : vector<2x128xf32> to vector<2x32xf32>
    %30 = vector.extract_strided_slice %28 {offsets = [0, 32], sizes = [2, 32], strides = [1, 1]} : vector<2x128xf32> to vector<2x32xf32>
    %31 = vector.extract_strided_slice %28 {offsets = [0, 64], sizes = [2, 32], strides = [1, 1]} : vector<2x128xf32> to vector<2x32xf32>
    %cst_23 = arith.constant 2.000000e+00 : f32
    %32 = vector.broadcast %cst_23 : f32 to vector<2x32xf32>
    %33 = arith.mulf %32, %31 : vector<2x32xf32>
    %cst_24 = arith.constant 1.000000e+00 : f32
    %34 = vector.broadcast %cst_24 : f32 to vector<2x32xf32>
    %35 = arith.subf %33, %34 : vector<2x32xf32>
    %36 = vector.extract_strided_slice %28 {offsets = [0, 96], sizes = [2, 32], strides = [1, 1]} : vector<2x128xf32> to vector<2x32xf32>
    %37 = arith.mulf %30, %21 : vector<2x32xf32>
    %38 = arith.mulf %29, %35 : vector<2x32xf32>
    %39 = arith.addf %37, %38 : vector<2x32xf32>
    %40 = math.tanh %39 : vector<2x32xf32>
    %41 = arith.mulf %36, %40 : vector<2x32xf32>
    %42 = arith.truncf %41 : vector<2x32xf32> to vector<2x32xbf16>
    %43 = vector.extract_strided_slice %6 {offsets = [2, 0], sizes = [2, 128], strides = [1, 1]} : vector<16x128xf32> to vector<2x128xf32>
    %cst_25 = arith.constant dense<0.000000e+00> : vector<2x128xf32>
    %44 = tpu.matmul %42, %15, %cst_25 {dimension_numbers = #tpu.dot_dimension_numbers<[1], [0], [0], [1], [0, 0, 1, 1], [], []>} : vector<2x32xbf16>, vector<32x128xbf16>, vector<2x128xf32> -> vector<2x128xf32>
    %45 = arith.addf %43, %44 : vector<2x128xf32>
    %cst_26 = arith.constant dense<0.000000e+00> : vector<2x128xf32>
    %46 = tpu.matmul %42, %17, %cst_26 {dimension_numbers = #tpu.dot_dimension_numbers<[1], [0], [0], [1], [0, 0, 1, 1], [], []>} : vector<2x32xbf16>, vector<32x128xbf16>, vector<2x128xf32> -> vector<2x128xf32>
    %47 = vector.broadcast %20 : vector<1x128xf32> to vector<2x128xf32>
    %48 = arith.addf %46, %47 : vector<2x128xf32>
    %49 = arith.negf %45 : vector<2x128xf32>
    %50 = math.exp %49 : vector<2x128xf32>
    %cst_27 = arith.constant 1.000000e+00 : f32
    %51 = vector.broadcast %cst_27 : f32 to vector<2x128xf32>
    %52 = arith.addf %51, %50 : vector<2x128xf32>
    %53 = arith.divf %51, %52 : vector<2x128xf32>
    %54 = vector.extract_strided_slice %53 {offsets = [0, 0], sizes = [2, 32], strides = [1, 1]} : vector<2x128xf32> to vector<2x32xf32>
    %55 = vector.extract_strided_slice %53 {offsets = [0, 32], sizes = [2, 32], strides = [1, 1]} : vector<2x128xf32> to vector<2x32xf32>
    %56 = vector.extract_strided_slice %53 {offsets = [0, 64], sizes = [2, 32], strides = [1, 1]} : vector<2x128xf32> to vector<2x32xf32>
    %cst_28 = arith.constant 2.000000e+00 : f32
    %57 = vector.broadcast %cst_28 : f32 to vector<2x32xf32>
    %58 = arith.mulf %57, %56 : vector<2x32xf32>
    %cst_29 = arith.constant 1.000000e+00 : f32
    %59 = vector.broadcast %cst_29 : f32 to vector<2x32xf32>
    %60 = arith.subf %58, %59 : vector<2x32xf32>
    %61 = vector.extract_strided_slice %53 {offsets = [0, 96], sizes = [2, 32], strides = [1, 1]} : vector<2x128xf32> to vector<2x32xf32>
    %62 = arith.mulf %55, %39 : vector<2x32xf32>
    %63 = arith.mulf %54, %60 : vector<2x32xf32>
    %64 = arith.addf %62, %63 : vector<2x32xf32>
    %65 = math.tanh %64 : vector<2x32xf32>
    %66 = arith.mulf %61, %65 : vector<2x32xf32>
    %67 = arith.truncf %66 : vector<2x32xf32> to vector<2x32xbf16>
    %68 = arith.negf %48 : vector<2x128xf32>
    %69 = math.exp %68 : vector<2x128xf32>
    %cst_30 = arith.constant 1.000000e+00 : f32
    %70 = vector.broadcast %cst_30 : f32 to vector<2x128xf32>
    %71 = arith.addf %70, %69 : vector<2x128xf32>
    %72 = arith.divf %70, %71 : vector<2x128xf32>
    %73 = vector.extract_strided_slice %72 {offsets = [0, 0], sizes = [2, 32], strides = [1, 1]} : vector<2x128xf32> to vector<2x32xf32>
    %74 = vector.extract_strided_slice %72 {offsets = [0, 32], sizes = [2, 32], strides = [1, 1]} : vector<2x128xf32> to vector<2x32xf32>
    %75 = vector.extract_strided_slice %72 {offsets = [0, 64], sizes = [2, 32], strides = [1, 1]} : vector<2x128xf32> to vector<2x32xf32>
    %cst_31 = arith.constant 2.000000e+00 : f32
    %76 = vector.broadcast %cst_31 : f32 to vector<2x32xf32>
    %77 = arith.mulf %76, %75 : vector<2x32xf32>
    %cst_32 = arith.constant 1.000000e+00 : f32
    %78 = vector.broadcast %cst_32 : f32 to vector<2x32xf32>
    %79 = arith.subf %77, %78 : vector<2x32xf32>
    %80 = vector.extract_strided_slice %72 {offsets = [0, 96], sizes = [2, 32], strides = [1, 1]} : vector<2x128xf32> to vector<2x32xf32>
    %81 = arith.mulf %74, %22 : vector<2x32xf32>
    %82 = arith.mulf %73, %79 : vector<2x32xf32>
    %83 = arith.addf %81, %82 : vector<2x32xf32>
    %84 = math.tanh %83 : vector<2x32xf32>
    %85 = arith.mulf %80, %84 : vector<2x32xf32>
    %86 = arith.truncf %85 : vector<2x32xf32> to vector<2x32xbf16>
    %87 = vector.extract_strided_slice %6 {offsets = [4, 0], sizes = [2, 128], strides = [1, 1]} : vector<16x128xf32> to vector<2x128xf32>
    %cst_33 = arith.constant dense<0.000000e+00> : vector<2x128xf32>
    %88 = tpu.matmul %67, %15, %cst_33 {dimension_numbers = #tpu.dot_dimension_numbers<[1], [0], [0], [1], [0, 0, 1, 1], [], []>} : vector<2x32xbf16>, vector<32x128xbf16>, vector<2x128xf32> -> vector<2x128xf32>
    %89 = arith.addf %87, %88 : vector<2x128xf32>
    %cst_34 = arith.constant dense<0.000000e+00> : vector<2x128xf32>
    %90 = tpu.matmul %67, %17, %cst_34 {dimension_numbers = #tpu.dot_dimension_numbers<[1], [0], [0], [1], [0, 0, 1, 1], [], []>} : vector<2x32xbf16>, vector<32x128xbf16>, vector<2x128xf32> -> vector<2x128xf32>
    %cst_35 = arith.constant dense<0.000000e+00> : vector<2x128xf32>
    %91 = tpu.matmul %86, %19, %cst_35 {dimension_numbers = #tpu.dot_dimension_numbers<[1], [0], [0], [1], [0, 0, 1, 1], [], []>} : vector<2x32xbf16>, vector<32x128xbf16>, vector<2x128xf32> -> vector<2x128xf32>
    %92 = arith.addf %90, %91 : vector<2x128xf32>
    %93 = vector.broadcast %20 : vector<1x128xf32> to vector<2x128xf32>
    %94 = arith.addf %92, %93 : vector<2x128xf32>
    %95 = arith.negf %89 : vector<2x128xf32>
    %96 = math.exp %95 : vector<2x128xf32>
    %cst_36 = arith.constant 1.000000e+00 : f32
    %97 = vector.broadcast %cst_36 : f32 to vector<2x128xf32>
    %98 = arith.addf %97, %96 : vector<2x128xf32>
    %99 = arith.divf %97, %98 : vector<2x128xf32>
    %100 = vector.extract_strided_slice %99 {offsets = [0, 0], sizes = [2, 32], strides = [1, 1]} : vector<2x128xf32> to vector<2x32xf32>
    %101 = vector.extract_strided_slice %99 {offsets = [0, 32], sizes = [2, 32], strides = [1, 1]} : vector<2x128xf32> to vector<2x32xf32>
    %102 = vector.extract_strided_slice %99 {offsets = [0, 64], sizes = [2, 32], strides = [1, 1]} : vector<2x128xf32> to vector<2x32xf32>
    %cst_37 = arith.constant 2.000000e+00 : f32
    %103 = vector.broadcast %cst_37 : f32 to vector<2x32xf32>
    %104 = arith.mulf %103, %102 : vector<2x32xf32>
    %cst_38 = arith.constant 1.000000e+00 : f32
    %105 = vector.broadcast %cst_38 : f32 to vector<2x32xf32>
    %106 = arith.subf %104, %105 : vector<2x32xf32>
    %107 = vector.extract_strided_slice %99 {offsets = [0, 96], sizes = [2, 32], strides = [1, 1]} : vector<2x128xf32> to vector<2x32xf32>
    %108 = arith.mulf %101, %64 : vector<2x32xf32>
    %109 = arith.mulf %100, %106 : vector<2x32xf32>
    %110 = arith.addf %108, %109 : vector<2x32xf32>
    %111 = math.tanh %110 : vector<2x32xf32>
    %112 = arith.mulf %107, %111 : vector<2x32xf32>
    %113 = arith.truncf %112 : vector<2x32xf32> to vector<2x32xbf16>
    %114 = arith.negf %94 : vector<2x128xf32>
    %115 = math.exp %114 : vector<2x128xf32>
    %cst_39 = arith.constant 1.000000e+00 : f32
    %116 = vector.broadcast %cst_39 : f32 to vector<2x128xf32>
    %117 = arith.addf %116, %115 : vector<2x128xf32>
    %118 = arith.divf %116, %117 : vector<2x128xf32>
    %119 = vector.extract_strided_slice %118 {offsets = [0, 0], sizes = [2, 32], strides = [1, 1]} : vector<2x128xf32> to vector<2x32xf32>
    %120 = vector.extract_strided_slice %118 {offsets = [0, 32], sizes = [2, 32], strides = [1, 1]} : vector<2x128xf32> to vector<2x32xf32>
    %121 = vector.extract_strided_slice %118 {offsets = [0, 64], sizes = [2, 32], strides = [1, 1]} : vector<2x128xf32> to vector<2x32xf32>
    %cst_40 = arith.constant 2.000000e+00 : f32
    %122 = vector.broadcast %cst_40 : f32 to vector<2x32xf32>
    %123 = arith.mulf %122, %121 : vector<2x32xf32>
    %cst_41 = arith.constant 1.000000e+00 : f32
    %124 = vector.broadcast %cst_41 : f32 to vector<2x32xf32>
    %125 = arith.subf %123, %124 : vector<2x32xf32>
    %126 = vector.extract_strided_slice %118 {offsets = [0, 96], sizes = [2, 32], strides = [1, 1]} : vector<2x128xf32> to vector<2x32xf32>
    %127 = arith.mulf %120, %83 : vector<2x32xf32>
    %128 = arith.mulf %119, %125 : vector<2x32xf32>
    %129 = arith.addf %127, %128 : vector<2x32xf32>
    %130 = math.tanh %129 : vector<2x32xf32>
    %131 = arith.mulf %126, %130 : vector<2x32xf32>
    %132 = arith.truncf %131 : vector<2x32xf32> to vector<2x32xbf16>
    %133 = vector.extract_strided_slice %6 {offsets = [6, 0], sizes = [2, 128], strides = [1, 1]} : vector<16x128xf32> to vector<2x128xf32>
    %cst_42 = arith.constant dense<0.000000e+00> : vector<2x128xf32>
    %134 = tpu.matmul %113, %15, %cst_42 {dimension_numbers = #tpu.dot_dimension_numbers<[1], [0], [0], [1], [0, 0, 1, 1], [], []>} : vector<2x32xbf16>, vector<32x128xbf16>, vector<2x128xf32> -> vector<2x128xf32>
    %135 = arith.addf %133, %134 : vector<2x128xf32>
    %cst_43 = arith.constant dense<0.000000e+00> : vector<2x128xf32>
    %136 = tpu.matmul %113, %17, %cst_43 {dimension_numbers = #tpu.dot_dimension_numbers<[1], [0], [0], [1], [0, 0, 1, 1], [], []>} : vector<2x32xbf16>, vector<32x128xbf16>, vector<2x128xf32> -> vector<2x128xf32>
    %cst_44 = arith.constant dense<0.000000e+00> : vector<2x128xf32>
    %137 = tpu.matmul %132, %19, %cst_44 {dimension_numbers = #tpu.dot_dimension_numbers<[1], [0], [0], [1], [0, 0, 1, 1], [], []>} : vector<2x32xbf16>, vector<32x128xbf16>, vector<2x128xf32> -> vector<2x128xf32>
    %138 = arith.addf %136, %137 : vector<2x128xf32>
    %139 = vector.broadcast %20 : vector<1x128xf32> to vector<2x128xf32>
    %140 = arith.addf %138, %139 : vector<2x128xf32>
    %141 = arith.negf %135 : vector<2x128xf32>
    %142 = math.exp %141 : vector<2x128xf32>
    %cst_45 = arith.constant 1.000000e+00 : f32
    %143 = vector.broadcast %cst_45 : f32 to vector<2x128xf32>
    %144 = arith.addf %143, %142 : vector<2x128xf32>
    %145 = arith.divf %143, %144 : vector<2x128xf32>
    %146 = vector.extract_strided_slice %145 {offsets = [0, 0], sizes = [2, 32], strides = [1, 1]} : vector<2x128xf32> to vector<2x32xf32>
    %147 = vector.extract_strided_slice %145 {offsets = [0, 32], sizes = [2, 32], strides = [1, 1]} : vector<2x128xf32> to vector<2x32xf32>
    %148 = vector.extract_strided_slice %145 {offsets = [0, 64], sizes = [2, 32], strides = [1, 1]} : vector<2x128xf32> to vector<2x32xf32>
    %cst_46 = arith.constant 2.000000e+00 : f32
    %149 = vector.broadcast %cst_46 : f32 to vector<2x32xf32>
    %150 = arith.mulf %149, %148 : vector<2x32xf32>
    %cst_47 = arith.constant 1.000000e+00 : f32
    %151 = vector.broadcast %cst_47 : f32 to vector<2x32xf32>
    %152 = arith.subf %150, %151 : vector<2x32xf32>
    %153 = vector.extract_strided_slice %145 {offsets = [0, 96], sizes = [2, 32], strides = [1, 1]} : vector<2x128xf32> to vector<2x32xf32>
    %154 = arith.mulf %147, %110 : vector<2x32xf32>
    %155 = arith.mulf %146, %152 : vector<2x32xf32>
    %156 = arith.addf %154, %155 : vector<2x32xf32>
    %157 = math.tanh %156 : vector<2x32xf32>
    %158 = arith.mulf %153, %157 : vector<2x32xf32>
    %159 = arith.truncf %158 : vector<2x32xf32> to vector<2x32xbf16>
    %160 = arith.negf %140 : vector<2x128xf32>
    %161 = math.exp %160 : vector<2x128xf32>
    %cst_48 = arith.constant 1.000000e+00 : f32
    %162 = vector.broadcast %cst_48 : f32 to vector<2x128xf32>
    %163 = arith.addf %162, %161 : vector<2x128xf32>
    %164 = arith.divf %162, %163 : vector<2x128xf32>
    %165 = vector.extract_strided_slice %164 {offsets = [0, 0], sizes = [2, 32], strides = [1, 1]} : vector<2x128xf32> to vector<2x32xf32>
    %166 = vector.extract_strided_slice %164 {offsets = [0, 32], sizes = [2, 32], strides = [1, 1]} : vector<2x128xf32> to vector<2x32xf32>
    %167 = vector.extract_strided_slice %164 {offsets = [0, 64], sizes = [2, 32], strides = [1, 1]} : vector<2x128xf32> to vector<2x32xf32>
    %cst_49 = arith.constant 2.000000e+00 : f32
    %168 = vector.broadcast %cst_49 : f32 to vector<2x32xf32>
    %169 = arith.mulf %168, %167 : vector<2x32xf32>
    %cst_50 = arith.constant 1.000000e+00 : f32
    %170 = vector.broadcast %cst_50 : f32 to vector<2x32xf32>
    %171 = arith.subf %169, %170 : vector<2x32xf32>
    %172 = vector.extract_strided_slice %164 {offsets = [0, 96], sizes = [2, 32], strides = [1, 1]} : vector<2x128xf32> to vector<2x32xf32>
    %173 = arith.mulf %166, %129 : vector<2x32xf32>
    %174 = arith.mulf %165, %171 : vector<2x32xf32>
    %175 = arith.addf %173, %174 : vector<2x32xf32>
    %176 = math.tanh %175 : vector<2x32xf32>
    %177 = arith.mulf %172, %176 : vector<2x32xf32>
    %178 = arith.truncf %177 : vector<2x32xf32> to vector<2x32xbf16>
    %179 = vector.extract_strided_slice %6 {offsets = [8, 0], sizes = [2, 128], strides = [1, 1]} : vector<16x128xf32> to vector<2x128xf32>
    %cst_51 = arith.constant dense<0.000000e+00> : vector<2x128xf32>
    %180 = tpu.matmul %159, %15, %cst_51 {dimension_numbers = #tpu.dot_dimension_numbers<[1], [0], [0], [1], [0, 0, 1, 1], [], []>} : vector<2x32xbf16>, vector<32x128xbf16>, vector<2x128xf32> -> vector<2x128xf32>
    %181 = arith.addf %179, %180 : vector<2x128xf32>
    %cst_52 = arith.constant dense<0.000000e+00> : vector<2x128xf32>
    %182 = tpu.matmul %159, %17, %cst_52 {dimension_numbers = #tpu.dot_dimension_numbers<[1], [0], [0], [1], [0, 0, 1, 1], [], []>} : vector<2x32xbf16>, vector<32x128xbf16>, vector<2x128xf32> -> vector<2x128xf32>
    %cst_53 = arith.constant dense<0.000000e+00> : vector<2x128xf32>
    %183 = tpu.matmul %178, %19, %cst_53 {dimension_numbers = #tpu.dot_dimension_numbers<[1], [0], [0], [1], [0, 0, 1, 1], [], []>} : vector<2x32xbf16>, vector<32x128xbf16>, vector<2x128xf32> -> vector<2x128xf32>
    %184 = arith.addf %182, %183 : vector<2x128xf32>
    %185 = vector.broadcast %20 : vector<1x128xf32> to vector<2x128xf32>
    %186 = arith.addf %184, %185 : vector<2x128xf32>
    %187 = arith.negf %181 : vector<2x128xf32>
    %188 = math.exp %187 : vector<2x128xf32>
    %cst_54 = arith.constant 1.000000e+00 : f32
    %189 = vector.broadcast %cst_54 : f32 to vector<2x128xf32>
    %190 = arith.addf %189, %188 : vector<2x128xf32>
    %191 = arith.divf %189, %190 : vector<2x128xf32>
    %192 = vector.extract_strided_slice %191 {offsets = [0, 0], sizes = [2, 32], strides = [1, 1]} : vector<2x128xf32> to vector<2x32xf32>
    %193 = vector.extract_strided_slice %191 {offsets = [0, 32], sizes = [2, 32], strides = [1, 1]} : vector<2x128xf32> to vector<2x32xf32>
    %194 = vector.extract_strided_slice %191 {offsets = [0, 64], sizes = [2, 32], strides = [1, 1]} : vector<2x128xf32> to vector<2x32xf32>
    %cst_55 = arith.constant 2.000000e+00 : f32
    %195 = vector.broadcast %cst_55 : f32 to vector<2x32xf32>
    %196 = arith.mulf %195, %194 : vector<2x32xf32>
    %cst_56 = arith.constant 1.000000e+00 : f32
    %197 = vector.broadcast %cst_56 : f32 to vector<2x32xf32>
    %198 = arith.subf %196, %197 : vector<2x32xf32>
    %199 = vector.extract_strided_slice %191 {offsets = [0, 96], sizes = [2, 32], strides = [1, 1]} : vector<2x128xf32> to vector<2x32xf32>
    %200 = arith.mulf %193, %156 : vector<2x32xf32>
    %201 = arith.mulf %192, %198 : vector<2x32xf32>
    %202 = arith.addf %200, %201 : vector<2x32xf32>
    %203 = math.tanh %202 : vector<2x32xf32>
    %204 = arith.mulf %199, %203 : vector<2x32xf32>
    %205 = arith.truncf %204 : vector<2x32xf32> to vector<2x32xbf16>
    %206 = arith.negf %186 : vector<2x128xf32>
    %207 = math.exp %206 : vector<2x128xf32>
    %cst_57 = arith.constant 1.000000e+00 : f32
    %208 = vector.broadcast %cst_57 : f32 to vector<2x128xf32>
    %209 = arith.addf %208, %207 : vector<2x128xf32>
    %210 = arith.divf %208, %209 : vector<2x128xf32>
    %211 = vector.extract_strided_slice %210 {offsets = [0, 0], sizes = [2, 32], strides = [1, 1]} : vector<2x128xf32> to vector<2x32xf32>
    %212 = vector.extract_strided_slice %210 {offsets = [0, 32], sizes = [2, 32], strides = [1, 1]} : vector<2x128xf32> to vector<2x32xf32>
    %213 = vector.extract_strided_slice %210 {offsets = [0, 64], sizes = [2, 32], strides = [1, 1]} : vector<2x128xf32> to vector<2x32xf32>
    %cst_58 = arith.constant 2.000000e+00 : f32
    %214 = vector.broadcast %cst_58 : f32 to vector<2x32xf32>
    %215 = arith.mulf %214, %213 : vector<2x32xf32>
    %cst_59 = arith.constant 1.000000e+00 : f32
    %216 = vector.broadcast %cst_59 : f32 to vector<2x32xf32>
    %217 = arith.subf %215, %216 : vector<2x32xf32>
    %218 = vector.extract_strided_slice %210 {offsets = [0, 96], sizes = [2, 32], strides = [1, 1]} : vector<2x128xf32> to vector<2x32xf32>
    %219 = arith.mulf %212, %175 : vector<2x32xf32>
    %220 = arith.mulf %211, %217 : vector<2x32xf32>
    %221 = arith.addf %219, %220 : vector<2x32xf32>
    %222 = math.tanh %221 : vector<2x32xf32>
    %223 = arith.mulf %218, %222 : vector<2x32xf32>
    %224 = arith.truncf %223 : vector<2x32xf32> to vector<2x32xbf16>
    %225 = vector.extract_strided_slice %6 {offsets = [10, 0], sizes = [2, 128], strides = [1, 1]} : vector<16x128xf32> to vector<2x128xf32>
    %cst_60 = arith.constant dense<0.000000e+00> : vector<2x128xf32>
    %226 = tpu.matmul %205, %15, %cst_60 {dimension_numbers = #tpu.dot_dimension_numbers<[1], [0], [0], [1], [0, 0, 1, 1], [], []>} : vector<2x32xbf16>, vector<32x128xbf16>, vector<2x128xf32> -> vector<2x128xf32>
    %227 = arith.addf %225, %226 : vector<2x128xf32>
    %cst_61 = arith.constant dense<0.000000e+00> : vector<2x128xf32>
    %228 = tpu.matmul %205, %17, %cst_61 {dimension_numbers = #tpu.dot_dimension_numbers<[1], [0], [0], [1], [0, 0, 1, 1], [], []>} : vector<2x32xbf16>, vector<32x128xbf16>, vector<2x128xf32> -> vector<2x128xf32>
    %cst_62 = arith.constant dense<0.000000e+00> : vector<2x128xf32>
    %229 = tpu.matmul %224, %19, %cst_62 {dimension_numbers = #tpu.dot_dimension_numbers<[1], [0], [0], [1], [0, 0, 1, 1], [], []>} : vector<2x32xbf16>, vector<32x128xbf16>, vector<2x128xf32> -> vector<2x128xf32>
    %230 = arith.addf %228, %229 : vector<2x128xf32>
    %231 = vector.broadcast %20 : vector<1x128xf32> to vector<2x128xf32>
    %232 = arith.addf %230, %231 : vector<2x128xf32>
    %233 = arith.negf %227 : vector<2x128xf32>
    %234 = math.exp %233 : vector<2x128xf32>
    %cst_63 = arith.constant 1.000000e+00 : f32
    %235 = vector.broadcast %cst_63 : f32 to vector<2x128xf32>
    %236 = arith.addf %235, %234 : vector<2x128xf32>
    %237 = arith.divf %235, %236 : vector<2x128xf32>
    %238 = vector.extract_strided_slice %237 {offsets = [0, 0], sizes = [2, 32], strides = [1, 1]} : vector<2x128xf32> to vector<2x32xf32>
    %239 = vector.extract_strided_slice %237 {offsets = [0, 32], sizes = [2, 32], strides = [1, 1]} : vector<2x128xf32> to vector<2x32xf32>
    %240 = vector.extract_strided_slice %237 {offsets = [0, 64], sizes = [2, 32], strides = [1, 1]} : vector<2x128xf32> to vector<2x32xf32>
    %cst_64 = arith.constant 2.000000e+00 : f32
    %241 = vector.broadcast %cst_64 : f32 to vector<2x32xf32>
    %242 = arith.mulf %241, %240 : vector<2x32xf32>
    %cst_65 = arith.constant 1.000000e+00 : f32
    %243 = vector.broadcast %cst_65 : f32 to vector<2x32xf32>
    %244 = arith.subf %242, %243 : vector<2x32xf32>
    %245 = vector.extract_strided_slice %237 {offsets = [0, 96], sizes = [2, 32], strides = [1, 1]} : vector<2x128xf32> to vector<2x32xf32>
    %246 = arith.mulf %239, %202 : vector<2x32xf32>
    %247 = arith.mulf %238, %244 : vector<2x32xf32>
    %248 = arith.addf %246, %247 : vector<2x32xf32>
    %249 = math.tanh %248 : vector<2x32xf32>
    %250 = arith.mulf %245, %249 : vector<2x32xf32>
    %251 = arith.truncf %250 : vector<2x32xf32> to vector<2x32xbf16>
    %252 = arith.negf %232 : vector<2x128xf32>
    %253 = math.exp %252 : vector<2x128xf32>
    %cst_66 = arith.constant 1.000000e+00 : f32
    %254 = vector.broadcast %cst_66 : f32 to vector<2x128xf32>
    %255 = arith.addf %254, %253 : vector<2x128xf32>
    %256 = arith.divf %254, %255 : vector<2x128xf32>
    %257 = vector.extract_strided_slice %256 {offsets = [0, 0], sizes = [2, 32], strides = [1, 1]} : vector<2x128xf32> to vector<2x32xf32>
    %258 = vector.extract_strided_slice %256 {offsets = [0, 32], sizes = [2, 32], strides = [1, 1]} : vector<2x128xf32> to vector<2x32xf32>
    %259 = vector.extract_strided_slice %256 {offsets = [0, 64], sizes = [2, 32], strides = [1, 1]} : vector<2x128xf32> to vector<2x32xf32>
    %cst_67 = arith.constant 2.000000e+00 : f32
    %260 = vector.broadcast %cst_67 : f32 to vector<2x32xf32>
    %261 = arith.mulf %260, %259 : vector<2x32xf32>
    %cst_68 = arith.constant 1.000000e+00 : f32
    %262 = vector.broadcast %cst_68 : f32 to vector<2x32xf32>
    %263 = arith.subf %261, %262 : vector<2x32xf32>
    %264 = vector.extract_strided_slice %256 {offsets = [0, 96], sizes = [2, 32], strides = [1, 1]} : vector<2x128xf32> to vector<2x32xf32>
    %265 = arith.mulf %258, %221 : vector<2x32xf32>
    %266 = arith.mulf %257, %263 : vector<2x32xf32>
    %267 = arith.addf %265, %266 : vector<2x32xf32>
    %268 = math.tanh %267 : vector<2x32xf32>
    %269 = arith.mulf %264, %268 : vector<2x32xf32>
    %270 = arith.truncf %269 : vector<2x32xf32> to vector<2x32xbf16>
    %271 = vector.extract_strided_slice %6 {offsets = [12, 0], sizes = [2, 128], strides = [1, 1]} : vector<16x128xf32> to vector<2x128xf32>
    %cst_69 = arith.constant dense<0.000000e+00> : vector<2x128xf32>
    %272 = tpu.matmul %251, %15, %cst_69 {dimension_numbers = #tpu.dot_dimension_numbers<[1], [0], [0], [1], [0, 0, 1, 1], [], []>} : vector<2x32xbf16>, vector<32x128xbf16>, vector<2x128xf32> -> vector<2x128xf32>
    %273 = arith.addf %271, %272 : vector<2x128xf32>
    %cst_70 = arith.constant dense<0.000000e+00> : vector<2x128xf32>
    %274 = tpu.matmul %251, %17, %cst_70 {dimension_numbers = #tpu.dot_dimension_numbers<[1], [0], [0], [1], [0, 0, 1, 1], [], []>} : vector<2x32xbf16>, vector<32x128xbf16>, vector<2x128xf32> -> vector<2x128xf32>
    %cst_71 = arith.constant dense<0.000000e+00> : vector<2x128xf32>
    %275 = tpu.matmul %270, %19, %cst_71 {dimension_numbers = #tpu.dot_dimension_numbers<[1], [0], [0], [1], [0, 0, 1, 1], [], []>} : vector<2x32xbf16>, vector<32x128xbf16>, vector<2x128xf32> -> vector<2x128xf32>
    %276 = arith.addf %274, %275 : vector<2x128xf32>
    %277 = vector.broadcast %20 : vector<1x128xf32> to vector<2x128xf32>
    %278 = arith.addf %276, %277 : vector<2x128xf32>
    %279 = arith.negf %273 : vector<2x128xf32>
    %280 = math.exp %279 : vector<2x128xf32>
    %cst_72 = arith.constant 1.000000e+00 : f32
    %281 = vector.broadcast %cst_72 : f32 to vector<2x128xf32>
    %282 = arith.addf %281, %280 : vector<2x128xf32>
    %283 = arith.divf %281, %282 : vector<2x128xf32>
    %284 = vector.extract_strided_slice %283 {offsets = [0, 0], sizes = [2, 32], strides = [1, 1]} : vector<2x128xf32> to vector<2x32xf32>
    %285 = vector.extract_strided_slice %283 {offsets = [0, 32], sizes = [2, 32], strides = [1, 1]} : vector<2x128xf32> to vector<2x32xf32>
    %286 = vector.extract_strided_slice %283 {offsets = [0, 64], sizes = [2, 32], strides = [1, 1]} : vector<2x128xf32> to vector<2x32xf32>
    %cst_73 = arith.constant 2.000000e+00 : f32
    %287 = vector.broadcast %cst_73 : f32 to vector<2x32xf32>
    %288 = arith.mulf %287, %286 : vector<2x32xf32>
    %cst_74 = arith.constant 1.000000e+00 : f32
    %289 = vector.broadcast %cst_74 : f32 to vector<2x32xf32>
    %290 = arith.subf %288, %289 : vector<2x32xf32>
    %291 = vector.extract_strided_slice %283 {offsets = [0, 96], sizes = [2, 32], strides = [1, 1]} : vector<2x128xf32> to vector<2x32xf32>
    %292 = arith.mulf %285, %248 : vector<2x32xf32>
    %293 = arith.mulf %284, %290 : vector<2x32xf32>
    %294 = arith.addf %292, %293 : vector<2x32xf32>
    %295 = math.tanh %294 : vector<2x32xf32>
    %296 = arith.mulf %291, %295 : vector<2x32xf32>
    %297 = arith.truncf %296 : vector<2x32xf32> to vector<2x32xbf16>
    %298 = arith.negf %278 : vector<2x128xf32>
    %299 = math.exp %298 : vector<2x128xf32>
    %cst_75 = arith.constant 1.000000e+00 : f32
    %300 = vector.broadcast %cst_75 : f32 to vector<2x128xf32>
    %301 = arith.addf %300, %299 : vector<2x128xf32>
    %302 = arith.divf %300, %301 : vector<2x128xf32>
    %303 = vector.extract_strided_slice %302 {offsets = [0, 0], sizes = [2, 32], strides = [1, 1]} : vector<2x128xf32> to vector<2x32xf32>
    %304 = vector.extract_strided_slice %302 {offsets = [0, 32], sizes = [2, 32], strides = [1, 1]} : vector<2x128xf32> to vector<2x32xf32>
    %305 = vector.extract_strided_slice %302 {offsets = [0, 64], sizes = [2, 32], strides = [1, 1]} : vector<2x128xf32> to vector<2x32xf32>
    %cst_76 = arith.constant 2.000000e+00 : f32
    %306 = vector.broadcast %cst_76 : f32 to vector<2x32xf32>
    %307 = arith.mulf %306, %305 : vector<2x32xf32>
    %cst_77 = arith.constant 1.000000e+00 : f32
    %308 = vector.broadcast %cst_77 : f32 to vector<2x32xf32>
    %309 = arith.subf %307, %308 : vector<2x32xf32>
    %310 = vector.extract_strided_slice %302 {offsets = [0, 96], sizes = [2, 32], strides = [1, 1]} : vector<2x128xf32> to vector<2x32xf32>
    %311 = arith.mulf %304, %267 : vector<2x32xf32>
    %312 = arith.mulf %303, %309 : vector<2x32xf32>
    %313 = arith.addf %311, %312 : vector<2x32xf32>
    %314 = math.tanh %313 : vector<2x32xf32>
    %315 = arith.mulf %310, %314 : vector<2x32xf32>
    %316 = arith.truncf %315 : vector<2x32xf32> to vector<2x32xbf16>
    %317 = vector.extract_strided_slice %6 {offsets = [14, 0], sizes = [2, 128], strides = [1, 1]} : vector<16x128xf32> to vector<2x128xf32>
    %cst_78 = arith.constant dense<0.000000e+00> : vector<2x128xf32>
    %318 = tpu.matmul %297, %15, %cst_78 {dimension_numbers = #tpu.dot_dimension_numbers<[1], [0], [0], [1], [0, 0, 1, 1], [], []>} : vector<2x32xbf16>, vector<32x128xbf16>, vector<2x128xf32> -> vector<2x128xf32>
    %319 = arith.addf %317, %318 : vector<2x128xf32>
    %cst_79 = arith.constant dense<0.000000e+00> : vector<2x128xf32>
    %320 = tpu.matmul %297, %17, %cst_79 {dimension_numbers = #tpu.dot_dimension_numbers<[1], [0], [0], [1], [0, 0, 1, 1], [], []>} : vector<2x32xbf16>, vector<32x128xbf16>, vector<2x128xf32> -> vector<2x128xf32>
    %cst_80 = arith.constant dense<0.000000e+00> : vector<2x128xf32>
    %321 = tpu.matmul %316, %19, %cst_80 {dimension_numbers = #tpu.dot_dimension_numbers<[1], [0], [0], [1], [0, 0, 1, 1], [], []>} : vector<2x32xbf16>, vector<32x128xbf16>, vector<2x128xf32> -> vector<2x128xf32>
    %322 = arith.addf %320, %321 : vector<2x128xf32>
    %323 = vector.broadcast %20 : vector<1x128xf32> to vector<2x128xf32>
    %324 = arith.addf %322, %323 : vector<2x128xf32>
    %325 = arith.negf %319 : vector<2x128xf32>
    %326 = math.exp %325 : vector<2x128xf32>
    %cst_81 = arith.constant 1.000000e+00 : f32
    %327 = vector.broadcast %cst_81 : f32 to vector<2x128xf32>
    %328 = arith.addf %327, %326 : vector<2x128xf32>
    %329 = arith.divf %327, %328 : vector<2x128xf32>
    %330 = vector.extract_strided_slice %329 {offsets = [0, 0], sizes = [2, 32], strides = [1, 1]} : vector<2x128xf32> to vector<2x32xf32>
    %331 = vector.extract_strided_slice %329 {offsets = [0, 32], sizes = [2, 32], strides = [1, 1]} : vector<2x128xf32> to vector<2x32xf32>
    %332 = vector.extract_strided_slice %329 {offsets = [0, 64], sizes = [2, 32], strides = [1, 1]} : vector<2x128xf32> to vector<2x32xf32>
    %cst_82 = arith.constant 2.000000e+00 : f32
    %333 = vector.broadcast %cst_82 : f32 to vector<2x32xf32>
    %334 = arith.mulf %333, %332 : vector<2x32xf32>
    %cst_83 = arith.constant 1.000000e+00 : f32
    %335 = vector.broadcast %cst_83 : f32 to vector<2x32xf32>
    %336 = arith.subf %334, %335 : vector<2x32xf32>
    %337 = vector.extract_strided_slice %329 {offsets = [0, 96], sizes = [2, 32], strides = [1, 1]} : vector<2x128xf32> to vector<2x32xf32>
    %338 = arith.mulf %331, %294 : vector<2x32xf32>
    %339 = arith.mulf %330, %336 : vector<2x32xf32>
    %340 = arith.addf %338, %339 : vector<2x32xf32>
    %341 = math.tanh %340 : vector<2x32xf32>
    %342 = arith.mulf %337, %341 : vector<2x32xf32>
    %343 = arith.truncf %342 : vector<2x32xf32> to vector<2x32xbf16>
    %344 = arith.negf %324 : vector<2x128xf32>
    %345 = math.exp %344 : vector<2x128xf32>
    %cst_84 = arith.constant 1.000000e+00 : f32
    %346 = vector.broadcast %cst_84 : f32 to vector<2x128xf32>
    %347 = arith.addf %346, %345 : vector<2x128xf32>
    %348 = arith.divf %346, %347 : vector<2x128xf32>
    %349 = vector.extract_strided_slice %348 {offsets = [0, 0], sizes = [2, 32], strides = [1, 1]} : vector<2x128xf32> to vector<2x32xf32>
    %350 = vector.extract_strided_slice %348 {offsets = [0, 32], sizes = [2, 32], strides = [1, 1]} : vector<2x128xf32> to vector<2x32xf32>
    %351 = vector.extract_strided_slice %348 {offsets = [0, 64], sizes = [2, 32], strides = [1, 1]} : vector<2x128xf32> to vector<2x32xf32>
    %cst_85 = arith.constant 2.000000e+00 : f32
    %352 = vector.broadcast %cst_85 : f32 to vector<2x32xf32>
    %353 = arith.mulf %352, %351 : vector<2x32xf32>
    %cst_86 = arith.constant 1.000000e+00 : f32
    %354 = vector.broadcast %cst_86 : f32 to vector<2x32xf32>
    %355 = arith.subf %353, %354 : vector<2x32xf32>
    %356 = vector.extract_strided_slice %348 {offsets = [0, 96], sizes = [2, 32], strides = [1, 1]} : vector<2x128xf32> to vector<2x32xf32>
    %357 = arith.mulf %350, %313 : vector<2x32xf32>
    %358 = arith.mulf %349, %355 : vector<2x32xf32>
    %359 = arith.addf %357, %358 : vector<2x32xf32>
    %360 = math.tanh %359 : vector<2x32xf32>
    %361 = arith.mulf %356, %360 : vector<2x32xf32>
    %362 = arith.truncf %361 : vector<2x32xf32> to vector<2x32xbf16>
    %cst_87 = arith.constant dense<0.000000e+00> : vector<2x128xf32>
    %363 = tpu.matmul %343, %17, %cst_87 {dimension_numbers = #tpu.dot_dimension_numbers<[1], [0], [0], [1], [0, 0, 1, 1], [], []>} : vector<2x32xbf16>, vector<32x128xbf16>, vector<2x128xf32> -> vector<2x128xf32>
    %cst_88 = arith.constant dense<0.000000e+00> : vector<2x128xf32>
    %364 = tpu.matmul %362, %19, %cst_88 {dimension_numbers = #tpu.dot_dimension_numbers<[1], [0], [0], [1], [0, 0, 1, 1], [], []>} : vector<2x32xbf16>, vector<32x128xbf16>, vector<2x128xf32> -> vector<2x128xf32>
    %365 = arith.addf %363, %364 : vector<2x128xf32>
    %366 = vector.broadcast %20 : vector<1x128xf32> to vector<2x128xf32>
    %367 = arith.addf %365, %366 : vector<2x128xf32>
    %368 = arith.negf %367 : vector<2x128xf32>
    %369 = math.exp %368 : vector<2x128xf32>
    %cst_89 = arith.constant 1.000000e+00 : f32
    %370 = vector.broadcast %cst_89 : f32 to vector<2x128xf32>
    %371 = arith.addf %370, %369 : vector<2x128xf32>
    %372 = arith.divf %370, %371 : vector<2x128xf32>
    %373 = vector.extract_strided_slice %372 {offsets = [0, 0], sizes = [2, 32], strides = [1, 1]} : vector<2x128xf32> to vector<2x32xf32>
    %374 = vector.extract_strided_slice %372 {offsets = [0, 32], sizes = [2, 32], strides = [1, 1]} : vector<2x128xf32> to vector<2x32xf32>
    %375 = vector.extract_strided_slice %372 {offsets = [0, 64], sizes = [2, 32], strides = [1, 1]} : vector<2x128xf32> to vector<2x32xf32>
    %cst_90 = arith.constant 2.000000e+00 : f32
    %376 = vector.broadcast %cst_90 : f32 to vector<2x32xf32>
    %377 = arith.mulf %376, %375 : vector<2x32xf32>
    %cst_91 = arith.constant 1.000000e+00 : f32
    %378 = vector.broadcast %cst_91 : f32 to vector<2x32xf32>
    %379 = arith.subf %377, %378 : vector<2x32xf32>
    %380 = vector.extract_strided_slice %372 {offsets = [0, 96], sizes = [2, 32], strides = [1, 1]} : vector<2x128xf32> to vector<2x32xf32>
    %381 = arith.mulf %374, %359 : vector<2x32xf32>
    %382 = arith.mulf %373, %379 : vector<2x32xf32>
    %383 = arith.addf %381, %382 : vector<2x32xf32>
    %384 = math.tanh %383 : vector<2x32xf32>
    %385 = arith.mulf %380, %384 : vector<2x32xf32>
    %386 = arith.truncf %385 : vector<2x32xf32> to vector<2x32xbf16>
    %c4 = arith.constant 4 : index
    %c0_92 = arith.constant 0 : index
    %c0_93 = arith.constant 0 : index
    %387 = vector.load %arg1[%c4, %c0_92, %c0_93] : memref<10x32x128xbf16, #tpu.memory_space<vmem>>, vector<1x32x128xbf16>
    %388 = vector.shape_cast %387 : vector<1x32x128xbf16> to vector<32x128xbf16>
    %c6 = arith.constant 6 : index
    %c0_94 = arith.constant 0 : index
    %c0_95 = arith.constant 0 : index
    %389 = vector.load %arg1[%c6, %c0_94, %c0_95] : memref<10x32x128xbf16, #tpu.memory_space<vmem>>, vector<1x32x128xbf16>
    %390 = vector.shape_cast %389 : vector<1x32x128xbf16> to vector<32x128xbf16>
    %c7 = arith.constant 7 : index
    %c0_96 = arith.constant 0 : index
    %c0_97 = arith.constant 0 : index
    %391 = vector.load %arg1[%c7, %c0_96, %c0_97] : memref<10x32x128xbf16, #tpu.memory_space<vmem>>, vector<1x32x128xbf16>
    %392 = vector.shape_cast %391 : vector<1x32x128xbf16> to vector<32x128xbf16>
    %c8 = arith.constant 8 : index
    %c0_98 = arith.constant 0 : index
    %c0_99 = arith.constant 0 : index
    %393 = vector.load %arg1[%c8, %c0_98, %c0_99] : memref<10x32x128xbf16, #tpu.memory_space<vmem>>, vector<1x32x128xbf16>
    %394 = vector.shape_cast %393 : vector<1x32x128xbf16> to vector<32x128xbf16>
    %c3_100 = arith.constant 3 : index
    %c0_101 = arith.constant 0 : index
    %395 = vector.load %arg2[%c3_100, %c0_101] : memref<6x128xf32, #tpu.memory_space<vmem>>, vector<1x128xf32>
    %c4_102 = arith.constant 4 : index
    %c0_103 = arith.constant 0 : index
    %396 = vector.load %arg2[%c4_102, %c0_103] : memref<6x128xf32, #tpu.memory_space<vmem>>, vector<1x128xf32>
    %cst_104 = arith.constant dense<0.000000e+00> : vector<2x128xf32>
    %397 = tpu.matmul %343, %388, %cst_104 {dimension_numbers = #tpu.dot_dimension_numbers<[1], [0], [0], [1], [0, 0, 1, 1], [], []>} : vector<2x32xbf16>, vector<32x128xbf16>, vector<2x128xf32> -> vector<2x128xf32>
    %398 = arith.addf %13, %397 : vector<2x128xf32>
    %399 = arith.negf %398 : vector<2x128xf32>
    %400 = math.exp %399 : vector<2x128xf32>
    %cst_105 = arith.constant 1.000000e+00 : f32
    %401 = vector.broadcast %cst_105 : f32 to vector<2x128xf32>
    %402 = arith.addf %401, %400 : vector<2x128xf32>
    %403 = arith.divf %401, %402 : vector<2x128xf32>
    %404 = vector.extract_strided_slice %403 {offsets = [0, 0], sizes = [2, 32], strides = [1, 1]} : vector<2x128xf32> to vector<2x32xf32>
    %405 = vector.extract_strided_slice %403 {offsets = [0, 32], sizes = [2, 32], strides = [1, 1]} : vector<2x128xf32> to vector<2x32xf32>
    %406 = vector.extract_strided_slice %403 {offsets = [0, 64], sizes = [2, 32], strides = [1, 1]} : vector<2x128xf32> to vector<2x32xf32>
    %cst_106 = arith.constant 2.000000e+00 : f32
    %407 = vector.broadcast %cst_106 : f32 to vector<2x32xf32>
    %408 = arith.mulf %407, %406 : vector<2x32xf32>
    %cst_107 = arith.constant 1.000000e+00 : f32
    %409 = vector.broadcast %cst_107 : f32 to vector<2x32xf32>
    %410 = arith.subf %408, %409 : vector<2x32xf32>
    %411 = vector.extract_strided_slice %403 {offsets = [0, 96], sizes = [2, 32], strides = [1, 1]} : vector<2x128xf32> to vector<2x32xf32>
    %412 = arith.mulf %405, %340 : vector<2x32xf32>
    %413 = arith.mulf %404, %410 : vector<2x32xf32>
    %414 = arith.addf %412, %413 : vector<2x32xf32>
    %415 = math.tanh %414 : vector<2x32xf32>
    %416 = arith.mulf %411, %415 : vector<2x32xf32>
    %417 = arith.truncf %416 : vector<2x32xf32> to vector<2x32xbf16>
    %cst_108 = arith.constant dense<0.000000e+00> : vector<2x128xf32>
    %418 = tpu.matmul %417, %392, %cst_108 {dimension_numbers = #tpu.dot_dimension_numbers<[1], [0], [0], [1], [0, 0, 1, 1], [], []>} : vector<2x32xbf16>, vector<32x128xbf16>, vector<2x128xf32> -> vector<2x128xf32>
    %cst_109 = arith.constant dense<0.000000e+00> : vector<2x128xf32>
    %419 = tpu.matmul %386, %394, %cst_109 {dimension_numbers = #tpu.dot_dimension_numbers<[1], [0], [0], [1], [0, 0, 1, 1], [], []>} : vector<2x32xbf16>, vector<32x128xbf16>, vector<2x128xf32> -> vector<2x128xf32>
    %420 = arith.addf %418, %419 : vector<2x128xf32>
    %421 = vector.broadcast %396 : vector<1x128xf32> to vector<2x128xf32>
    %422 = arith.addf %420, %421 : vector<2x128xf32>
    %423 = arith.negf %422 : vector<2x128xf32>
    %424 = math.exp %423 : vector<2x128xf32>
    %cst_110 = arith.constant 1.000000e+00 : f32
    %425 = vector.broadcast %cst_110 : f32 to vector<2x128xf32>
    %426 = arith.addf %425, %424 : vector<2x128xf32>
    %427 = arith.divf %425, %426 : vector<2x128xf32>
    %428 = vector.extract_strided_slice %427 {offsets = [0, 0], sizes = [2, 32], strides = [1, 1]} : vector<2x128xf32> to vector<2x32xf32>
    %429 = vector.extract_strided_slice %427 {offsets = [0, 32], sizes = [2, 32], strides = [1, 1]} : vector<2x128xf32> to vector<2x32xf32>
    %430 = vector.extract_strided_slice %427 {offsets = [0, 64], sizes = [2, 32], strides = [1, 1]} : vector<2x128xf32> to vector<2x32xf32>
    %cst_111 = arith.constant 2.000000e+00 : f32
    %431 = vector.broadcast %cst_111 : f32 to vector<2x32xf32>
    %432 = arith.mulf %431, %430 : vector<2x32xf32>
    %cst_112 = arith.constant 1.000000e+00 : f32
    %433 = vector.broadcast %cst_112 : f32 to vector<2x32xf32>
    %434 = arith.subf %432, %433 : vector<2x32xf32>
    %435 = vector.extract_strided_slice %427 {offsets = [0, 96], sizes = [2, 32], strides = [1, 1]} : vector<2x128xf32> to vector<2x32xf32>
    %436 = arith.mulf %429, %383 : vector<2x32xf32>
    %437 = arith.mulf %428, %434 : vector<2x32xf32>
    %438 = arith.addf %436, %437 : vector<2x32xf32>
    %439 = math.tanh %438 : vector<2x32xf32>
    %440 = arith.mulf %435, %439 : vector<2x32xf32>
    %441 = arith.truncf %440 : vector<2x32xf32> to vector<2x32xbf16>
    %cst_113 = arith.constant dense<0.000000e+00> : vector<2x128xf32>
    %442 = tpu.matmul %441, %390, %cst_113 {dimension_numbers = #tpu.dot_dimension_numbers<[1], [0], [0], [1], [0, 0, 1, 1], [], []>} : vector<2x32xbf16>, vector<32x128xbf16>, vector<2x128xf32> -> vector<2x128xf32>
    %cst_114 = arith.constant dense<0.000000e+00> : vector<2x128xf32>
    %443 = tpu.matmul %417, %388, %cst_114 {dimension_numbers = #tpu.dot_dimension_numbers<[1], [0], [0], [1], [0, 0, 1, 1], [], []>} : vector<2x32xbf16>, vector<32x128xbf16>, vector<2x128xf32> -> vector<2x128xf32>
    %444 = arith.addf %442, %443 : vector<2x128xf32>
    %445 = vector.broadcast %395 : vector<1x128xf32> to vector<2x128xf32>
    %446 = arith.addf %444, %445 : vector<2x128xf32>
    %447 = arith.negf %446 : vector<2x128xf32>
    %448 = math.exp %447 : vector<2x128xf32>
    %cst_115 = arith.constant 1.000000e+00 : f32
    %449 = vector.broadcast %cst_115 : f32 to vector<2x128xf32>
    %450 = arith.addf %449, %448 : vector<2x128xf32>
    %451 = arith.divf %449, %450 : vector<2x128xf32>
    %452 = vector.extract_strided_slice %451 {offsets = [0, 0], sizes = [2, 32], strides = [1, 1]} : vector<2x128xf32> to vector<2x32xf32>
    %453 = vector.extract_strided_slice %451 {offsets = [0, 32], sizes = [2, 32], strides = [1, 1]} : vector<2x128xf32> to vector<2x32xf32>
    %454 = vector.extract_strided_slice %451 {offsets = [0, 64], sizes = [2, 32], strides = [1, 1]} : vector<2x128xf32> to vector<2x32xf32>
    %cst_116 = arith.constant 2.000000e+00 : f32
    %455 = vector.broadcast %cst_116 : f32 to vector<2x32xf32>
    %456 = arith.mulf %455, %454 : vector<2x32xf32>
    %cst_117 = arith.constant 1.000000e+00 : f32
    %457 = vector.broadcast %cst_117 : f32 to vector<2x32xf32>
    %458 = arith.subf %456, %457 : vector<2x32xf32>
    %459 = vector.extract_strided_slice %451 {offsets = [0, 96], sizes = [2, 32], strides = [1, 1]} : vector<2x128xf32> to vector<2x32xf32>
    %460 = arith.mulf %453, %414 : vector<2x32xf32>
    %461 = arith.mulf %452, %458 : vector<2x32xf32>
    %462 = arith.addf %460, %461 : vector<2x32xf32>
    %463 = math.tanh %462 : vector<2x32xf32>
    %464 = arith.mulf %459, %463 : vector<2x32xf32>
    %465 = arith.truncf %464 : vector<2x32xf32> to vector<2x32xbf16>
    %cst_118 = arith.constant dense<0.000000e+00> : vector<2x128xf32>
    %466 = tpu.matmul %465, %392, %cst_118 {dimension_numbers = #tpu.dot_dimension_numbers<[1], [0], [0], [1], [0, 0, 1, 1], [], []>} : vector<2x32xbf16>, vector<32x128xbf16>, vector<2x128xf32> -> vector<2x128xf32>
    %cst_119 = arith.constant dense<0.000000e+00> : vector<2x128xf32>
    %467 = tpu.matmul %441, %394, %cst_119 {dimension_numbers = #tpu.dot_dimension_numbers<[1], [0], [0], [1], [0, 0, 1, 1], [], []>} : vector<2x32xbf16>, vector<32x128xbf16>, vector<2x128xf32> -> vector<2x128xf32>
    %468 = arith.addf %466, %467 : vector<2x128xf32>
    %469 = vector.broadcast %396 : vector<1x128xf32> to vector<2x128xf32>
    %470 = arith.addf %468, %469 : vector<2x128xf32>
    %471 = arith.negf %470 : vector<2x128xf32>
    %472 = math.exp %471 : vector<2x128xf32>
    %cst_120 = arith.constant 1.000000e+00 : f32
    %473 = vector.broadcast %cst_120 : f32 to vector<2x128xf32>
    %474 = arith.addf %473, %472 : vector<2x128xf32>
    %475 = arith.divf %473, %474 : vector<2x128xf32>
    %476 = vector.extract_strided_slice %475 {offsets = [0, 0], sizes = [2, 32], strides = [1, 1]} : vector<2x128xf32> to vector<2x32xf32>
    %477 = vector.extract_strided_slice %475 {offsets = [0, 32], sizes = [2, 32], strides = [1, 1]} : vector<2x128xf32> to vector<2x32xf32>
    %478 = vector.extract_strided_slice %475 {offsets = [0, 64], sizes = [2, 32], strides = [1, 1]} : vector<2x128xf32> to vector<2x32xf32>
    %cst_121 = arith.constant 2.000000e+00 : f32
    %479 = vector.broadcast %cst_121 : f32 to vector<2x32xf32>
    %480 = arith.mulf %479, %478 : vector<2x32xf32>
    %cst_122 = arith.constant 1.000000e+00 : f32
    %481 = vector.broadcast %cst_122 : f32 to vector<2x32xf32>
    %482 = arith.subf %480, %481 : vector<2x32xf32>
    %483 = vector.extract_strided_slice %475 {offsets = [0, 96], sizes = [2, 32], strides = [1, 1]} : vector<2x128xf32> to vector<2x32xf32>
    %484 = arith.mulf %477, %438 : vector<2x32xf32>
    %485 = arith.mulf %476, %482 : vector<2x32xf32>
    %486 = arith.addf %484, %485 : vector<2x32xf32>
    %487 = math.tanh %486 : vector<2x32xf32>
    %488 = arith.mulf %483, %487 : vector<2x32xf32>
    %489 = arith.truncf %488 : vector<2x32xf32> to vector<2x32xbf16>
    %cst_123 = arith.constant dense<0.000000e+00> : vector<2x128xf32>
    %490 = tpu.matmul %489, %390, %cst_123 {dimension_numbers = #tpu.dot_dimension_numbers<[1], [0], [0], [1], [0, 0, 1, 1], [], []>} : vector<2x32xbf16>, vector<32x128xbf16>, vector<2x128xf32> -> vector<2x128xf32>
    %cst_124 = arith.constant dense<0.000000e+00> : vector<2x128xf32>
    %491 = tpu.matmul %465, %388, %cst_124 {dimension_numbers = #tpu.dot_dimension_numbers<[1], [0], [0], [1], [0, 0, 1, 1], [], []>} : vector<2x32xbf16>, vector<32x128xbf16>, vector<2x128xf32> -> vector<2x128xf32>
    %492 = arith.addf %490, %491 : vector<2x128xf32>
    %493 = vector.broadcast %395 : vector<1x128xf32> to vector<2x128xf32>
    %494 = arith.addf %492, %493 : vector<2x128xf32>
    %495 = arith.negf %494 : vector<2x128xf32>
    %496 = math.exp %495 : vector<2x128xf32>
    %cst_125 = arith.constant 1.000000e+00 : f32
    %497 = vector.broadcast %cst_125 : f32 to vector<2x128xf32>
    %498 = arith.addf %497, %496 : vector<2x128xf32>
    %499 = arith.divf %497, %498 : vector<2x128xf32>
    %500 = vector.extract_strided_slice %499 {offsets = [0, 0], sizes = [2, 32], strides = [1, 1]} : vector<2x128xf32> to vector<2x32xf32>
    %501 = vector.extract_strided_slice %499 {offsets = [0, 32], sizes = [2, 32], strides = [1, 1]} : vector<2x128xf32> to vector<2x32xf32>
    %502 = vector.extract_strided_slice %499 {offsets = [0, 64], sizes = [2, 32], strides = [1, 1]} : vector<2x128xf32> to vector<2x32xf32>
    %cst_126 = arith.constant 2.000000e+00 : f32
    %503 = vector.broadcast %cst_126 : f32 to vector<2x32xf32>
    %504 = arith.mulf %503, %502 : vector<2x32xf32>
    %cst_127 = arith.constant 1.000000e+00 : f32
    %505 = vector.broadcast %cst_127 : f32 to vector<2x32xf32>
    %506 = arith.subf %504, %505 : vector<2x32xf32>
    %507 = vector.extract_strided_slice %499 {offsets = [0, 96], sizes = [2, 32], strides = [1, 1]} : vector<2x128xf32> to vector<2x32xf32>
    %508 = arith.mulf %501, %462 : vector<2x32xf32>
    %509 = arith.mulf %500, %506 : vector<2x32xf32>
    %510 = arith.addf %508, %509 : vector<2x32xf32>
    %511 = math.tanh %510 : vector<2x32xf32>
    %512 = arith.mulf %507, %511 : vector<2x32xf32>
    %513 = arith.truncf %512 : vector<2x32xf32> to vector<2x32xbf16>
    %cst_128 = arith.constant dense<0.000000e+00> : vector<2x128xf32>
    %514 = tpu.matmul %513, %392, %cst_128 {dimension_numbers = #tpu.dot_dimension_numbers<[1], [0], [0], [1], [0, 0, 1, 1], [], []>} : vector<2x32xbf16>, vector<32x128xbf16>, vector<2x128xf32> -> vector<2x128xf32>
    %cst_129 = arith.constant dense<0.000000e+00> : vector<2x128xf32>
    %515 = tpu.matmul %489, %394, %cst_129 {dimension_numbers = #tpu.dot_dimension_numbers<[1], [0], [0], [1], [0, 0, 1, 1], [], []>} : vector<2x32xbf16>, vector<32x128xbf16>, vector<2x128xf32> -> vector<2x128xf32>
    %516 = arith.addf %514, %515 : vector<2x128xf32>
    %517 = vector.broadcast %396 : vector<1x128xf32> to vector<2x128xf32>
    %518 = arith.addf %516, %517 : vector<2x128xf32>
    %519 = arith.negf %518 : vector<2x128xf32>
    %520 = math.exp %519 : vector<2x128xf32>
    %cst_130 = arith.constant 1.000000e+00 : f32
    %521 = vector.broadcast %cst_130 : f32 to vector<2x128xf32>
    %522 = arith.addf %521, %520 : vector<2x128xf32>
    %523 = arith.divf %521, %522 : vector<2x128xf32>
    %524 = vector.extract_strided_slice %523 {offsets = [0, 0], sizes = [2, 32], strides = [1, 1]} : vector<2x128xf32> to vector<2x32xf32>
    %525 = vector.extract_strided_slice %523 {offsets = [0, 32], sizes = [2, 32], strides = [1, 1]} : vector<2x128xf32> to vector<2x32xf32>
    %526 = vector.extract_strided_slice %523 {offsets = [0, 64], sizes = [2, 32], strides = [1, 1]} : vector<2x128xf32> to vector<2x32xf32>
    %cst_131 = arith.constant 2.000000e+00 : f32
    %527 = vector.broadcast %cst_131 : f32 to vector<2x32xf32>
    %528 = arith.mulf %527, %526 : vector<2x32xf32>
    %cst_132 = arith.constant 1.000000e+00 : f32
    %529 = vector.broadcast %cst_132 : f32 to vector<2x32xf32>
    %530 = arith.subf %528, %529 : vector<2x32xf32>
    %531 = vector.extract_strided_slice %523 {offsets = [0, 96], sizes = [2, 32], strides = [1, 1]} : vector<2x128xf32> to vector<2x32xf32>
    %532 = arith.mulf %525, %486 : vector<2x32xf32>
    %533 = arith.mulf %524, %530 : vector<2x32xf32>
    %534 = arith.addf %532, %533 : vector<2x32xf32>
    %535 = math.tanh %534 : vector<2x32xf32>
    %536 = arith.mulf %531, %535 : vector<2x32xf32>
    %537 = arith.truncf %536 : vector<2x32xf32> to vector<2x32xbf16>
    %cst_133 = arith.constant dense<0.000000e+00> : vector<2x128xf32>
    %538 = tpu.matmul %537, %390, %cst_133 {dimension_numbers = #tpu.dot_dimension_numbers<[1], [0], [0], [1], [0, 0, 1, 1], [], []>} : vector<2x32xbf16>, vector<32x128xbf16>, vector<2x128xf32> -> vector<2x128xf32>
    %cst_134 = arith.constant dense<0.000000e+00> : vector<2x128xf32>
    %539 = tpu.matmul %513, %388, %cst_134 {dimension_numbers = #tpu.dot_dimension_numbers<[1], [0], [0], [1], [0, 0, 1, 1], [], []>} : vector<2x32xbf16>, vector<32x128xbf16>, vector<2x128xf32> -> vector<2x128xf32>
    %540 = arith.addf %538, %539 : vector<2x128xf32>
    %541 = vector.broadcast %395 : vector<1x128xf32> to vector<2x128xf32>
    %542 = arith.addf %540, %541 : vector<2x128xf32>
    %543 = arith.negf %542 : vector<2x128xf32>
    %544 = math.exp %543 : vector<2x128xf32>
    %cst_135 = arith.constant 1.000000e+00 : f32
    %545 = vector.broadcast %cst_135 : f32 to vector<2x128xf32>
    %546 = arith.addf %545, %544 : vector<2x128xf32>
    %547 = arith.divf %545, %546 : vector<2x128xf32>
    %548 = vector.extract_strided_slice %547 {offsets = [0, 0], sizes = [2, 32], strides = [1, 1]} : vector<2x128xf32> to vector<2x32xf32>
    %549 = vector.extract_strided_slice %547 {offsets = [0, 32], sizes = [2, 32], strides = [1, 1]} : vector<2x128xf32> to vector<2x32xf32>
    %550 = vector.extract_strided_slice %547 {offsets = [0, 64], sizes = [2, 32], strides = [1, 1]} : vector<2x128xf32> to vector<2x32xf32>
    %cst_136 = arith.constant 2.000000e+00 : f32
    %551 = vector.broadcast %cst_136 : f32 to vector<2x32xf32>
    %552 = arith.mulf %551, %550 : vector<2x32xf32>
    %cst_137 = arith.constant 1.000000e+00 : f32
    %553 = vector.broadcast %cst_137 : f32 to vector<2x32xf32>
    %554 = arith.subf %552, %553 : vector<2x32xf32>
    %555 = vector.extract_strided_slice %547 {offsets = [0, 96], sizes = [2, 32], strides = [1, 1]} : vector<2x128xf32> to vector<2x32xf32>
    %556 = arith.mulf %549, %510 : vector<2x32xf32>
    %557 = arith.mulf %548, %554 : vector<2x32xf32>
    %558 = arith.addf %556, %557 : vector<2x32xf32>
    %559 = math.tanh %558 : vector<2x32xf32>
    %560 = arith.mulf %555, %559 : vector<2x32xf32>
    %561 = arith.truncf %560 : vector<2x32xf32> to vector<2x32xbf16>
    %cst_138 = arith.constant dense<0.000000e+00> : vector<2x128xf32>
    %562 = tpu.matmul %561, %392, %cst_138 {dimension_numbers = #tpu.dot_dimension_numbers<[1], [0], [0], [1], [0, 0, 1, 1], [], []>} : vector<2x32xbf16>, vector<32x128xbf16>, vector<2x128xf32> -> vector<2x128xf32>
    %cst_139 = arith.constant dense<0.000000e+00> : vector<2x128xf32>
    %563 = tpu.matmul %537, %394, %cst_139 {dimension_numbers = #tpu.dot_dimension_numbers<[1], [0], [0], [1], [0, 0, 1, 1], [], []>} : vector<2x32xbf16>, vector<32x128xbf16>, vector<2x128xf32> -> vector<2x128xf32>
    %564 = arith.addf %562, %563 : vector<2x128xf32>
    %565 = vector.broadcast %396 : vector<1x128xf32> to vector<2x128xf32>
    %566 = arith.addf %564, %565 : vector<2x128xf32>
    %567 = arith.negf %566 : vector<2x128xf32>
    %568 = math.exp %567 : vector<2x128xf32>
    %cst_140 = arith.constant 1.000000e+00 : f32
    %569 = vector.broadcast %cst_140 : f32 to vector<2x128xf32>
    %570 = arith.addf %569, %568 : vector<2x128xf32>
    %571 = arith.divf %569, %570 : vector<2x128xf32>
    %572 = vector.extract_strided_slice %571 {offsets = [0, 0], sizes = [2, 32], strides = [1, 1]} : vector<2x128xf32> to vector<2x32xf32>
    %573 = vector.extract_strided_slice %571 {offsets = [0, 32], sizes = [2, 32], strides = [1, 1]} : vector<2x128xf32> to vector<2x32xf32>
    %574 = vector.extract_strided_slice %571 {offsets = [0, 64], sizes = [2, 32], strides = [1, 1]} : vector<2x128xf32> to vector<2x32xf32>
    %cst_141 = arith.constant 2.000000e+00 : f32
    %575 = vector.broadcast %cst_141 : f32 to vector<2x32xf32>
    %576 = arith.mulf %575, %574 : vector<2x32xf32>
    %cst_142 = arith.constant 1.000000e+00 : f32
    %577 = vector.broadcast %cst_142 : f32 to vector<2x32xf32>
    %578 = arith.subf %576, %577 : vector<2x32xf32>
    %579 = vector.extract_strided_slice %571 {offsets = [0, 96], sizes = [2, 32], strides = [1, 1]} : vector<2x128xf32> to vector<2x32xf32>
    %580 = arith.mulf %573, %534 : vector<2x32xf32>
    %581 = arith.mulf %572, %578 : vector<2x32xf32>
    %582 = arith.addf %580, %581 : vector<2x32xf32>
    %583 = math.tanh %582 : vector<2x32xf32>
    %584 = arith.mulf %579, %583 : vector<2x32xf32>
    %585 = arith.truncf %584 : vector<2x32xf32> to vector<2x32xbf16>
    %586 = tpu.concatenate %441, %489, %537, %585 in 0 : vector<2x32xbf16>, vector<2x32xbf16>, vector<2x32xbf16>, vector<2x32xbf16> -> vector<8x32xbf16>
    %c9 = arith.constant 9 : index
    %c0_143 = arith.constant 0 : index
    %c0_144 = arith.constant 0 : index
    %587 = vector.load %arg1[%c9, %c0_143, %c0_144] : memref<10x32x128xbf16, #tpu.memory_space<vmem>>, vector<1x32x128xbf16>
    %588 = vector.shape_cast %587 : vector<1x32x128xbf16> to vector<32x128xbf16>
    %cst_145 = arith.constant dense<0.000000e+00> : vector<8x128xf32>
    %589 = tpu.matmul %586, %588, %cst_145 {dimension_numbers = #tpu.dot_dimension_numbers<[1], [0], [0], [1], [0, 0, 1, 1], [], []>} : vector<8x32xbf16>, vector<32x128xbf16>, vector<8x128xf32> -> vector<8x128xf32>
    %c5_146 = arith.constant 5 : index
    %c0_147 = arith.constant 0 : index
    %590 = vector.load %arg2[%c5_146, %c0_147] : memref<6x128xf32, #tpu.memory_space<vmem>>, vector<1x128xf32>
    %591 = vector.broadcast %590 : vector<1x128xf32> to vector<8x128xf32>
    %592 = arith.addf %589, %591 : vector<8x128xf32>
    %c0_148 = arith.constant 0 : index
    %c0_149 = arith.constant 0 : index
    %593 = vector.load %arg3[%c0_148, %c0_149] : memref<8x128xf32, #tpu.memory_space<vmem>>, vector<8x128xf32>
    tpu.vector_store %arg3[%c0_148, %c0_149], %592 {strides = array<i32>} : memref<8x128xf32, #tpu.memory_space<vmem>>, vector<8x128xf32>,
    return
  }
}

</mosaic_0001>

<llo_original>
// kernel: tpu_custom_call.1
$region0: #{tpu_custom_call.1}
  #allocation0 [shape = 'u32[]', space=smem, size = 0x4, offset = 0x4, fixed_abs, tag = 'smem constant byte address 0x4 - core index']
  #allocation1 [shape = 'u32[144,128]{1,0:T(1,128)}', space=vmem, size = 0x12000, scoped, tag = 'internal scratch']
  %s0 = inlined_call_operand.hbm [shape: bf16[18,32], index: 0, kind: input, shape index: {}]
  %s1 = inlined_call_operand.hbm [shape: bf16[10,32,128], index: 1, kind: input, shape index: {}]
  %s2 = inlined_call_operand.hbm [shape: f32[6,128], index: 2, kind: input, shape index: {}]
  %s3 = inlined_call_operand.hbm [shape: f32[8,128], index: 3, kind: output, shape index: {}]
  %s4 = sld [smem:[#allocation0]]
  $region34: #{tpu_custom_call.1} parent=0
    _
  %s6 = ssub.s32 1, %s4
  %s7 = scalar_select 0, %s6, %s4
  $region1: #{tpu_custom_call.1} parent=0
    #allocation2 [shape = 'u8[6144]{0}', space=vmem, size = 0x1800, scoped, tag = 'input window, operand 0, single buffered']
    #allocation3 [shape = 's32[1]{0}', space=sflag, size = 0x4, scoped, tag = 'scoped memory for tpu_custom_call.1']
    #allocation4 [shape = 's32[1]{0}', space=sflag, size = 0x4, scoped, tag = 'scoped memory for tpu_custom_call.1']
    #allocation5 [shape = 'u8[81920]{0}', space=vmem, size = 0x14000, scoped, tag = 'input window, operand 1, single buffered']
    #allocation6 [shape = 's32[1]{0}', space=sflag, size = 0x4, scoped, tag = 'scoped memory for tpu_custom_call.1']
    #allocation7 [shape = 'u8[4096]{0}', space=vmem, size = 0x1000, scoped, tag = 'input window, operand 2, single buffered']
    #allocation8 [shape = 'u8[4096]{0}', space=vmem, size = 0x1000, scoped, tag = 'output window, operand 0, single buffered']
    %8 = vsyncpa [#allocation3], 0
    %9 = vsyncpa [#allocation6], 0
    %10 = vsyncpa [#allocation4], 0
    // Predicated region
    $region2: #{tpu_custom_call.1} parent=1 // pred_check
      _
    $region3: #{tpu_custom_call.1} parent=1 // pred_check_branch
      %12 = sbr.rel (0) target = $region5
    $region4: #{tpu_custom_call.1} parent=1 // pred_region
      %s14 = ssub.s32 192, 192
      %15 = vsyncadd [#allocation3], %s14
      %s16 = sshll.u32 [#allocation2], 4
      %s17 = int_to_ptr.vmem [resolvable:$true] %s16
      %22 = dma.hbm_to_vmem [thread:$0]  %s0, 192, %s17, [#allocation3], 64, 64, 4
    $region5: #{tpu_custom_call.1} parent=1 // pred_fallthru
      _
    // Predicated region
    $region6: #{tpu_custom_call.1} parent=1 // pred_check
      _
    $region7: #{tpu_custom_call.1} parent=1 // pred_check_branch
      %24 = sbr.rel (0) target = $region9
    $region8: #{tpu_custom_call.1} parent=1 // pred_region
      %s26 = ssub.s32 2560, 2560
      %27 = vsyncadd [#allocation6], %s26
      %s28 = sshll.u32 [#allocation5], 4
      %s29 = int_to_ptr.vmem [resolvable:$true] %s28
      %34 = dma.hbm_to_vmem [thread:$0]  %s1, 2560, %s29, [#allocation6], 64, 64, 4
    $region9: #{tpu_custom_call.1} parent=1 // pred_fallthru
      _
    // Predicated region
    $region10: #{tpu_custom_call.1} parent=1 // pred_check
      _
    $region11: #{tpu_custom_call.1} parent=1 // pred_check_branch
      %36 = sbr.rel (0) target = $region13
    $region12: #{tpu_custom_call.1} parent=1 // pred_region
      %s38 = ssub.s32 128, 128
      %39 = vsyncadd [#allocation6], %s38
      %s41 = sshll.u32 [#allocation7], 4
      %s42 = int_to_ptr.vmem [resolvable:$true] %s41
      %44 = dma.hbm_to_vmem [thread:$0]  %s2, 128, %s42, [#allocation6]
    $region13: #{tpu_custom_call.1} parent=1 // pred_fallthru
      _
    // Predicated region
    $region14: #{tpu_custom_call.1} parent=1 // pred_check
      _
    $region15: #{tpu_custom_call.1} parent=1 // pred_check_branch
      %46 = sbr.rel (0) target = $region17
    $region16: #{tpu_custom_call.1} parent=1 // pred_region
      %47 = dma.done [#allocation3], 192
    $region17: #{tpu_custom_call.1} parent=1 // pred_fallthru
      _
    // Predicated region
    $region18: #{tpu_custom_call.1} parent=1 // pred_check
      _
    $region19: #{tpu_custom_call.1} parent=1 // pred_check_branch
      %49 = sbr.rel (0) target = $region21
    $region20: #{tpu_custom_call.1} parent=1 // pred_region
      %50 = dma.done [#allocation6], 2560
    $region21: #{tpu_custom_call.1} parent=1 // pred_fallthru
      _
    // Predicated region
    $region22: #{tpu_custom_call.1} parent=1 // pred_check
      _
    $region23: #{tpu_custom_call.1} parent=1 // pred_check_branch
      %52 = sbr.rel (0) target = $region25
    $region24: #{tpu_custom_call.1} parent=1 // pred_region
      %53 = dma.done [#allocation6], 128
    $region25: #{tpu_custom_call.1} parent=1 // pred_fallthru
      _
    %v55 = vld [vmem:[#allocation2] sm:$0xf]
    %v56 = vld [vmem:[#allocation2 + $0x4] sm:$0xf]
    %v57 = vld [vmem:[#allocation5] sm:$0xf]
    %v58 = vld [vmem:[#allocation5 + $0x4] sm:$0xf]
    %v59 = vld [vmem:[#allocation5 + $0x8] sm:$0xf]
    %v60 = vld [vmem:[#allocation5 + $0xc] sm:$0xf]
    %v61 = vld [vmem:[#allocation7] sm:$0x1]
    %v62 = vlaneseq
    %v63 = vshrl.u32 %v62, 7
    %v64 = vsub.s32 0, %v63
    %v65 = vrot.slane %v61, %v64
    %v68 = vunpack.c.l.b16 %v55
    %v69 = vunpack.c.l.b16 %v56
    %v70 = vpack.c.b16 %v69, %v68
    %v75 = vunpack.c.l.b16 %v57
    %v76 = vunpack.c.l.b16 %v58
    %v77 = vunpack.c.l.b16 %v59
    %v78 = vunpack.c.l.b16 %v60
    %v79 = vpack.c.b16 %v76, %v75
    %v80 = vpack.c.b16 %v78, %v77
    %vm83 = vcmask 261120
    %v85 = vsel %vm83, %v70, 0
    %87 = vmatprep.subr.bf16.mxu0 0
    %88 = vmatpush1.bf16.msra.mxu0 %v79
    %89 = vmatprep.subr.bf16.mxu0 0
    %90 = vmatpush1.bf16.msra.mxu0 %v80
    %91 = vmatprep.subr.bf16.mxu0 0
    %92 = vmatpush1.bf16.msra.mxu0 0
    %93 = vmatprep.subr.bf16.mxu0 0
    %94 = vmatpush1.bf16.msra.mxu0 0
    %95 = vmatprep.subr.bf16.mxu0 0
    %96 = vmatpush1.bf16.msra.mxu0 0
    %97 = vmatprep.subr.bf16.mxu0 0
    %98 = vmatpush1.bf16.msra.mxu0 0
    %99 = vmatprep.subr.bf16.mxu0 0
    %100 = vmatpush1.bf16.msra.mxu0 0
    %101 = vmatprep.subr.bf16.mxu0 0
    %102 = vmatpush1.bf16.msra.mxu0 0
    %103 = vmatprep.subr.bf16.mxu0 0
    %104 = vmatpush1.bf16.msra.mxu0 0
    %105 = vmatprep.subr.bf16.mxu0 0
    %106 = vmatpush1.bf16.msra.mxu0 0
    %107 = vmatprep.subr.bf16.mxu0 0
    %108 = vmatpush1.bf16.msra.mxu0 0
    %109 = vmatprep.subr.bf16.mxu0 0
    %110 = vmatpush1.bf16.msra.mxu0 0
    %111 = vmatprep.subr.bf16.mxu0 0
    %112 = vmatpush1.bf16.msra.mxu0 0
    %113 = vmatprep.subr.bf16.mxu0 0
    %114 = vmatpush1.bf16.msra.mxu0 0
    %115 = vmatprep.subr.bf16.mxu0 0
    %116 = vmatpush1.bf16.msra.mxu0 0
    %117 = vmatprep.subr.bf16.mxu0 0
    %118 = vmatpush1.bf16.msra.mxu0 0
    %119 = vmatprep.mubr.bf16.mxu0 0
    %120 = vmatmul.mubr.bf16.gmra.mrb[0].mxu0 %v85
    %v121 = vpop.f32.mrb[0].mxu0
    %v122 = vadd.f32 %v65, %v121
    %v123 = vpop.f32.mrb[0].mxu0
    %v124 = vpop.f32.mrb[0].mxu0
    %v125 = vadd.f32 %v65, %v124
    %v126 = vpop.f32.mrb[0].mxu0
    %127 = vdwg.mxu0
    %v128 = vld [vmem:[#allocation2 + $0x8] sm:$0x1]
    %s129 = scalar_lea.vmem [#allocation5], 80
    %v130 = vld [vmem:[%s129] sm:$0xf]
    %v131 = vld [vmem:[%s129 + $0x4] sm:$0xf]
    %v132 = vld [vmem:[%s129 + $0x8] sm:$0xf]
    %v133 = vld [vmem:[%s129 + $0xc] sm:$0xf]
    %v134 = vld [vmem:[#allocation7 + $0x2] sm:$0x1]
    %v135 = vlaneseq
    %v136 = vshrl.u32 %v135, 7
    %v137 = vsub.s32 0, %v136
    %v138 = vrot.slane %v134, %v137
    %v143 = vunpack.c.l.b16 %v130
    %v144 = vunpack.c.l.b16 %v131
    %v145 = vunpack.c.l.b16 %v132
    %v146 = vunpack.c.l.b16 %v133
    %v147 = vpack.c.b16 %v144, %v143
    %v148 = vpack.c.b16 %v146, %v145
    %v152 = vsel %vm83, %v128, 0
    %154 = vmatprep.subr.bf16.mxu0 0
    %155 = vmatpush1.bf16.msra.mxu0 %v147
    %156 = vmatprep.subr.bf16.mxu0 0
    %157 = vmatpush1.bf16.msra.mxu0 %v148
    %158 = vmatprep.subr.bf16.mxu0 0
    %159 = vmatpush1.bf16.msra.mxu0 0
    %160 = vmatprep.subr.bf16.mxu0 0
    %161 = vmatpush1.bf16.msra.mxu0 0
    %162 = vmatprep.subr.bf16.mxu0 0
    %163 = vmatpush1.bf16.msra.mxu0 0
    %164 = vmatprep.subr.bf16.mxu0 0
    %165 = vmatpush1.bf16.msra.mxu0 0
    %166 = vmatprep.subr.bf16.mxu0 0
    %167 = vmatpush1.bf16.msra.mxu0 0
    %168 = vmatprep.subr.bf16.mxu0 0
    %169 = vmatpush1.bf16.msra.mxu0 0
    %170 = vmatprep.subr.bf16.mxu0 0
    %171 = vmatpush1.bf16.msra.mxu0 0
    %172 = vmatprep.subr.bf16.mxu0 0
    %173 = vmatpush1.bf16.msra.mxu0 0
    %174 = vmatprep.subr.bf16.mxu0 0
    %175 = vmatpush1.bf16.msra.mxu0 0
    %176 = vmatprep.subr.bf16.mxu0 0
    %177 = vmatpush1.bf16.msra.mxu0 0
    %178 = vmatprep.subr.bf16.mxu0 0
    %179 = vmatpush1.bf16.msra.mxu0 0
    %180 = vmatprep.subr.bf16.mxu0 0
    %181 = vmatpush1.bf16.msra.mxu0 0
    %182 = vmatprep.subr.bf16.mxu0 0
    %183 = vmatpush1.bf16.msra.mxu0 0
    %184 = vmatprep.subr.bf16.mxu0 0
    %185 = vmatpush1.bf16.msra.mxu0 0
    %186 = vmatprep.mubr.bf16.mxu0 0
    %187 = vmatmul.mubr.bf16.gmra.mrb[0].mxu0 %v152
    %v188 = vpop.f32.mrb[0].mxu0
    %v189 = vadd.f32 %v138, %v188
    %v190 = vpop.f32.mrb[0].mxu0
    %v191 = vpop.f32.mrb[0].mxu0
    %v192 = vpop.f32.mrb[0].mxu0
    %193 = vdwg.mxu0
    %s194 = scalar_lea.vmem [#allocation5], 16
    %v195 = vld [vmem:[%s194] sm:$0xf]
    %v196 = vld [vmem:[%s194 + $0x4] sm:$0xf]
    %v197 = vld [vmem:[%s194 + $0x8] sm:$0xf]
    %v198 = vld [vmem:[%s194 + $0xc] sm:$0xf]
    %s199 = scalar_lea.vmem [#allocation5], 32
    %v200 = vld [vmem:[%s199] sm:$0xf]
    %v201 = vld [vmem:[%s199 + $0x4] sm:$0xf]
    %v202 = vld [vmem:[%s199 + $0x8] sm:$0xf]
    %v203 = vld [vmem:[%s199 + $0xc] sm:$0xf]
    %s204 = scalar_lea.vmem [#allocation5], 48
    %v205 = vld [vmem:[%s204] sm:$0xf]
    %v206 = vld [vmem:[%s204 + $0x4] sm:$0xf]
    %v207 = vld [vmem:[%s204 + $0x8] sm:$0xf]
    %v208 = vld [vmem:[%s204 + $0xc] sm:$0xf]
    %v209 = vld [vmem:[#allocation7 + $0x1] sm:$0x1]
    %v210 = vxor.u32 %v122, 2147483648
    %v211 = vmul.f32 %v210, 1.442695
    %v212 = vpow.pop %v211
    %v213 = vadd.f32 %v212, 1.0
    %v214 = vrcp.pop %v213
    %v215 = vmul.f32 1.0, %v214
    %v216 = vmul.f32 %v215, 2.0
    %v217 = vsub.f32 %v216, 1.0
    %v218 = vmul.f32 %v215, 0.0
    %220 = vrot.lane.b32.xlu0 %v217, 64
    %v221 = vpop.permute.xlu0 %220
    %v223 = vmul.f32 %v215, %v221
    %225 = vrot.lane.b32.xlu0 %v223, 32
    %v226 = vpop.permute.xlu0 %225
    %v228 = vadd.f32 %v218, %v226
    %v229 = vtanh.pop %v228
    %231 = vrot.lane.b32.xlu0 %v229, 64
    %v232 = vpop.permute.xlu0 %231
    %v234 = vmul.f32 %v215, %v232
    %v235 = vpack.c.bf16 %v234, %v234
    %237 = vrot.lane.b32.xlu0 %v235, 32
    %v238 = vpop.permute.xlu0 %237
    %v243 = vunpack.c.l.b16 %v195
    %v244 = vunpack.c.l.b16 %v196
    %v245 = vunpack.c.l.b16 %v197
    %v246 = vunpack.c.l.b16 %v198
    %v247 = vpack.c.b16 %v244, %v243
    %v248 = vpack.c.b16 %v246, %v245
    %v252 = vsel %vm83, %v238, 0
    %254 = vmatprep.subr.bf16.mxu0 0
    %255 = vmatpush1.bf16.msra.mxu0 %v247
    %256 = vmatprep.subr.bf16.mxu0 0
    %257 = vmatpush1.bf16.msra.mxu0 %v248
    %258 = vmatprep.subr.bf16.mxu0 0
    %259 = vmatpush1.bf16.msra.mxu0 0
    %260 = vmatprep.subr.bf16.mxu0 0
    %261 = vmatpush1.bf16.msra.mxu0 0
    %262 = vmatprep.subr.bf16.mxu0 0
    %263 = vmatpush1.bf16.msra.mxu0 0
    %264 = vmatprep.subr.bf16.mxu0 0
    %265 = vmatpush1.bf16.msra.mxu0 0
    %266 = vmatprep.subr.bf16.mxu0 0
    %267 = vmatpush1.bf16.msra.mxu0 0
    %268 = vmatprep.subr.bf16.mxu0 0
    %269 = vmatpush1.bf16.msra.mxu0 0
    %270 = vmatprep.subr.bf16.mxu0 0
    %271 = vmatpush1.bf16.msra.mxu0 0
    %272 = vmatprep.subr.bf16.mxu0 0
    %273 = vmatpush1.bf16.msra.mxu0 0
    %274 = vmatprep.subr.bf16.mxu0 0
    %275 = vmatpush1.bf16.msra.mxu0 0
    %276 = vmatprep.subr.bf16.mxu0 0
    %277 = vmatpush1.bf16.msra.mxu0 0
    %278 = vmatprep.subr.bf16.mxu0 0
    %279 = vmatpush1.bf16.msra.mxu0 0
    %280 = vmatprep.subr.bf16.mxu0 0
    %281 = vmatpush1.bf16.msra.mxu0 0
    %282 = vmatprep.subr.bf16.mxu0 0
    %283 = vmatpush1.bf16.msra.mxu0 0
    %284 = vmatprep.subr.bf16.mxu0 0
    %285 = vmatpush1.bf16.msra.mxu0 0
    %286 = vmatprep.mubr.bf16.mxu0 0
    %287 = vmatmul.mubr.bf16.gmra.mrb[0].mxu0 %v252
    %v288 = vpop.f32.mrb[0].mxu0
    %v289 = vadd.f32 0.0, %v288
    %v290 = vpop.f32.mrb[0].mxu0
    %v291 = vpop.f32.mrb[0].mxu0
    %v292 = vpop.f32.mrb[0].mxu0
    %293 = vdwg.mxu0
    %v295 = vrot.slane %v289, 6
    %v297 = vadd.f32 %v122, %v295
    %v298 = vlaneseq
    %v299 = vshrl.u32 %v298, 7
    %v300 = vsub.s32 0, %v299
    %v301 = vrot.slane %v209, %v300
    %v306 = vunpack.c.l.b16 %v200
    %v307 = vunpack.c.l.b16 %v201
    %v308 = vunpack.c.l.b16 %v202
    %v309 = vunpack.c.l.b16 %v203
    %v310 = vpack.c.b16 %v307, %v306
    %v311 = vpack.c.b16 %v309, %v308
    %314 = vmatprep.subr.bf16.mxu0 0
    %315 = vmatpush1.bf16.msra.mxu0 %v310
    %316 = vmatprep.subr.bf16.mxu0 0
    %317 = vmatpush1.bf16.msra.mxu0 %v311
    %318 = vmatprep.subr.bf16.mxu0 0
    %319 = vmatpush1.bf16.msra.mxu0 0
    %320 = vmatprep.subr.bf16.mxu0 0
    %321 = vmatpush1.bf16.msra.mxu0 0
    %322 = vmatprep.subr.bf16.mxu0 0
    %323 = vmatpush1.bf16.msra.mxu0 0
    %324 = vmatprep.subr.bf16.mxu0 0
    %325 = vmatpush1.bf16.msra.mxu0 0
    %326 = vmatprep.subr.bf16.mxu0 0
    %327 = vmatpush1.bf16.msra.mxu0 0
    %328 = vmatprep.subr.bf16.mxu0 0
    %329 = vmatpush1.bf16.msra.mxu0 0
    %330 = vmatprep.subr.bf16.mxu0 0
    %331 = vmatpush1.bf16.msra.mxu0 0
    %332 = vmatprep.subr.bf16.mxu0 0
    %333 = vmatpush1.bf16.msra.mxu0 0
    %334 = vmatprep.subr.bf16.mxu0 0
    %335 = vmatpush1.bf16.msra.mxu0 0
    %336 = vmatprep.subr.bf16.mxu0 0
    %337 = vmatpush1.bf16.msra.mxu0 0
    %338 = vmatprep.subr.bf16.mxu0 0
    %339 = vmatpush1.bf16.msra.mxu0 0
    %340 = vmatprep.subr.bf16.mxu0 0
    %341 = vmatpush1.bf16.msra.mxu0 0
    %342 = vmatprep.subr.bf16.mxu0 0
    %343 = vmatpush1.bf16.msra.mxu0 0
    %344 = vmatprep.subr.bf16.mxu0 0
    %345 = vmatpush1.bf16.msra.mxu0 0
    %346 = vmatprep.mubr.bf16.mxu0 0
    %347 = vmatmul.mubr.bf16.gmra.mrb[0].mxu0 %v252
    %v348 = vpop.f32.mrb[0].mxu0
    %v349 = vadd.f32 %v301, %v348
    %v350 = vpop.f32.mrb[0].mxu0
    %v351 = vpop.f32.mrb[0].mxu0
    %v352 = vpop.f32.mrb[0].mxu0
    %353 = vdwg.mxu0
    %v354 = vxor.u32 %v297, 2147483648
    %v355 = vmul.f32 %v354, 1.442695
    %v356 = vpow.pop %v355
    %v357 = vadd.f32 %v356, 1.0
    %v358 = vrcp.pop %v357
    %v359 = vmul.f32 1.0, %v358
    %v360 = vmul.f32 %v359, 2.0
    %v361 = vsub.f32 %v360, 1.0
    %v363 = vrot.slane %v228, 6
    %v365 = vmul.f32 %v359, %v363
    %367 = vrot.lane.b32.xlu0 %v361, 64
    %v368 = vpop.permute.xlu0 %367
    %v370 = vmul.f32 %v359, %v368
    %372 = vrot.lane.b32.xlu0 %v370, 32
    %v373 = vpop.permute.xlu0 %372
    %v375 = vadd.f32 %v365, %v373
    %v376 = vtanh.pop %v375
    %378 = vrot.lane.b32.xlu0 %v376, 64
    %v379 = vpop.permute.xlu0 %378
    %v381 = vmul.f32 %v359, %v379
    %v382 = vpack.c.bf16 %v381, %v381
    %v383 = vxor.u32 %v349, 2147483648
    %v384 = vmul.f32 %v383, 1.442695
    %v385 = vpow.pop %v384
    %v386 = vadd.f32 %v385, 1.0
    %v387 = vrcp.pop %v386
    %v388 = vmul.f32 1.0, %v387
    %v389 = vmul.f32 %v388, 2.0
    %v390 = vsub.f32 %v389, 1.0
    %v391 = vmul.f32 %v388, 0.0
    %393 = vrot.lane.b32.xlu0 %v390, 64
    %v394 = vpop.permute.xlu0 %393
    %v396 = vmul.f32 %v388, %v394
    %398 = vrot.lane.b32.xlu0 %v396, 32
    %v399 = vpop.permute.xlu0 %398
    %v401 = vadd.f32 %v391, %v399
    %v402 = vtanh.pop %v401
    %404 = vrot.lane.b32.xlu0 %v402, 64
    %v405 = vpop.permute.xlu0 %404
    %v407 = vmul.f32 %v388, %v405
    %v408 = vpack.c.bf16 %v407, %v407
    %v410 = vrot.slane %v382, 1
    %411 = vrot.lane.b32.xlu0 %v410, 32
    %v412 = vpop.permute.xlu0 %411
    %v414 = vsel %vm83, %v412, 0
    %416 = vmatprep.subr.bf16.mxu0 0
    %417 = vmatpush1.bf16.msra.mxu0 %v247
    %418 = vmatprep.subr.bf16.mxu0 0
    %419 = vmatpush1.bf16.msra.mxu0 %v248
    %420 = vmatprep.subr.bf16.mxu0 0
    %421 = vmatpush1.bf16.msra.mxu0 0
    %422 = vmatprep.subr.bf16.mxu0 0
    %423 = vmatpush1.bf16.msra.mxu0 0
    %424 = vmatprep.subr.bf16.mxu0 0
    %425 = vmatpush1.bf16.msra.mxu0 0
    %426 = vmatprep.subr.bf16.mxu0 0
    %427 = vmatpush1.bf16.msra.mxu0 0
    %428 = vmatprep.subr.bf16.mxu0 0
    %429 = vmatpush1.bf16.msra.mxu0 0
    %430 = vmatprep.subr.bf16.mxu0 0
    %431 = vmatpush1.bf16.msra.mxu0 0
    %432 = vmatprep.subr.bf16.mxu0 0
    %433 = vmatpush1.bf16.msra.mxu0 0
    %434 = vmatprep.subr.bf16.mxu0 0
    %435 = vmatpush1.bf16.msra.mxu0 0
    %436 = vmatprep.subr.bf16.mxu0 0
    %437 = vmatpush1.bf16.msra.mxu0 0
    %438 = vmatprep.subr.bf16.mxu0 0
    %439 = vmatpush1.bf16.msra.mxu0 0
    %440 = vmatprep.subr.bf16.mxu0 0
    %441 = vmatpush1.bf16.msra.mxu0 0
    %442 = vmatprep.subr.bf16.mxu0 0
    %443 = vmatpush1.bf16.msra.mxu0 0
    %444 = vmatprep.subr.bf16.mxu0 0
    %445 = vmatpush1.bf16.msra.mxu0 0
    %446 = vmatprep.subr.bf16.mxu0 0
    %447 = vmatpush1.bf16.msra.mxu0 0
    %448 = vmatprep.mubr.bf16.mxu0 0
    %449 = vmatmul.mubr.bf16.gmra.mrb[0].mxu0 %v414
    %v450 = vpop.f32.mrb[0].mxu0
    %v451 = vadd.f32 0.0, %v450
    %v452 = vpop.f32.mrb[0].mxu0
    %v453 = vpop.f32.mrb[0].mxu0
    %v454 = vpop.f32.mrb[0].mxu0
    %455 = vdwg.mxu0
    %v457 = vrot.slane %v451, 4
    %v459 = vadd.f32 %v122, %v457
    %461 = vrot.lane.b32.xlu0 %v408, 32
    %v462 = vpop.permute.xlu0 %461
    %v467 = vunpack.c.l.b16 %v205
    %v468 = vunpack.c.l.b16 %v206
    %v469 = vunpack.c.l.b16 %v207
    %v470 = vunpack.c.l.b16 %v208
    %v471 = vpack.c.b16 %v468, %v467
    %v472 = vpack.c.b16 %v470, %v469
    %v476 = vsel %vm83, %v462, 0
    %478 = vmatprep.subr.bf16.mxu0 0
    %479 = vmatpush1.bf16.msra.mxu0 %v471
    %480 = vmatprep.subr.bf16.mxu0 0
    %481 = vmatpush1.bf16.msra.mxu0 %v472
    %482 = vmatprep.subr.bf16.mxu0 0
    %483 = vmatpush1.bf16.msra.mxu0 0
    %484 = vmatprep.subr.bf16.mxu0 0
    %485 = vmatpush1.bf16.msra.mxu0 0
    %486 = vmatprep.subr.bf16.mxu0 0
    %487 = vmatpush1.bf16.msra.mxu0 0
    %488 = vmatprep.subr.bf16.mxu0 0
    %489 = vmatpush1.bf16.msra.mxu0 0
    %490 = vmatprep.subr.bf16.mxu0 0
    %491 = vmatpush1.bf16.msra.mxu0 0
    %492 = vmatprep.subr.bf16.mxu0 0
    %493 = vmatpush1.bf16.msra.mxu0 0
    %494 = vmatprep.subr.bf16.mxu0 0
    %495 = vmatpush1.bf16.msra.mxu0 0
    %496 = vmatprep.subr.bf16.mxu0 0
    %497 = vmatpush1.bf16.msra.mxu0 0
    %498 = vmatprep.subr.bf16.mxu0 0
    %499 = vmatpush1.bf16.msra.mxu0 0
    %500 = vmatprep.subr.bf16.mxu0 0
    %501 = vmatpush1.bf16.msra.mxu0 0
    %502 = vmatprep.subr.bf16.mxu0 0
    %503 = vmatpush1.bf16.msra.mxu0 0
    %504 = vmatprep.subr.bf16.mxu0 0
    %505 = vmatpush1.bf16.msra.mxu0 0
    %506 = vmatprep.subr.bf16.mxu0 0
    %507 = vmatpush1.bf16.msra.mxu0 0
    %508 = vmatprep.subr.bf16.mxu0 0
    %509 = vmatpush1.bf16.msra.mxu0 0
    %510 = vmatprep.mubr.bf16.mxu0 0
    %511 = vmatmul.mubr.bf16.gmra.mrb[0].mxu0 %v476
    %v512 = vpop.f32.mrb[0].mxu0
    %v513 = vadd.f32 0.0, %v512
    %v514 = vpop.f32.mrb[0].mxu0
    %v515 = vpop.f32.mrb[0].mxu0
    %v516 = vpop.f32.mrb[0].mxu0
    %517 = vdwg.mxu0
    %518 = vmatprep.subr.bf16.mxu0 0
    %519 = vmatpush1.bf16.msra.mxu0 %v310
    %520 = vmatprep.subr.bf16.mxu0 0
    %521 = vmatpush1.bf16.msra.mxu0 %v311
    %522 = vmatprep.subr.bf16.mxu0 0
    %523 = vmatpush1.bf16.msra.mxu0 0
    %524 = vmatprep.subr.bf16.mxu0 0
    %525 = vmatpush1.bf16.msra.mxu0 0
    %526 = vmatprep.subr.bf16.mxu0 0
    %527 = vmatpush1.bf16.msra.mxu0 0
    %528 = vmatprep.subr.bf16.mxu0 0
    %529 = vmatpush1.bf16.msra.mxu0 0
    %530 = vmatprep.subr.bf16.mxu0 0
    %531 = vmatpush1.bf16.msra.mxu0 0
    %532 = vmatprep.subr.bf16.mxu0 0
    %533 = vmatpush1.bf16.msra.mxu0 0
    %534 = vmatprep.subr.bf16.mxu0 0
    %535 = vmatpush1.bf16.msra.mxu0 0
    %536 = vmatprep.subr.bf16.mxu0 0
    %537 = vmatpush1.bf16.msra.mxu0 0
    %538 = vmatprep.subr.bf16.mxu0 0
    %539 = vmatpush1.bf16.msra.mxu0 0
    %540 = vmatprep.subr.bf16.mxu0 0
    %541 = vmatpush1.bf16.msra.mxu0 0
    %542 = vmatprep.subr.bf16.mxu0 0
    %543 = vmatpush1.bf16.msra.mxu0 0
    %544 = vmatprep.subr.bf16.mxu0 0
    %545 = vmatpush1.bf16.msra.mxu0 0
    %546 = vmatprep.subr.bf16.mxu0 0
    %547 = vmatpush1.bf16.msra.mxu0 0
    %548 = vmatprep.subr.bf16.mxu0 0
    %549 = vmatpush1.bf16.msra.mxu0 0
    %550 = vmatprep.mubr.bf16.mxu0 0
    %551 = vmatmul.mubr.bf16.gmra.mrb[0].mxu0 %v414
    %v552 = vpop.f32.mrb[0].mxu0
    %v553 = vadd.f32 %v513, %v552
    %v554 = vpop.f32.mrb[0].mxu0
    %v555 = vpop.f32.mrb[0].mxu0
    %v556 = vpop.f32.mrb[0].mxu0
    %557 = vdwg.mxu0
    %v558 = vadd.f32 %v553, %v301
    %v559 = vxor.u32 %v459, 2147483648
    %v560 = vmul.f32 %v559, 1.442695
    %v561 = vpow.pop %v560
    %v562 = vadd.f32 %v561, 1.0
    %v563 = vrcp.pop %v562
    %v564 = vmul.f32 1.0, %v563
    %v565 = vmul.f32 %v564, 2.0
    %v566 = vsub.f32 %v565, 1.0
    %v568 = vrot.slane %v375, 6
    %v570 = vmul.f32 %v564, %v568
    %572 = vrot.lane.b32.xlu0 %v566, 64
    %v573 = vpop.permute.xlu0 %572
    %v575 = vmul.f32 %v564, %v573
    %577 = vrot.lane.b32.xlu0 %v575, 32
    %v578 = vpop.permute.xlu0 %577
    %v580 = vadd.f32 %v570, %v578
    %v581 = vtanh.pop %v580
    %583 = vrot.lane.b32.xlu0 %v581, 64
    %v584 = vpop.permute.xlu0 %583
    %v586 = vmul.f32 %v564, %v584
    %v587 = vpack.c.bf16 %v586, %v586
    %v588 = vxor.u32 %v558, 2147483648
    %v589 = vmul.f32 %v588, 1.442695
    %v590 = vpow.pop %v589
    %v591 = vadd.f32 %v590, 1.0
    %v592 = vrcp.pop %v591
    %v593 = vmul.f32 1.0, %v592
    %v594 = vmul.f32 %v593, 2.0
    %v595 = vsub.f32 %v594, 1.0
    %v596 = vmul.f32 %v593, %v401
    %598 = vrot.lane.b32.xlu0 %v595, 64
    %v599 = vpop.permute.xlu0 %598
    %v601 = vmul.f32 %v593, %v599
    %603 = vrot.lane.b32.xlu0 %v601, 32
    %v604 = vpop.permute.xlu0 %603
    %v606 = vadd.f32 %v596, %v604
    %v607 = vtanh.pop %v606
    %609 = vrot.lane.b32.xlu0 %v607, 64
    %v610 = vpop.permute.xlu0 %609
    %v612 = vmul.f32 %v593, %v610
    %v613 = vpack.c.bf16 %v612, %v612
    %v615 = vrot.slane %v587, 2
    %616 = vrot.lane.b32.xlu0 %v615, 32
    %v617 = vpop.permute.xlu0 %616
    %v619 = vsel %vm83, %v617, 0
    %621 = vmatprep.subr.bf16.mxu0 0
    %622 = vmatpush1.bf16.msra.mxu0 %v247
    %623 = vmatprep.subr.bf16.mxu0 0
    %624 = vmatpush1.bf16.msra.mxu0 %v248
    %625 = vmatprep.subr.bf16.mxu0 0
    %626 = vmatpush1.bf16.msra.mxu0 0
    %627 = vmatprep.subr.bf16.mxu0 0
    %628 = vmatpush1.bf16.msra.mxu0 0
    %629 = vmatprep.subr.bf16.mxu0 0
    %630 = vmatpush1.bf16.msra.mxu0 0
    %631 = vmatprep.subr.bf16.mxu0 0
    %632 = vmatpush1.bf16.msra.mxu0 0
    %633 = vmatprep.subr.bf16.mxu0 0
    %634 = vmatpush1.bf16.msra.mxu0 0
    %635 = vmatprep.subr.bf16.mxu0 0
    %636 = vmatpush1.bf16.msra.mxu0 0
    %637 = vmatprep.subr.bf16.mxu0 0
    %638 = vmatpush1.bf16.msra.mxu0 0
    %639 = vmatprep.subr.bf16.mxu0 0
    %640 = vmatpush1.bf16.msra.mxu0 0
    %641 = vmatprep.subr.bf16.mxu0 0
    %642 = vmatpush1.bf16.msra.mxu0 0
    %643 = vmatprep.subr.bf16.mxu0 0
    %644 = vmatpush1.bf16.msra.mxu0 0
    %645 = vmatprep.subr.bf16.mxu0 0
    %646 = vmatpush1.bf16.msra.mxu0 0
    %647 = vmatprep.subr.bf16.mxu0 0
    %648 = vmatpush1.bf16.msra.mxu0 0
    %649 = vmatprep.subr.bf16.mxu0 0
    %650 = vmatpush1.bf16.msra.mxu0 0
    %651 = vmatprep.subr.bf16.mxu0 0
    %652 = vmatpush1.bf16.msra.mxu0 0
    %653 = vmatprep.mubr.bf16.mxu0 0
    %654 = vmatmul.mubr.bf16.gmra.mrb[0].mxu0 %v619
    %v655 = vpop.f32.mrb[0].mxu0
    %v656 = vadd.f32 0.0, %v655
    %v657 = vpop.f32.mrb[0].mxu0
    %v658 = vpop.f32.mrb[0].mxu0
    %v659 = vpop.f32.mrb[0].mxu0
    %660 = vdwg.mxu0
    %v662 = vrot.slane %v656, 2
    %v664 = vadd.f32 %v122, %v662
    %666 = vrot.lane.b32.xlu0 %v613, 32
    %v667 = vpop.permute.xlu0 %666
    %v669 = vsel %vm83, %v667, 0
    %671 = vmatprep.subr.bf16.mxu0 0
    %672 = vmatpush1.bf16.msra.mxu0 %v471
    %673 = vmatprep.subr.bf16.mxu0 0
    %674 = vmatpush1.bf16.msra.mxu0 %v472
    %675 = vmatprep.subr.bf16.mxu0 0
    %676 = vmatpush1.bf16.msra.mxu0 0
    %677 = vmatprep.subr.bf16.mxu0 0
    %678 = vmatpush1.bf16.msra.mxu0 0
    %679 = vmatprep.subr.bf16.mxu0 0
    %680 = vmatpush1.bf16.msra.mxu0 0
    %681 = vmatprep.subr.bf16.mxu0 0
    %682 = vmatpush1.bf16.msra.mxu0 0
    %683 = vmatprep.subr.bf16.mxu0 0
    %684 = vmatpush1.bf16.msra.mxu0 0
    %685 = vmatprep.subr.bf16.mxu0 0
    %686 = vmatpush1.bf16.msra.mxu0 0
    %687 = vmatprep.subr.bf16.mxu0 0
    %688 = vmatpush1.bf16.msra.mxu0 0
    %689 = vmatprep.subr.bf16.mxu0 0
    %690 = vmatpush1.bf16.msra.mxu0 0
    %691 = vmatprep.subr.bf16.mxu0 0
    %692 = vmatpush1.bf16.msra.mxu0 0
    %693 = vmatprep.subr.bf16.mxu0 0
    %694 = vmatpush1.bf16.msra.mxu0 0
    %695 = vmatprep.subr.bf16.mxu0 0
    %696 = vmatpush1.bf16.msra.mxu0 0
    %697 = vmatprep.subr.bf16.mxu0 0
    %698 = vmatpush1.bf16.msra.mxu0 0
    %699 = vmatprep.subr.bf16.mxu0 0
    %700 = vmatpush1.bf16.msra.mxu0 0
    %701 = vmatprep.subr.bf16.mxu0 0
    %702 = vmatpush1.bf16.msra.mxu0 0
    %703 = vmatprep.mubr.bf16.mxu0 0
    %704 = vmatmul.mubr.bf16.gmra.mrb[0].mxu0 %v669
    %v705 = vpop.f32.mrb[0].mxu0
    %v706 = vadd.f32 0.0, %v705
    %v707 = vpop.f32.mrb[0].mxu0
    %v708 = vpop.f32.mrb[0].mxu0
    %v709 = vpop.f32.mrb[0].mxu0
    %710 = vdwg.mxu0
    %711 = vmatprep.subr.bf16.mxu0 0
    %712 = vmatpush1.bf16.msra.mxu0 %v310
    %713 = vmatprep.subr.bf16.mxu0 0
    %714 = vmatpush1.bf16.msra.mxu0 %v311
    %715 = vmatprep.subr.bf16.mxu0 0
    %716 = vmatpush1.bf16.msra.mxu0 0
    %717 = vmatprep.subr.bf16.mxu0 0
    %718 = vmatpush1.bf16.msra.mxu0 0
    %719 = vmatprep.subr.bf16.mxu0 0
    %720 = vmatpush1.bf16.msra.mxu0 0
    %721 = vmatprep.subr.bf16.mxu0 0
    %722 = vmatpush1.bf16.msra.mxu0 0
    %723 = vmatprep.subr.bf16.mxu0 0
    %724 = vmatpush1.bf16.msra.mxu0 0
    %725 = vmatprep.subr.bf16.mxu0 0
    %726 = vmatpush1.bf16.msra.mxu0 0
    %727 = vmatprep.subr.bf16.mxu0 0
    %728 = vmatpush1.bf16.msra.mxu0 0
    %729 = vmatprep.subr.bf16.mxu0 0
    %730 = vmatpush1.bf16.msra.mxu0 0
    %731 = vmatprep.subr.bf16.mxu0 0
    %732 = vmatpush1.bf16.msra.mxu0 0
    %733 = vmatprep.subr.bf16.mxu0 0
    %734 = vmatpush1.bf16.msra.mxu0 0
    %735 = vmatprep.subr.bf16.mxu0 0
    %736 = vmatpush1.bf16.msra.mxu0 0
    %737 = vmatprep.subr.bf16.mxu0 0
    %738 = vmatpush1.bf16.msra.mxu0 0
    %739 = vmatprep.subr.bf16.mxu0 0
    %740 = vmatpush1.bf16.msra.mxu0 0
    %741 = vmatprep.subr.bf16.mxu0 0
    %742 = vmatpush1.bf16.msra.mxu0 0
    %743 = vmatprep.mubr.bf16.mxu0 0
    %744 = vmatmul.mubr.bf16.gmra.mrb[0].mxu0 %v619
    %v745 = vpop.f32.mrb[0].mxu0
    %v746 = vadd.f32 %v706, %v745
    %v747 = vpop.f32.mrb[0].mxu0
    %v748 = vpop.f32.mrb[0].mxu0
    %v749 = vpop.f32.mrb[0].mxu0
    %750 = vdwg.mxu0
    %v751 = vadd.f32 %v746, %v301
    %v752 = vxor.u32 %v664, 2147483648
    %v753 = vmul.f32 %v752, 1.442695
    %v754 = vpow.pop %v753
    %v755 = vadd.f32 %v754, 1.0
    %v756 = vrcp.pop %v755
    %v757 = vmul.f32 1.0, %v756
    %v758 = vmul.f32 %v757, 2.0
    %v759 = vsub.f32 %v758, 1.0
    %v761 = vrot.slane %v580, 6
    %v763 = vmul.f32 %v757, %v761
    %765 = vrot.lane.b32.xlu0 %v759, 64
    %v766 = vpop.permute.xlu0 %765
    %v768 = vmul.f32 %v757, %v766
    %770 = vrot.lane.b32.xlu0 %v768, 32
    %v771 = vpop.permute.xlu0 %770
    %v773 = vadd.f32 %v763, %v771
    %v774 = vtanh.pop %v773
    %776 = vrot.lane.b32.xlu0 %v774, 64
    %v777 = vpop.permute.xlu0 %776
    %v779 = vmul.f32 %v757, %v777
    %v780 = vpack.c.bf16 %v779, %v779
    %v781 = vxor.u32 %v751, 2147483648
    %v782 = vmul.f32 %v781, 1.442695
    %v783 = vpow.pop %v782
    %v784 = vadd.f32 %v783, 1.0
    %v785 = vrcp.pop %v784
    %v786 = vmul.f32 1.0, %v785
    %v787 = vmul.f32 %v786, 2.0
    %v788 = vsub.f32 %v787, 1.0
    %v789 = vmul.f32 %v786, %v606
    %791 = vrot.lane.b32.xlu0 %v788, 64
    %v792 = vpop.permute.xlu0 %791
    %v794 = vmul.f32 %v786, %v792
    %796 = vrot.lane.b32.xlu0 %v794, 32
    %v797 = vpop.permute.xlu0 %796
    %v799 = vadd.f32 %v789, %v797
    %v800 = vtanh.pop %v799
    %802 = vrot.lane.b32.xlu0 %v800, 64
    %v803 = vpop.permute.xlu0 %802
    %v805 = vmul.f32 %v786, %v803
    %v806 = vpack.c.bf16 %v805, %v805
    %v808 = vrot.slane %v780, 3
    %809 = vrot.lane.b32.xlu0 %v808, 32
    %v810 = vpop.permute.xlu0 %809
    %v812 = vsel %vm83, %v810, 0
    %814 = vmatprep.subr.bf16.mxu0 0
    %815 = vmatpush1.bf16.msra.mxu0 %v247
    %816 = vmatprep.subr.bf16.mxu0 0
    %817 = vmatpush1.bf16.msra.mxu0 %v248
    %818 = vmatprep.subr.bf16.mxu0 0
    %819 = vmatpush1.bf16.msra.mxu0 0
    %820 = vmatprep.subr.bf16.mxu0 0
    %821 = vmatpush1.bf16.msra.mxu0 0
    %822 = vmatprep.subr.bf16.mxu0 0
    %823 = vmatpush1.bf16.msra.mxu0 0
    %824 = vmatprep.subr.bf16.mxu0 0
    %825 = vmatpush1.bf16.msra.mxu0 0
    %826 = vmatprep.subr.bf16.mxu0 0
    %827 = vmatpush1.bf16.msra.mxu0 0
    %828 = vmatprep.subr.bf16.mxu0 0
    %829 = vmatpush1.bf16.msra.mxu0 0
    %830 = vmatprep.subr.bf16.mxu0 0
    %831 = vmatpush1.bf16.msra.mxu0 0
    %832 = vmatprep.subr.bf16.mxu0 0
    %833 = vmatpush1.bf16.msra.mxu0 0
    %834 = vmatprep.subr.bf16.mxu0 0
    %835 = vmatpush1.bf16.msra.mxu0 0
    %836 = vmatprep.subr.bf16.mxu0 0
    %837 = vmatpush1.bf16.msra.mxu0 0
    %838 = vmatprep.subr.bf16.mxu0 0
    %839 = vmatpush1.bf16.msra.mxu0 0
    %840 = vmatprep.subr.bf16.mxu0 0
    %841 = vmatpush1.bf16.msra.mxu0 0
    %842 = vmatprep.subr.bf16.mxu0 0
    %843 = vmatpush1.bf16.msra.mxu0 0
    %844 = vmatprep.subr.bf16.mxu0 0
    %845 = vmatpush1.bf16.msra.mxu0 0
    %846 = vmatprep.mubr.bf16.mxu0 0
    %847 = vmatmul.mubr.bf16.gmra.mrb[0].mxu0 %v812
    %v848 = vpop.f32.mrb[0].mxu0
    %v849 = vadd.f32 0.0, %v848
    %v850 = vpop.f32.mrb[0].mxu0
    %v851 = vpop.f32.mrb[0].mxu0
    %v852 = vpop.f32.mrb[0].mxu0
    %853 = vdwg.mxu0
    %v854 = vadd.f32 %v125, %v849
    %856 = vrot.lane.b32.xlu0 %v806, 32
    %v857 = vpop.permute.xlu0 %856
    %v859 = vsel %vm83, %v857, 0
    %861 = vmatprep.subr.bf16.mxu0 0
    %862 = vmatpush1.bf16.msra.mxu0 %v471
    %863 = vmatprep.subr.bf16.mxu0 0
    %864 = vmatpush1.bf16.msra.mxu0 %v472
    %865 = vmatprep.subr.bf16.mxu0 0
    %866 = vmatpush1.bf16.msra.mxu0 0
    %867 = vmatprep.subr.bf16.mxu0 0
    %868 = vmatpush1.bf16.msra.mxu0 0
    %869 = vmatprep.subr.bf16.mxu0 0
    %870 = vmatpush1.bf16.msra.mxu0 0
    %871 = vmatprep.subr.bf16.mxu0 0
    %872 = vmatpush1.bf16.msra.mxu0 0
    %873 = vmatprep.subr.bf16.mxu0 0
    %874 = vmatpush1.bf16.msra.mxu0 0
    %875 = vmatprep.subr.bf16.mxu0 0
    %876 = vmatpush1.bf16.msra.mxu0 0
    %877 = vmatprep.subr.bf16.mxu0 0
    %878 = vmatpush1.bf16.msra.mxu0 0
    %879 = vmatprep.subr.bf16.mxu0 0
    %880 = vmatpush1.bf16.msra.mxu0 0
    %881 = vmatprep.subr.bf16.mxu0 0
    %882 = vmatpush1.bf16.msra.mxu0 0
    %883 = vmatprep.subr.bf16.mxu0 0
    %884 = vmatpush1.bf16.msra.mxu0 0
    %885 = vmatprep.subr.bf16.mxu0 0
    %886 = vmatpush1.bf16.msra.mxu0 0
    %887 = vmatprep.subr.bf16.mxu0 0
    %888 = vmatpush1.bf16.msra.mxu0 0
    %889 = vmatprep.subr.bf16.mxu0 0
    %890 = vmatpush1.bf16.msra.mxu0 0
    %891 = vmatprep.subr.bf16.mxu0 0
    %892 = vmatpush1.bf16.msra.mxu0 0
    %893 = vmatprep.mubr.bf16.mxu0 0
    %894 = vmatmul.mubr.bf16.gmra.mrb[0].mxu0 %v859
    %v895 = vpop.f32.mrb[0].mxu0
    %v896 = vadd.f32 0.0, %v895
    %v897 = vpop.f32.mrb[0].mxu0
    %v898 = vpop.f32.mrb[0].mxu0
    %v899 = vpop.f32.mrb[0].mxu0
    %900 = vdwg.mxu0
    %901 = vmatprep.subr.bf16.mxu0 0
    %902 = vmatpush1.bf16.msra.mxu0 %v310
    %903 = vmatprep.subr.bf16.mxu0 0
    %904 = vmatpush1.bf16.msra.mxu0 %v311
    %905 = vmatprep.subr.bf16.mxu0 0
    %906 = vmatpush1.bf16.msra.mxu0 0
    %907 = vmatprep.subr.bf16.mxu0 0
    %908 = vmatpush1.bf16.msra.mxu0 0
    %909 = vmatprep.subr.bf16.mxu0 0
    %910 = vmatpush1.bf16.msra.mxu0 0
    %911 = vmatprep.subr.bf16.mxu0 0
    %912 = vmatpush1.bf16.msra.mxu0 0
    %913 = vmatprep.subr.bf16.mxu0 0
    %914 = vmatpush1.bf16.msra.mxu0 0
    %915 = vmatprep.subr.bf16.mxu0 0
    %916 = vmatpush1.bf16.msra.mxu0 0
    %917 = vmatprep.subr.bf16.mxu0 0
    %918 = vmatpush1.bf16.msra.mxu0 0
    %919 = vmatprep.subr.bf16.mxu0 0
    %920 = vmatpush1.bf16.msra.mxu0 0
    %921 = vmatprep.subr.bf16.mxu0 0
    %922 = vmatpush1.bf16.msra.mxu0 0
    %923 = vmatprep.subr.bf16.mxu0 0
    %924 = vmatpush1.bf16.msra.mxu0 0
    %925 = vmatprep.subr.bf16.mxu0 0
    %926 = vmatpush1.bf16.msra.mxu0 0
    %927 = vmatprep.subr.bf16.mxu0 0
    %928 = vmatpush1.bf16.msra.mxu0 0
    %929 = vmatprep.subr.bf16.mxu0 0
    %930 = vmatpush1.bf16.msra.mxu0 0
    %931 = vmatprep.subr.bf16.mxu0 0
    %932 = vmatpush1.bf16.msra.mxu0 0
    %933 = vmatprep.mubr.bf16.mxu0 0
    %934 = vmatmul.mubr.bf16.gmra.mrb[0].mxu0 %v812
    %v935 = vpop.f32.mrb[0].mxu0
    %v936 = vadd.f32 %v896, %v935
    %v937 = vpop.f32.mrb[0].mxu0
    %v938 = vpop.f32.mrb[0].mxu0
    %v939 = vpop.f32.mrb[0].mxu0
    %940 = vdwg.mxu0
    %v941 = vadd.f32 %v936, %v301
    %v942 = vxor.u32 %v854, 2147483648
    %v943 = vmul.f32 %v942, 1.442695
    %v944 = vpow.pop %v943
    %v945 = vadd.f32 %v944, 1.0
    %v946 = vrcp.pop %v945
    %v947 = vmul.f32 1.0, %v946
    %v948 = vmul.f32 %v947, 2.0
    %v949 = vsub.f32 %v948, 1.0
    %v951 = vrot.slane %v773, 6
    %v953 = vmul.f32 %v947, %v951
    %955 = vrot.lane.b32.xlu0 %v949, 64
    %v956 = vpop.permute.xlu0 %955
    %v958 = vmul.f32 %v947, %v956
    %960 = vrot.lane.b32.xlu0 %v958, 32
    %v961 = vpop.permute.xlu0 %960
    %v963 = vadd.f32 %v953, %v961
    %v964 = vtanh.pop %v963
    %966 = vrot.lane.b32.xlu0 %v964, 64
    %v967 = vpop.permute.xlu0 %966
    %v969 = vmul.f32 %v947, %v967
    %v970 = vpack.c.bf16 %v969, %v969
    %v971 = vxor.u32 %v941, 2147483648
    %v972 = vmul.f32 %v971, 1.442695
    %v973 = vpow.pop %v972
    %v974 = vadd.f32 %v973, 1.0
    %v975 = vrcp.pop %v974
    %v976 = vmul.f32 1.0, %v975
    %v977 = vmul.f32 %v976, 2.0
    %v978 = vsub.f32 %v977, 1.0
    %v979 = vmul.f32 %v976, %v799
    %981 = vrot.lane.b32.xlu0 %v978, 64
    %v982 = vpop.permute.xlu0 %981
    %v984 = vmul.f32 %v976, %v982
    %986 = vrot.lane.b32.xlu0 %v984, 32
    %v987 = vpop.permute.xlu0 %986
    %v989 = vadd.f32 %v979, %v987
    %v990 = vtanh.pop %v989
    %992 = vrot.lane.b32.xlu0 %v990, 64
    %v993 = vpop.permute.xlu0 %992
    %v995 = vmul.f32 %v976, %v993
    %v996 = vpack.c.bf16 %v995, %v995
    %998 = vrot.lane.b32.xlu0 %v970, 32
    %v999 = vpop.permute.xlu0 %998
    %v1001 = vsel %vm83, %v999, 0
    %1003 = vmatprep.subr.bf16.mxu0 0
    %1004 = vmatpush1.bf16.msra.mxu0 %v247
    %1005 = vmatprep.subr.bf16.mxu0 0
    %1006 = vmatpush1.bf16.msra.mxu0 %v248
    %1007 = vmatprep.subr.bf16.mxu0 0
    %1008 = vmatpush1.bf16.msra.mxu0 0
    %1009 = vmatprep.subr.bf16.mxu0 0
    %1010 = vmatpush1.bf16.msra.mxu0 0
    %1011 = vmatprep.subr.bf16.mxu0 0
    %1012 = vmatpush1.bf16.msra.mxu0 0
    %1013 = vmatprep.subr.bf16.mxu0 0
    %1014 = vmatpush1.bf16.msra.mxu0 0
    %1015 = vmatprep.subr.bf16.mxu0 0
    %1016 = vmatpush1.bf16.msra.mxu0 0
    %1017 = vmatprep.subr.bf16.mxu0 0
    %1018 = vmatpush1.bf16.msra.mxu0 0
    %1019 = vmatprep.subr.bf16.mxu0 0
    %1020 = vmatpush1.bf16.msra.mxu0 0
    %1021 = vmatprep.subr.bf16.mxu0 0
    %1022 = vmatpush1.bf16.msra.mxu0 0
    %1023 = vmatprep.subr.bf16.mxu0 0
    %1024 = vmatpush1.bf16.msra.mxu0 0
    %1025 = vmatprep.subr.bf16.mxu0 0
    %1026 = vmatpush1.bf16.msra.mxu0 0
    %1027 = vmatprep.subr.bf16.mxu0 0
    %1028 = vmatpush1.bf16.msra.mxu0 0
    %1029 = vmatprep.subr.bf16.mxu0 0
    %1030 = vmatpush1.bf16.msra.mxu0 0
    %1031 = vmatprep.subr.bf16.mxu0 0
    %1032 = vmatpush1.bf16.msra.mxu0 0
    %1033 = vmatprep.subr.bf16.mxu0 0
    %1034 = vmatpush1.bf16.msra.mxu0 0
    %1035 = vmatprep.mubr.bf16.mxu0 0
    %1036 = vmatmul.mubr.bf16.gmra.mrb[0].mxu0 %v1001
    %v1037 = vpop.f32.mrb[0].mxu0
    %v1038 = vadd.f32 0.0, %v1037
    %v1039 = vpop.f32.mrb[0].mxu0
    %v1040 = vpop.f32.mrb[0].mxu0
    %v1041 = vpop.f32.mrb[0].mxu0
    %1042 = vdwg.mxu0
    %v1044 = vrot.slane %v1038, 6
    %v1046 = vadd.f32 %v125, %v1044
    %1048 = vrot.lane.b32.xlu0 %v996, 32
    %v1049 = vpop.permute.xlu0 %1048
    %v1051 = vsel %vm83, %v1049, 0
    %1053 = vmatprep.subr.bf16.mxu0 0
    %1054 = vmatpush1.bf16.msra.mxu0 %v471
    %1055 = vmatprep.subr.bf16.mxu0 0
    %1056 = vmatpush1.bf16.msra.mxu0 %v472
    %1057 = vmatprep.subr.bf16.mxu0 0
    %1058 = vmatpush1.bf16.msra.mxu0 0
    %1059 = vmatprep.subr.bf16.mxu0 0
    %1060 = vmatpush1.bf16.msra.mxu0 0
    %1061 = vmatprep.subr.bf16.mxu0 0
    %1062 = vmatpush1.bf16.msra.mxu0 0
    %1063 = vmatprep.subr.bf16.mxu0 0
    %1064 = vmatpush1.bf16.msra.mxu0 0
    %1065 = vmatprep.subr.bf16.mxu0 0
    %1066 = vmatpush1.bf16.msra.mxu0 0
    %1067 = vmatprep.subr.bf16.mxu0 0
    %1068 = vmatpush1.bf16.msra.mxu0 0
    %1069 = vmatprep.subr.bf16.mxu0 0
    %1070 = vmatpush1.bf16.msra.mxu0 0
    %1071 = vmatprep.subr.bf16.mxu0 0
    %1072 = vmatpush1.bf16.msra.mxu0 0
    %1073 = vmatprep.subr.bf16.mxu0 0
    %1074 = vmatpush1.bf16.msra.mxu0 0
    %1075 = vmatprep.subr.bf16.mxu0 0
    %1076 = vmatpush1.bf16.msra.mxu0 0
    %1077 = vmatprep.subr.bf16.mxu0 0
    %1078 = vmatpush1.bf16.msra.mxu0 0
    %1079 = vmatprep.subr.bf16.mxu0 0
    %1080 = vmatpush1.bf16.msra.mxu0 0
    %1081 = vmatprep.subr.bf16.mxu0 0
    %1082 = vmatpush1.bf16.msra.mxu0 0
    %1083 = vmatprep.subr.bf16.mxu0 0
    %1084 = vmatpush1.bf16.msra.mxu0 0
    %1085 = vmatprep.mubr.bf16.mxu0 0
    %1086 = vmatmul.mubr.bf16.gmra.mrb[0].mxu0 %v1051
    %v1087 = vpop.f32.mrb[0].mxu0
    %v1088 = vadd.f32 0.0, %v1087
    %v1089 = vpop.f32.mrb[0].mxu0
    %v1090 = vpop.f32.mrb[0].mxu0
    %v1091 = vpop.f32.mrb[0].mxu0
    %1092 = vdwg.mxu0
    %1093 = vmatprep.subr.bf16.mxu0 0
    %1094 = vmatpush1.bf16.msra.mxu0 %v310
    %1095 = vmatprep.subr.bf16.mxu0 0
    %1096 = vmatpush1.bf16.msra.mxu0 %v311
    %1097 = vmatprep.subr.bf16.mxu0 0
    %1098 = vmatpush1.bf16.msra.mxu0 0
    %1099 = vmatprep.subr.bf16.mxu0 0
    %1100 = vmatpush1.bf16.msra.mxu0 0
    %1101 = vmatprep.subr.bf16.mxu0 0
    %1102 = vmatpush1.bf16.msra.mxu0 0
    %1103 = vmatprep.subr.bf16.mxu0 0
    %1104 = vmatpush1.bf16.msra.mxu0 0
    %1105 = vmatprep.subr.bf16.mxu0 0
    %1106 = vmatpush1.bf16.msra.mxu0 0
    %1107 = vmatprep.subr.bf16.mxu0 0
    %1108 = vmatpush1.bf16.msra.mxu0 0
    %1109 = vmatprep.subr.bf16.mxu0 0
    %1110 = vmatpush1.bf16.msra.mxu0 0
    %1111 = vmatprep.subr.bf16.mxu0 0
    %1112 = vmatpush1.bf16.msra.mxu0 0
    %1113 = vmatprep.subr.bf16.mxu0 0
    %1114 = vmatpush1.bf16.msra.mxu0 0
    %1115 = vmatprep.subr.bf16.mxu0 0
    %1116 = vmatpush1.bf16.msra.mxu0 0
    %1117 = vmatprep.subr.bf16.mxu0 0
    %1118 = vmatpush1.bf16.msra.mxu0 0
    %1119 = vmatprep.subr.bf16.mxu0 0
    %1120 = vmatpush1.bf16.msra.mxu0 0
    %1121 = vmatprep.subr.bf16.mxu0 0
    %1122 = vmatpush1.bf16.msra.mxu0 0
    %1123 = vmatprep.subr.bf16.mxu0 0
    %1124 = vmatpush1.bf16.msra.mxu0 0
    %1125 = vmatprep.mubr.bf16.mxu0 0
    %1126 = vmatmul.mubr.bf16.gmra.mrb[0].mxu0 %v1001
    %v1127 = vpop.f32.mrb[0].mxu0
    %v1128 = vadd.f32 %v1088, %v1127
    %v1129 = vpop.f32.mrb[0].mxu0
    %v1130 = vpop.f32.mrb[0].mxu0
    %v1131 = vpop.f32.mrb[0].mxu0
    %1132 = vdwg.mxu0
    %v1133 = vadd.f32 %v1128, %v301
    %v1134 = vxor.u32 %v1046, 2147483648
    %v1135 = vmul.f32 %v1134, 1.442695
    %v1136 = vpow.pop %v1135
    %v1137 = vadd.f32 %v1136, 1.0
    %v1138 = vrcp.pop %v1137
    %v1139 = vmul.f32 1.0, %v1138
    %v1140 = vmul.f32 %v1139, 2.0
    %v1141 = vsub.f32 %v1140, 1.0
    %v1143 = vrot.slane %v963, 6
    %v1145 = vmul.f32 %v1139, %v1143
    %1147 = vrot.lane.b32.xlu0 %v1141, 64
    %v1148 = vpop.permute.xlu0 %1147
    %v1150 = vmul.f32 %v1139, %v1148
    %1152 = vrot.lane.b32.xlu0 %v1150, 32
    %v1153 = vpop.permute.xlu0 %1152
    %v1155 = vadd.f32 %v1145, %v1153
    %v1156 = vtanh.pop %v1155
    %1158 = vrot.lane.b32.xlu0 %v1156, 64
    %v1159 = vpop.permute.xlu0 %1158
    %v1161 = vmul.f32 %v1139, %v1159
    %v1162 = vpack.c.bf16 %v1161, %v1161
    %v1163 = vxor.u32 %v1133, 2147483648
    %v1164 = vmul.f32 %v1163, 1.442695
    %v1165 = vpow.pop %v1164
    %v1166 = vadd.f32 %v1165, 1.0
    %v1167 = vrcp.pop %v1166
    %v1168 = vmul.f32 1.0, %v1167
    %v1169 = vmul.f32 %v1168, 2.0
    %v1170 = vsub.f32 %v1169, 1.0
    %v1171 = vmul.f32 %v1168, %v989
    %1173 = vrot.lane.b32.xlu0 %v1170, 64
    %v1174 = vpop.permute.xlu0 %1173
    %v1176 = vmul.f32 %v1168, %v1174
    %1178 = vrot.lane.b32.xlu0 %v1176, 32
    %v1179 = vpop.permute.xlu0 %1178
    %v1181 = vadd.f32 %v1171, %v1179
    %v1182 = vtanh.pop %v1181
    %1184 = vrot.lane.b32.xlu0 %v1182, 64
    %v1185 = vpop.permute.xlu0 %1184
    %v1187 = vmul.f32 %v1168, %v1185
    %v1188 = vpack.c.bf16 %v1187, %v1187
    %v1190 = vrot.slane %v1162, 1
    %1191 = vrot.lane.b32.xlu0 %v1190, 32
    %v1192 = vpop.permute.xlu0 %1191
    %v1194 = vsel %vm83, %v1192, 0
    %1196 = vmatprep.subr.bf16.mxu0 0
    %1197 = vmatpush1.bf16.msra.mxu0 %v247
    %1198 = vmatprep.subr.bf16.mxu0 0
    %1199 = vmatpush1.bf16.msra.mxu0 %v248
    %1200 = vmatprep.subr.bf16.mxu0 0
    %1201 = vmatpush1.bf16.msra.mxu0 0
    %1202 = vmatprep.subr.bf16.mxu0 0
    %1203 = vmatpush1.bf16.msra.mxu0 0
    %1204 = vmatprep.subr.bf16.mxu0 0
    %1205 = vmatpush1.bf16.msra.mxu0 0
    %1206 = vmatprep.subr.bf16.mxu0 0
    %1207 = vmatpush1.bf16.msra.mxu0 0
    %1208 = vmatprep.subr.bf16.mxu0 0
    %1209 = vmatpush1.bf16.msra.mxu0 0
    %1210 = vmatprep.subr.bf16.mxu0 0
    %1211 = vmatpush1.bf16.msra.mxu0 0
    %1212 = vmatprep.subr.bf16.mxu0 0
    %1213 = vmatpush1.bf16.msra.mxu0 0
    %1214 = vmatprep.subr.bf16.mxu0 0
    %1215 = vmatpush1.bf16.msra.mxu0 0
    %1216 = vmatprep.subr.bf16.mxu0 0
    %1217 = vmatpush1.bf16.msra.mxu0 0
    %1218 = vmatprep.subr.bf16.mxu0 0
    %1219 = vmatpush1.bf16.msra.mxu0 0
    %1220 = vmatprep.subr.bf16.mxu0 0
    %1221 = vmatpush1.bf16.msra.mxu0 0
    %1222 = vmatprep.subr.bf16.mxu0 0
    %1223 = vmatpush1.bf16.msra.mxu0 0
    %1224 = vmatprep.subr.bf16.mxu0 0
    %1225 = vmatpush1.bf16.msra.mxu0 0
    %1226 = vmatprep.subr.bf16.mxu0 0
    %1227 = vmatpush1.bf16.msra.mxu0 0
    %1228 = vmatprep.mubr.bf16.mxu0 0
    %1229 = vmatmul.mubr.bf16.gmra.mrb[0].mxu0 %v1194
    %v1230 = vpop.f32.mrb[0].mxu0
    %v1231 = vadd.f32 0.0, %v1230
    %v1232 = vpop.f32.mrb[0].mxu0
    %v1233 = vpop.f32.mrb[0].mxu0
    %v1234 = vpop.f32.mrb[0].mxu0
    %1235 = vdwg.mxu0
    %v1237 = vrot.slane %v1231, 4
    %v1239 = vadd.f32 %v125, %v1237
    %1241 = vrot.lane.b32.xlu0 %v1188, 32
    %v1242 = vpop.permute.xlu0 %1241
    %v1244 = vsel %vm83, %v1242, 0
    %1246 = vmatprep.subr.bf16.mxu0 0
    %1247 = vmatpush1.bf16.msra.mxu0 %v471
    %1248 = vmatprep.subr.bf16.mxu0 0
    %1249 = vmatpush1.bf16.msra.mxu0 %v472
    %1250 = vmatprep.subr.bf16.mxu0 0
    %1251 = vmatpush1.bf16.msra.mxu0 0
    %1252 = vmatprep.subr.bf16.mxu0 0
    %1253 = vmatpush1.bf16.msra.mxu0 0
    %1254 = vmatprep.subr.bf16.mxu0 0
    %1255 = vmatpush1.bf16.msra.mxu0 0
    %1256 = vmatprep.subr.bf16.mxu0 0
    %1257 = vmatpush1.bf16.msra.mxu0 0
    %1258 = vmatprep.subr.bf16.mxu0 0
    %1259 = vmatpush1.bf16.msra.mxu0 0
    %1260 = vmatprep.subr.bf16.mxu0 0
    %1261 = vmatpush1.bf16.msra.mxu0 0
    %1262 = vmatprep.subr.bf16.mxu0 0
    %1263 = vmatpush1.bf16.msra.mxu0 0
    %1264 = vmatprep.subr.bf16.mxu0 0
    %1265 = vmatpush1.bf16.msra.mxu0 0
    %1266 = vmatprep.subr.bf16.mxu0 0
    %1267 = vmatpush1.bf16.msra.mxu0 0
    %1268 = vmatprep.subr.bf16.mxu0 0
    %1269 = vmatpush1.bf16.msra.mxu0 0
    %1270 = vmatprep.subr.bf16.mxu0 0
    %1271 = vmatpush1.bf16.msra.mxu0 0
    %1272 = vmatprep.subr.bf16.mxu0 0
    %1273 = vmatpush1.bf16.msra.mxu0 0
    %1274 = vmatprep.subr.bf16.mxu0 0
    %1275 = vmatpush1.bf16.msra.mxu0 0
    %1276 = vmatprep.subr.bf16.mxu0 0
    %1277 = vmatpush1.bf16.msra.mxu0 0
    %1278 = vmatprep.mubr.bf16.mxu0 0
    %1279 = vmatmul.mubr.bf16.gmra.mrb[0].mxu0 %v1244
    %v1280 = vpop.f32.mrb[0].mxu0
    %v1281 = vadd.f32 0.0, %v1280
    %v1282 = vpop.f32.mrb[0].mxu0
    %v1283 = vpop.f32.mrb[0].mxu0
    %v1284 = vpop.f32.mrb[0].mxu0
    %1285 = vdwg.mxu0
    %1286 = vmatprep.subr.bf16.mxu0 0
    %1287 = vmatpush1.bf16.msra.mxu0 %v310
    %1288 = vmatprep.subr.bf16.mxu0 0
    %1289 = vmatpush1.bf16.msra.mxu0 %v311
    %1290 = vmatprep.subr.bf16.mxu0 0
    %1291 = vmatpush1.bf16.msra.mxu0 0
    %1292 = vmatprep.subr.bf16.mxu0 0
    %1293 = vmatpush1.bf16.msra.mxu0 0
    %1294 = vmatprep.subr.bf16.mxu0 0
    %1295 = vmatpush1.bf16.msra.mxu0 0
    %1296 = vmatprep.subr.bf16.mxu0 0
    %1297 = vmatpush1.bf16.msra.mxu0 0
    %1298 = vmatprep.subr.bf16.mxu0 0
    %1299 = vmatpush1.bf16.msra.mxu0 0
    %1300 = vmatprep.subr.bf16.mxu0 0
    %1301 = vmatpush1.bf16.msra.mxu0 0
    %1302 = vmatprep.subr.bf16.mxu0 0
    %1303 = vmatpush1.bf16.msra.mxu0 0
    %1304 = vmatprep.subr.bf16.mxu0 0
    %1305 = vmatpush1.bf16.msra.mxu0 0
    %1306 = vmatprep.subr.bf16.mxu0 0
    %1307 = vmatpush1.bf16.msra.mxu0 0
    %1308 = vmatprep.subr.bf16.mxu0 0
    %1309 = vmatpush1.bf16.msra.mxu0 0
    %1310 = vmatprep.subr.bf16.mxu0 0
    %1311 = vmatpush1.bf16.msra.mxu0 0
    %1312 = vmatprep.subr.bf16.mxu0 0
    %1313 = vmatpush1.bf16.msra.mxu0 0
    %1314 = vmatprep.subr.bf16.mxu0 0
    %1315 = vmatpush1.bf16.msra.mxu0 0
    %1316 = vmatprep.subr.bf16.mxu0 0
    %1317 = vmatpush1.bf16.msra.mxu0 0
    %1318 = vmatprep.mubr.bf16.mxu0 0
    %1319 = vmatmul.mubr.bf16.gmra.mrb[0].mxu0 %v1194
    %v1320 = vpop.f32.mrb[0].mxu0
    %v1321 = vadd.f32 %v1281, %v1320
    %v1322 = vpop.f32.mrb[0].mxu0
    %v1323 = vpop.f32.mrb[0].mxu0
    %v1324 = vpop.f32.mrb[0].mxu0
    %1325 = vdwg.mxu0
    %v1326 = vadd.f32 %v1321, %v301
    %v1327 = vxor.u32 %v1239, 2147483648
    %v1328 = vmul.f32 %v1327, 1.442695
    %v1329 = vpow.pop %v1328
    %v1330 = vadd.f32 %v1329, 1.0
    %v1331 = vrcp.pop %v1330
    %v1332 = vmul.f32 1.0, %v1331
    %v1333 = vmul.f32 %v1332, 2.0
    %v1334 = vsub.f32 %v1333, 1.0
    %v1336 = vrot.slane %v1155, 6
    %v1338 = vmul.f32 %v1332, %v1336
    %1340 = vrot.lane.b32.xlu0 %v1334, 64
    %v1341 = vpop.permute.xlu0 %1340
    %v1343 = vmul.f32 %v1332, %v1341
    %1345 = vrot.lane.b32.xlu0 %v1343, 32
    %v1346 = vpop.permute.xlu0 %1345
    %v1348 = vadd.f32 %v1338, %v1346
    %v1349 = vtanh.pop %v1348
    %1351 = vrot.lane.b32.xlu0 %v1349, 64
    %v1352 = vpop.permute.xlu0 %1351
    %v1354 = vmul.f32 %v1332, %v1352
    %v1355 = vpack.c.bf16 %v1354, %v1354
    %v1356 = vxor.u32 %v1326, 2147483648
    %v1357 = vmul.f32 %v1356, 1.442695
    %v1358 = vpow.pop %v1357
    %v1359 = vadd.f32 %v1358, 1.0
    %v1360 = vrcp.pop %v1359
    %v1361 = vmul.f32 1.0, %v1360
    %v1362 = vmul.f32 %v1361, 2.0
    %v1363 = vsub.f32 %v1362, 1.0
    %v1364 = vmul.f32 %v1361, %v1181
    %1366 = vrot.lane.b32.xlu0 %v1363, 64
    %v1367 = vpop.permute.xlu0 %1366
    %v1369 = vmul.f32 %v1361, %v1367
    %1371 = vrot.lane.b32.xlu0 %v1369, 32
    %v1372 = vpop.permute.xlu0 %1371
    %v1374 = vadd.f32 %v1364, %v1372
    %v1375 = vtanh.pop %v1374
    %1377 = vrot.lane.b32.xlu0 %v1375, 64
    %v1378 = vpop.permute.xlu0 %1377
    %v1380 = vmul.f32 %v1361, %v1378
    %v1381 = vpack.c.bf16 %v1380, %v1380
    %v1383 = vrot.slane %v1355, 2
    %1384 = vrot.lane.b32.xlu0 %v1383, 32
    %v1385 = vpop.permute.xlu0 %1384
    %v1387 = vsel %vm83, %v1385, 0
    %1389 = vmatprep.subr.bf16.mxu0 0
    %1390 = vmatpush1.bf16.msra.mxu0 %v247
    %1391 = vmatprep.subr.bf16.mxu0 0
    %1392 = vmatpush1.bf16.msra.mxu0 %v248
    %1393 = vmatprep.subr.bf16.mxu0 0
    %1394 = vmatpush1.bf16.msra.mxu0 0
    %1395 = vmatprep.subr.bf16.mxu0 0
    %1396 = vmatpush1.bf16.msra.mxu0 0
    %1397 = vmatprep.subr.bf16.mxu0 0
    %1398 = vmatpush1.bf16.msra.mxu0 0
    %1399 = vmatprep.subr.bf16.mxu0 0
    %1400 = vmatpush1.bf16.msra.mxu0 0
    %1401 = vmatprep.subr.bf16.mxu0 0
    %1402 = vmatpush1.bf16.msra.mxu0 0
    %1403 = vmatprep.subr.bf16.mxu0 0
    %1404 = vmatpush1.bf16.msra.mxu0 0
    %1405 = vmatprep.subr.bf16.mxu0 0
    %1406 = vmatpush1.bf16.msra.mxu0 0
    %1407 = vmatprep.subr.bf16.mxu0 0
    %1408 = vmatpush1.bf16.msra.mxu0 0
    %1409 = vmatprep.subr.bf16.mxu0 0
    %1410 = vmatpush1.bf16.msra.mxu0 0
    %1411 = vmatprep.subr.bf16.mxu0 0
    %1412 = vmatpush1.bf16.msra.mxu0 0
    %1413 = vmatprep.subr.bf16.mxu0 0
    %1414 = vmatpush1.bf16.msra.mxu0 0
    %1415 = vmatprep.subr.bf16.mxu0 0
    %1416 = vmatpush1.bf16.msra.mxu0 0
    %1417 = vmatprep.subr.bf16.mxu0 0
    %1418 = vmatpush1.bf16.msra.mxu0 0
    %1419 = vmatprep.subr.bf16.mxu0 0
    %1420 = vmatpush1.bf16.msra.mxu0 0
    %1421 = vmatprep.mubr.bf16.mxu0 0
    %1422 = vmatmul.mubr.bf16.gmra.mrb[0].mxu0 %v1387
    %v1423 = vpop.f32.mrb[0].mxu0
    %v1424 = vadd.f32 0.0, %v1423
    %v1425 = vpop.f32.mrb[0].mxu0
    %v1426 = vpop.f32.mrb[0].mxu0
    %v1427 = vpop.f32.mrb[0].mxu0
    %1428 = vdwg.mxu0
    %v1430 = vrot.slane %v1424, 2
    %v1432 = vadd.f32 %v125, %v1430
    %1434 = vrot.lane.b32.xlu0 %v1381, 32
    %v1435 = vpop.permute.xlu0 %1434
    %v1437 = vsel %vm83, %v1435, 0
    %1439 = vmatprep.subr.bf16.mxu0 0
    %1440 = vmatpush1.bf16.msra.mxu0 %v471
    %1441 = vmatprep.subr.bf16.mxu0 0
    %1442 = vmatpush1.bf16.msra.mxu0 %v472
    %1443 = vmatprep.subr.bf16.mxu0 0
    %1444 = vmatpush1.bf16.msra.mxu0 0
    %1445 = vmatprep.subr.bf16.mxu0 0
    %1446 = vmatpush1.bf16.msra.mxu0 0
    %1447 = vmatprep.subr.bf16.mxu0 0
    %1448 = vmatpush1.bf16.msra.mxu0 0
    %1449 = vmatprep.subr.bf16.mxu0 0
    %1450 = vmatpush1.bf16.msra.mxu0 0
    %1451 = vmatprep.subr.bf16.mxu0 0
    %1452 = vmatpush1.bf16.msra.mxu0 0
    %1453 = vmatprep.subr.bf16.mxu0 0
    %1454 = vmatpush1.bf16.msra.mxu0 0
    %1455 = vmatprep.subr.bf16.mxu0 0
    %1456 = vmatpush1.bf16.msra.mxu0 0
    %1457 = vmatprep.subr.bf16.mxu0 0
    %1458 = vmatpush1.bf16.msra.mxu0 0
    %1459 = vmatprep.subr.bf16.mxu0 0
    %1460 = vmatpush1.bf16.msra.mxu0 0
    %1461 = vmatprep.subr.bf16.mxu0 0
    %1462 = vmatpush1.bf16.msra.mxu0 0
    %1463 = vmatprep.subr.bf16.mxu0 0
    %1464 = vmatpush1.bf16.msra.mxu0 0
    %1465 = vmatprep.subr.bf16.mxu0 0
    %1466 = vmatpush1.bf16.msra.mxu0 0
    %1467 = vmatprep.subr.bf16.mxu0 0
    %1468 = vmatpush1.bf16.msra.mxu0 0
    %1469 = vmatprep.subr.bf16.mxu0 0
    %1470 = vmatpush1.bf16.msra.mxu0 0
    %1471 = vmatprep.mubr.bf16.mxu0 0
    %1472 = vmatmul.mubr.bf16.gmra.mrb[0].mxu0 %v1437
    %v1473 = vpop.f32.mrb[0].mxu0
    %v1474 = vadd.f32 0.0, %v1473
    %v1475 = vpop.f32.mrb[0].mxu0
    %v1476 = vpop.f32.mrb[0].mxu0
    %v1477 = vpop.f32.mrb[0].mxu0
    %1478 = vdwg.mxu0
    %1479 = vmatprep.subr.bf16.mxu0 0
    %1480 = vmatpush1.bf16.msra.mxu0 %v310
    %1481 = vmatprep.subr.bf16.mxu0 0
    %1482 = vmatpush1.bf16.msra.mxu0 %v311
    %1483 = vmatprep.subr.bf16.mxu0 0
    %1484 = vmatpush1.bf16.msra.mxu0 0
    %1485 = vmatprep.subr.bf16.mxu0 0
    %1486 = vmatpush1.bf16.msra.mxu0 0
    %1487 = vmatprep.subr.bf16.mxu0 0
    %1488 = vmatpush1.bf16.msra.mxu0 0
    %1489 = vmatprep.subr.bf16.mxu0 0
    %1490 = vmatpush1.bf16.msra.mxu0 0
    %1491 = vmatprep.subr.bf16.mxu0 0
    %1492 = vmatpush1.bf16.msra.mxu0 0
    %1493 = vmatprep.subr.bf16.mxu0 0
    %1494 = vmatpush1.bf16.msra.mxu0 0
    %1495 = vmatprep.subr.bf16.mxu0 0
    %1496 = vmatpush1.bf16.msra.mxu0 0
    %1497 = vmatprep.subr.bf16.mxu0 0
    %1498 = vmatpush1.bf16.msra.mxu0 0
    %1499 = vmatprep.subr.bf16.mxu0 0
    %1500 = vmatpush1.bf16.msra.mxu0 0
    %1501 = vmatprep.subr.bf16.mxu0 0
    %1502 = vmatpush1.bf16.msra.mxu0 0
    %1503 = vmatprep.subr.bf16.mxu0 0
    %1504 = vmatpush1.bf16.msra.mxu0 0
    %1505 = vmatprep.subr.bf16.mxu0 0
    %1506 = vmatpush1.bf16.msra.mxu0 0
    %1507 = vmatprep.subr.bf16.mxu0 0
    %1508 = vmatpush1.bf16.msra.mxu0 0
    %1509 = vmatprep.subr.bf16.mxu0 0
    %1510 = vmatpush1.bf16.msra.mxu0 0
    %1511 = vmatprep.mubr.bf16.mxu0 0
    %1512 = vmatmul.mubr.bf16.gmra.mrb[0].mxu0 %v1387
    %v1513 = vpop.f32.mrb[0].mxu0
    %v1514 = vadd.f32 %v1474, %v1513
    %v1515 = vpop.f32.mrb[0].mxu0
    %v1516 = vpop.f32.mrb[0].mxu0
    %v1517 = vpop.f32.mrb[0].mxu0
    %1518 = vdwg.mxu0
    %v1519 = vadd.f32 %v1514, %v301
    %v1520 = vxor.u32 %v1432, 2147483648
    %v1521 = vmul.f32 %v1520, 1.442695
    %v1522 = vpow.pop %v1521
    %v1523 = vadd.f32 %v1522, 1.0
    %v1524 = vrcp.pop %v1523
    %v1525 = vmul.f32 1.0, %v1524
    %v1526 = vmul.f32 %v1525, 2.0
    %v1527 = vsub.f32 %v1526, 1.0
    %v1529 = vrot.slane %v1348, 6
    %v1531 = vmul.f32 %v1525, %v1529
    %1533 = vrot.lane.b32.xlu0 %v1527, 64
    %v1534 = vpop.permute.xlu0 %1533
    %v1536 = vmul.f32 %v1525, %v1534
    %1538 = vrot.lane.b32.xlu0 %v1536, 32
    %v1539 = vpop.permute.xlu0 %1538
    %v1541 = vadd.f32 %v1531, %v1539
    %v1542 = vtanh.pop %v1541
    %1544 = vrot.lane.b32.xlu0 %v1542, 64
    %v1545 = vpop.permute.xlu0 %1544
    %v1547 = vmul.f32 %v1525, %v1545
    %v1548 = vpack.c.bf16 %v1547, %v1547
    %v1549 = vxor.u32 %v1519, 2147483648
    %v1550 = vmul.f32 %v1549, 1.442695
    %v1551 = vpow.pop %v1550
    %v1552 = vadd.f32 %v1551, 1.0
    %v1553 = vrcp.pop %v1552
    %v1554 = vmul.f32 1.0, %v1553
    %v1555 = vmul.f32 %v1554, 2.0
    %v1556 = vsub.f32 %v1555, 1.0
    %v1557 = vmul.f32 %v1554, %v1374
    %1559 = vrot.lane.b32.xlu0 %v1556, 64
    %v1560 = vpop.permute.xlu0 %1559
    %v1562 = vmul.f32 %v1554, %v1560
    %1564 = vrot.lane.b32.xlu0 %v1562, 32
    %v1565 = vpop.permute.xlu0 %1564
    %v1567 = vadd.f32 %v1557, %v1565
    %v1568 = vtanh.pop %v1567
    %1570 = vrot.lane.b32.xlu0 %v1568, 64
    %v1571 = vpop.permute.xlu0 %1570
    %v1573 = vmul.f32 %v1554, %v1571
    %v1574 = vpack.c.bf16 %v1573, %v1573
    %1576 = vrot.lane.b32.xlu0 %v1574, 32
    %v1577 = vpop.permute.xlu0 %1576
    %v1579 = vsel %vm83, %v1577, 0
    %1581 = vmatprep.subr.bf16.mxu0 0
    %1582 = vmatpush1.bf16.msra.mxu0 %v471
    %1583 = vmatprep.subr.bf16.mxu0 0
    %1584 = vmatpush1.bf16.msra.mxu0 %v472
    %1585 = vmatprep.subr.bf16.mxu0 0
    %1586 = vmatpush1.bf16.msra.mxu0 0
    %1587 = vmatprep.subr.bf16.mxu0 0
    %1588 = vmatpush1.bf16.msra.mxu0 0
    %1589 = vmatprep.subr.bf16.mxu0 0
    %1590 = vmatpush1.bf16.msra.mxu0 0
    %1591 = vmatprep.subr.bf16.mxu0 0
    %1592 = vmatpush1.bf16.msra.mxu0 0
    %1593 = vmatprep.subr.bf16.mxu0 0
    %1594 = vmatpush1.bf16.msra.mxu0 0
    %1595 = vmatprep.subr.bf16.mxu0 0
    %1596 = vmatpush1.bf16.msra.mxu0 0
    %1597 = vmatprep.subr.bf16.mxu0 0
    %1598 = vmatpush1.bf16.msra.mxu0 0
    %1599 = vmatprep.subr.bf16.mxu0 0
    %1600 = vmatpush1.bf16.msra.mxu0 0
    %1601 = vmatprep.subr.bf16.mxu0 0
    %1602 = vmatpush1.bf16.msra.mxu0 0
    %1603 = vmatprep.subr.bf16.mxu0 0
    %1604 = vmatpush1.bf16.msra.mxu0 0
    %1605 = vmatprep.subr.bf16.mxu0 0
    %1606 = vmatpush1.bf16.msra.mxu0 0
    %1607 = vmatprep.subr.bf16.mxu0 0
    %1608 = vmatpush1.bf16.msra.mxu0 0
    %1609 = vmatprep.subr.bf16.mxu0 0
    %1610 = vmatpush1.bf16.msra.mxu0 0
    %1611 = vmatprep.subr.bf16.mxu0 0
    %1612 = vmatpush1.bf16.msra.mxu0 0
    %1613 = vmatprep.mubr.bf16.mxu0 0
    %1614 = vmatmul.mubr.bf16.gmra.mrb[0].mxu0 %v1579
    %v1615 = vpop.f32.mrb[0].mxu0
    %v1616 = vadd.f32 0.0, %v1615
    %v1617 = vpop.f32.mrb[0].mxu0
    %v1618 = vpop.f32.mrb[0].mxu0
    %v1619 = vpop.f32.mrb[0].mxu0
    %1620 = vdwg.mxu0
    %v1622 = vrot.slane %v1548, 3
    %1623 = vrot.lane.b32.xlu0 %v1622, 32
    %v1624 = vpop.permute.xlu0 %1623
    %v1626 = vsel %vm83, %v1624, 0
    %1628 = vmatprep.subr.bf16.mxu0 0
    %1629 = vmatpush1.bf16.msra.mxu0 %v310
    %1630 = vmatprep.subr.bf16.mxu0 0
    %1631 = vmatpush1.bf16.msra.mxu0 %v311
    %1632 = vmatprep.subr.bf16.mxu0 0
    %1633 = vmatpush1.bf16.msra.mxu0 0
    %1634 = vmatprep.subr.bf16.mxu0 0
    %1635 = vmatpush1.bf16.msra.mxu0 0
    %1636 = vmatprep.subr.bf16.mxu0 0
    %1637 = vmatpush1.bf16.msra.mxu0 0
    %1638 = vmatprep.subr.bf16.mxu0 0
    %1639 = vmatpush1.bf16.msra.mxu0 0
    %1640 = vmatprep.subr.bf16.mxu0 0
    %1641 = vmatpush1.bf16.msra.mxu0 0
    %1642 = vmatprep.subr.bf16.mxu0 0
    %1643 = vmatpush1.bf16.msra.mxu0 0
    %1644 = vmatprep.subr.bf16.mxu0 0
    %1645 = vmatpush1.bf16.msra.mxu0 0
    %1646 = vmatprep.subr.bf16.mxu0 0
    %1647 = vmatpush1.bf16.msra.mxu0 0
    %1648 = vmatprep.subr.bf16.mxu0 0
    %1649 = vmatpush1.bf16.msra.mxu0 0
    %1650 = vmatprep.subr.bf16.mxu0 0
    %1651 = vmatpush1.bf16.msra.mxu0 0
    %1652 = vmatprep.subr.bf16.mxu0 0
    %1653 = vmatpush1.bf16.msra.mxu0 0
    %1654 = vmatprep.subr.bf16.mxu0 0
    %1655 = vmatpush1.bf16.msra.mxu0 0
    %1656 = vmatprep.subr.bf16.mxu0 0
    %1657 = vmatpush1.bf16.msra.mxu0 0
    %1658 = vmatprep.subr.bf16.mxu0 0
    %1659 = vmatpush1.bf16.msra.mxu0 0
    %1660 = vmatprep.mubr.bf16.mxu0 0
    %1661 = vmatmul.mubr.bf16.gmra.mrb[0].mxu0 %v1626
    %v1662 = vpop.f32.mrb[0].mxu0
    %v1663 = vadd.f32 %v1616, %v1662
    %v1664 = vpop.f32.mrb[0].mxu0
    %v1665 = vpop.f32.mrb[0].mxu0
    %v1666 = vpop.f32.mrb[0].mxu0
    %1667 = vdwg.mxu0
    %v1668 = vadd.f32 %v1663, %v301
    %v1669 = vxor.u32 %v1668, 2147483648
    %v1670 = vmul.f32 %v1669, 1.442695
    %v1671 = vpow.pop %v1670
    %v1672 = vadd.f32 %v1671, 1.0
    %v1673 = vrcp.pop %v1672
    %v1674 = vmul.f32 1.0, %v1673
    %v1675 = vmul.f32 %v1674, 2.0
    %v1676 = vsub.f32 %v1675, 1.0
    %v1677 = vmul.f32 %v1674, %v1567
    %1679 = vrot.lane.b32.xlu0 %v1676, 64
    %v1680 = vpop.permute.xlu0 %1679
    %v1682 = vmul.f32 %v1674, %v1680
    %1684 = vrot.lane.b32.xlu0 %v1682, 32
    %v1685 = vpop.permute.xlu0 %1684
    %v1687 = vadd.f32 %v1677, %v1685
    %v1688 = vtanh.pop %v1687
    %1690 = vrot.lane.b32.xlu0 %v1688, 64
    %v1691 = vpop.permute.xlu0 %1690
    %v1693 = vmul.f32 %v1674, %v1691
    %v1694 = vpack.c.bf16 %v1693, %v1693
    %s1695 = scalar_lea.vmem [#allocation5], 64
    %v1696 = vld [vmem:[%s1695] sm:$0xf]
    %v1697 = vld [vmem:[%s1695 + $0x4] sm:$0xf]
    %v1698 = vld [vmem:[%s1695 + $0x8] sm:$0xf]
    %v1699 = vld [vmem:[%s1695 + $0xc] sm:$0xf]
    %s1700 = scalar_lea.vmem [#allocation5], 96
    %v1701 = vld [vmem:[%s1700] sm:$0xf]
    %v1702 = vld [vmem:[%s1700 + $0x4] sm:$0xf]
    %v1703 = vld [vmem:[%s1700 + $0x8] sm:$0xf]
    %v1704 = vld [vmem:[%s1700 + $0xc] sm:$0xf]
    %s1705 = scalar_lea.vmem [#allocation5], 112
    %v1706 = vld [vmem:[%s1705] sm:$0xf]
    %v1707 = vld [vmem:[%s1705 + $0x4] sm:$0xf]
    %v1708 = vld [vmem:[%s1705 + $0x8] sm:$0xf]
    %v1709 = vld [vmem:[%s1705 + $0xc] sm:$0xf]
    %s1710 = scalar_lea.vmem [#allocation5], 128
    %v1711 = vld [vmem:[%s1710] sm:$0xf]
    %v1712 = vld [vmem:[%s1710 + $0x4] sm:$0xf]
    %v1713 = vld [vmem:[%s1710 + $0x8] sm:$0xf]
    %v1714 = vld [vmem:[%s1710 + $0xc] sm:$0xf]
    %v1715 = vld [vmem:[#allocation7 + $0x3] sm:$0x1]
    %v1716 = vld [vmem:[#allocation7 + $0x4] sm:$0x1]
    %v1721 = vunpack.c.l.b16 %v1696
    %v1722 = vunpack.c.l.b16 %v1697
    %v1723 = vunpack.c.l.b16 %v1698
    %v1724 = vunpack.c.l.b16 %v1699
    %v1725 = vpack.c.b16 %v1722, %v1721
    %v1726 = vpack.c.b16 %v1724, %v1723
    %1729 = vmatprep.subr.bf16.mxu0 0
    %1730 = vmatpush1.bf16.msra.mxu0 %v1725
    %1731 = vmatprep.subr.bf16.mxu0 0
    %1732 = vmatpush1.bf16.msra.mxu0 %v1726
    %1733 = vmatprep.subr.bf16.mxu0 0
    %1734 = vmatpush1.bf16.msra.mxu0 0
    %1735 = vmatprep.subr.bf16.mxu0 0
    %1736 = vmatpush1.bf16.msra.mxu0 0
    %1737 = vmatprep.subr.bf16.mxu0 0
    %1738 = vmatpush1.bf16.msra.mxu0 0
    %1739 = vmatprep.subr.bf16.mxu0 0
    %1740 = vmatpush1.bf16.msra.mxu0 0
    %1741 = vmatprep.subr.bf16.mxu0 0
    %1742 = vmatpush1.bf16.msra.mxu0 0
    %1743 = vmatprep.subr.bf16.mxu0 0
    %1744 = vmatpush1.bf16.msra.mxu0 0
    %1745 = vmatprep.subr.bf16.mxu0 0
    %1746 = vmatpush1.bf16.msra.mxu0 0
    %1747 = vmatprep.subr.bf16.mxu0 0
    %1748 = vmatpush1.bf16.msra.mxu0 0
    %1749 = vmatprep.subr.bf16.mxu0 0
    %1750 = vmatpush1.bf16.msra.mxu0 0
    %1751 = vmatprep.subr.bf16.mxu0 0
    %1752 = vmatpush1.bf16.msra.mxu0 0
    %1753 = vmatprep.subr.bf16.mxu0 0
    %1754 = vmatpush1.bf16.msra.mxu0 0
    %1755 = vmatprep.subr.bf16.mxu0 0
    %1756 = vmatpush1.bf16.msra.mxu0 0
    %1757 = vmatprep.subr.bf16.mxu0 0
    %1758 = vmatpush1.bf16.msra.mxu0 0
    %1759 = vmatprep.subr.bf16.mxu0 0
    %1760 = vmatpush1.bf16.msra.mxu0 0
    %1761 = vmatprep.mubr.bf16.mxu0 0
    %1762 = vmatmul.mubr.bf16.gmra.mrb[0].mxu0 %v1626
    %v1763 = vpop.f32.mrb[0].mxu0
    %v1764 = vadd.f32 0.0, %v1763
    %v1765 = vpop.f32.mrb[0].mxu0
    %v1766 = vpop.f32.mrb[0].mxu0
    %v1767 = vpop.f32.mrb[0].mxu0
    %1768 = vdwg.mxu0
    %v1769 = vadd.f32 %v189, %v1764
    %v1770 = vxor.u32 %v1769, 2147483648
    %v1771 = vmul.f32 %v1770, 1.442695
    %v1772 = vpow.pop %v1771
    %v1773 = vadd.f32 %v1772, 1.0
    %v1774 = vrcp.pop %v1773
    %v1775 = vmul.f32 1.0, %v1774
    %v1776 = vmul.f32 %v1775, 2.0
    %v1777 = vsub.f32 %v1776, 1.0
    %v1779 = vrot.slane %v1541, 6
    %v1781 = vmul.f32 %v1775, %v1779
    %1783 = vrot.lane.b32.xlu0 %v1777, 64
    %v1784 = vpop.permute.xlu0 %1783
    %v1786 = vmul.f32 %v1775, %v1784
    %1788 = vrot.lane.b32.xlu0 %v1786, 32
    %v1789 = vpop.permute.xlu0 %1788
    %v1791 = vadd.f32 %v1781, %v1789
    %v1792 = vtanh.pop %v1791
    %1794 = vrot.lane.b32.xlu0 %v1792, 64
    %v1795 = vpop.permute.xlu0 %1794
    %v1797 = vmul.f32 %v1775, %v1795
    %v1798 = vpack.c.bf16 %v1797, %v1797
    %1800 = vrot.lane.b32.xlu0 %v1694, 32
    %v1801 = vpop.permute.xlu0 %1800
    %v1806 = vunpack.c.l.b16 %v1711
    %v1807 = vunpack.c.l.b16 %v1712
    %v1808 = vunpack.c.l.b16 %v1713
    %v1809 = vunpack.c.l.b16 %v1714
    %v1810 = vpack.c.b16 %v1807, %v1806
    %v1811 = vpack.c.b16 %v1809, %v1808
    %v1815 = vsel %vm83, %v1801, 0
    %1817 = vmatprep.subr.bf16.mxu0 0
    %1818 = vmatpush1.bf16.msra.mxu0 %v1810
    %1819 = vmatprep.subr.bf16.mxu0 0
    %1820 = vmatpush1.bf16.msra.mxu0 %v1811
    %1821 = vmatprep.subr.bf16.mxu0 0
    %1822 = vmatpush1.bf16.msra.mxu0 0
    %1823 = vmatprep.subr.bf16.mxu0 0
    %1824 = vmatpush1.bf16.msra.mxu0 0
    %1825 = vmatprep.subr.bf16.mxu0 0
    %1826 = vmatpush1.bf16.msra.mxu0 0
    %1827 = vmatprep.subr.bf16.mxu0 0
    %1828 = vmatpush1.bf16.msra.mxu0 0
    %1829 = vmatprep.subr.bf16.mxu0 0
    %1830 = vmatpush1.bf16.msra.mxu0 0
    %1831 = vmatprep.subr.bf16.mxu0 0
    %1832 = vmatpush1.bf16.msra.mxu0 0
    %1833 = vmatprep.subr.bf16.mxu0 0
    %1834 = vmatpush1.bf16.msra.mxu0 0
    %1835 = vmatprep.subr.bf16.mxu0 0
    %1836 = vmatpush1.bf16.msra.mxu0 0
    %1837 = vmatprep.subr.bf16.mxu0 0
    %1838 = vmatpush1.bf16.msra.mxu0 0
    %1839 = vmatprep.subr.bf16.mxu0 0
    %1840 = vmatpush1.bf16.msra.mxu0 0
    %1841 = vmatprep.subr.bf16.mxu0 0
    %1842 = vmatpush1.bf16.msra.mxu0 0
    %1843 = vmatprep.subr.bf16.mxu0 0
    %1844 = vmatpush1.bf16.msra.mxu0 0
    %1845 = vmatprep.subr.bf16.mxu0 0
    %1846 = vmatpush1.bf16.msra.mxu0 0
    %1847 = vmatprep.subr.bf16.mxu0 0
    %1848 = vmatpush1.bf16.msra.mxu0 0
    %1849 = vmatprep.mubr.bf16.mxu0 0
    %1850 = vmatmul.mubr.bf16.gmra.mrb[0].mxu0 %v1815
    %v1851 = vpop.f32.mrb[0].mxu0
    %v1852 = vadd.f32 0.0, %v1851
    %v1853 = vpop.f32.mrb[0].mxu0
    %v1854 = vpop.f32.mrb[0].mxu0
    %v1855 = vpop.f32.mrb[0].mxu0
    %1856 = vdwg.mxu0
    %1858 = vrot.lane.b32.xlu0 %v1798, 32
    %v1859 = vpop.permute.xlu0 %1858
    %v1864 = vunpack.c.l.b16 %v1706
    %v1865 = vunpack.c.l.b16 %v1707
    %v1866 = vunpack.c.l.b16 %v1708
    %v1867 = vunpack.c.l.b16 %v1709
    %v1868 = vpack.c.b16 %v1865, %v1864
    %v1869 = vpack.c.b16 %v1867, %v1866
    %v1873 = vsel %vm83, %v1859, 0
    %1875 = vmatprep.subr.bf16.mxu0 0
    %1876 = vmatpush1.bf16.msra.mxu0 %v1868
    %1877 = vmatprep.subr.bf16.mxu0 0
    %1878 = vmatpush1.bf16.msra.mxu0 %v1869
    %1879 = vmatprep.subr.bf16.mxu0 0
    %1880 = vmatpush1.bf16.msra.mxu0 0
    %1881 = vmatprep.subr.bf16.mxu0 0
    %1882 = vmatpush1.bf16.msra.mxu0 0
    %1883 = vmatprep.subr.bf16.mxu0 0
    %1884 = vmatpush1.bf16.msra.mxu0 0
    %1885 = vmatprep.subr.bf16.mxu0 0
    %1886 = vmatpush1.bf16.msra.mxu0 0
    %1887 = vmatprep.subr.bf16.mxu0 0
    %1888 = vmatpush1.bf16.msra.mxu0 0
    %1889 = vmatprep.subr.bf16.mxu0 0
    %1890 = vmatpush1.bf16.msra.mxu0 0
    %1891 = vmatprep.subr.bf16.mxu0 0
    %1892 = vmatpush1.bf16.msra.mxu0 0
    %1893 = vmatprep.subr.bf16.mxu0 0
    %1894 = vmatpush1.bf16.msra.mxu0 0
    %1895 = vmatprep.subr.bf16.mxu0 0
    %1896 = vmatpush1.bf16.msra.mxu0 0
    %1897 = vmatprep.subr.bf16.mxu0 0
    %1898 = vmatpush1.bf16.msra.mxu0 0
    %1899 = vmatprep.subr.bf16.mxu0 0
    %1900 = vmatpush1.bf16.msra.mxu0 0
    %1901 = vmatprep.subr.bf16.mxu0 0
    %1902 = vmatpush1.bf16.msra.mxu0 0
    %1903 = vmatprep.subr.bf16.mxu0 0
    %1904 = vmatpush1.bf16.msra.mxu0 0
    %1905 = vmatprep.subr.bf16.mxu0 0
    %1906 = vmatpush1.bf16.msra.mxu0 0
    %1907 = vmatprep.mubr.bf16.mxu0 0
    %1908 = vmatmul.mubr.bf16.gmra.mrb[0].mxu0 %v1873
    %v1909 = vpop.f32.mrb[0].mxu0
    %v1910 = vadd.f32 %v1852, %v1909
    %v1911 = vpop.f32.mrb[0].mxu0
    %v1912 = vpop.f32.mrb[0].mxu0
    %v1913 = vpop.f32.mrb[0].mxu0
    %1914 = vdwg.mxu0
    %v1915 = vlaneseq
    %v1916 = vshrl.u32 %v1915, 7
    %v1917 = vsub.s32 0, %v1916
    %v1918 = vrot.slane %v1716, %v1917
    %v1919 = vadd.f32 %v1910, %v1918
    %v1920 = vxor.u32 %v1919, 2147483648
    %v1921 = vmul.f32 %v1920, 1.442695
    %v1922 = vpow.pop %v1921
    %v1923 = vadd.f32 %v1922, 1.0
    %v1924 = vrcp.pop %v1923
    %v1925 = vmul.f32 1.0, %v1924
    %v1926 = vmul.f32 %v1925, 2.0
    %v1927 = vsub.f32 %v1926, 1.0
    %v1928 = vmul.f32 %v1925, %v1687
    %1930 = vrot.lane.b32.xlu0 %v1927, 64
    %v1931 = vpop.permute.xlu0 %1930
    %v1933 = vmul.f32 %v1925, %v1931
    %1935 = vrot.lane.b32.xlu0 %v1933, 32
    %v1936 = vpop.permute.xlu0 %1935
    %v1938 = vadd.f32 %v1928, %v1936
    %v1939 = vtanh.pop %v1938
    %1941 = vrot.lane.b32.xlu0 %v1939, 64
    %v1942 = vpop.permute.xlu0 %1941
    %v1944 = vmul.f32 %v1925, %v1942
    %v1945 = vpack.c.bf16 %v1944, %v1944
    %1946 = vmatprep.subr.bf16.mxu0 0
    %1947 = vmatpush1.bf16.msra.mxu0 %v1725
    %1948 = vmatprep.subr.bf16.mxu0 0
    %1949 = vmatpush1.bf16.msra.mxu0 %v1726
    %1950 = vmatprep.subr.bf16.mxu0 0
    %1951 = vmatpush1.bf16.msra.mxu0 0
    %1952 = vmatprep.subr.bf16.mxu0 0
    %1953 = vmatpush1.bf16.msra.mxu0 0
    %1954 = vmatprep.subr.bf16.mxu0 0
    %1955 = vmatpush1.bf16.msra.mxu0 0
    %1956 = vmatprep.subr.bf16.mxu0 0
    %1957 = vmatpush1.bf16.msra.mxu0 0
    %1958 = vmatprep.subr.bf16.mxu0 0
    %1959 = vmatpush1.bf16.msra.mxu0 0
    %1960 = vmatprep.subr.bf16.mxu0 0
    %1961 = vmatpush1.bf16.msra.mxu0 0
    %1962 = vmatprep.subr.bf16.mxu0 0
    %1963 = vmatpush1.bf16.msra.mxu0 0
    %1964 = vmatprep.subr.bf16.mxu0 0
    %1965 = vmatpush1.bf16.msra.mxu0 0
    %1966 = vmatprep.subr.bf16.mxu0 0
    %1967 = vmatpush1.bf16.msra.mxu0 0
    %1968 = vmatprep.subr.bf16.mxu0 0
    %1969 = vmatpush1.bf16.msra.mxu0 0
    %1970 = vmatprep.subr.bf16.mxu0 0
    %1971 = vmatpush1.bf16.msra.mxu0 0
    %1972 = vmatprep.subr.bf16.mxu0 0
    %1973 = vmatpush1.bf16.msra.mxu0 0
    %1974 = vmatprep.subr.bf16.mxu0 0
    %1975 = vmatpush1.bf16.msra.mxu0 0
    %1976 = vmatprep.subr.bf16.mxu0 0
    %1977 = vmatpush1.bf16.msra.mxu0 0
    %1978 = vmatprep.mubr.bf16.mxu0 0
    %1979 = vmatmul.mubr.bf16.gmra.mrb[0].mxu0 %v1873
    %v1980 = vpop.f32.mrb[0].mxu0
    %v1981 = vadd.f32 0.0, %v1980
    %v1982 = vpop.f32.mrb[0].mxu0
    %v1983 = vpop.f32.mrb[0].mxu0
    %v1984 = vpop.f32.mrb[0].mxu0
    %1985 = vdwg.mxu0
    %1987 = vrot.lane.b32.xlu0 %v1945, 32
    %v1988 = vpop.permute.xlu0 %1987
    %v1993 = vunpack.c.l.b16 %v1701
    %v1994 = vunpack.c.l.b16 %v1702
    %v1995 = vunpack.c.l.b16 %v1703
    %v1996 = vunpack.c.l.b16 %v1704
    %v1997 = vpack.c.b16 %v1994, %v1993
    %v1998 = vpack.c.b16 %v1996, %v1995
    %v2002 = vsel %vm83, %v1988, 0
    %2004 = vmatprep.subr.bf16.mxu0 0
    %2005 = vmatpush1.bf16.msra.mxu0 %v1997
    %2006 = vmatprep.subr.bf16.mxu0 0
    %2007 = vmatpush1.bf16.msra.mxu0 %v1998
    %2008 = vmatprep.subr.bf16.mxu0 0
    %2009 = vmatpush1.bf16.msra.mxu0 0
    %2010 = vmatprep.subr.bf16.mxu0 0
    %2011 = vmatpush1.bf16.msra.mxu0 0
    %2012 = vmatprep.subr.bf16.mxu0 0
    %2013 = vmatpush1.bf16.msra.mxu0 0
    %2014 = vmatprep.subr.bf16.mxu0 0
    %2015 = vmatpush1.bf16.msra.mxu0 0
    %2016 = vmatprep.subr.bf16.mxu0 0
    %2017 = vmatpush1.bf16.msra.mxu0 0
    %2018 = vmatprep.subr.bf16.mxu0 0
    %2019 = vmatpush1.bf16.msra.mxu0 0
    %2020 = vmatprep.subr.bf16.mxu0 0
    %2021 = vmatpush1.bf16.msra.mxu0 0
    %2022 = vmatprep.subr.bf16.mxu0 0
    %2023 = vmatpush1.bf16.msra.mxu0 0
    %2024 = vmatprep.subr.bf16.mxu0 0
    %2025 = vmatpush1.bf16.msra.mxu0 0
    %2026 = vmatprep.subr.bf16.mxu0 0
    %2027 = vmatpush1.bf16.msra.mxu0 0
    %2028 = vmatprep.subr.bf16.mxu0 0
    %2029 = vmatpush1.bf16.msra.mxu0 0
    %2030 = vmatprep.subr.bf16.mxu0 0
    %2031 = vmatpush1.bf16.msra.mxu0 0
    %2032 = vmatprep.subr.bf16.mxu0 0
    %2033 = vmatpush1.bf16.msra.mxu0 0
    %2034 = vmatprep.subr.bf16.mxu0 0
    %2035 = vmatpush1.bf16.msra.mxu0 0
    %2036 = vmatprep.mubr.bf16.mxu0 0
    %2037 = vmatmul.mubr.bf16.gmra.mrb[0].mxu0 %v2002
    %v2038 = vpop.f32.mrb[0].mxu0
    %v2039 = vadd.f32 %v1981, %v2038
    %v2040 = vpop.f32.mrb[0].mxu0
    %v2041 = vpop.f32.mrb[0].mxu0
    %v2042 = vpop.f32.mrb[0].mxu0
    %2043 = vdwg.mxu0
    %v2044 = vlaneseq
    %v2045 = vshrl.u32 %v2044, 7
    %v2046 = vsub.s32 0, %v2045
    %v2047 = vrot.slane %v1715, %v2046
    %v2048 = vadd.f32 %v2039, %v2047
    %v2049 = vxor.u32 %v2048, 2147483648
    %v2050 = vmul.f32 %v2049, 1.442695
    %v2051 = vpow.pop %v2050
    %v2052 = vadd.f32 %v2051, 1.0
    %v2053 = vrcp.pop %v2052
    %v2054 = vmul.f32 1.0, %v2053
    %v2055 = vmul.f32 %v2054, 2.0
    %v2056 = vsub.f32 %v2055, 1.0
    %v2057 = vmul.f32 %v2054, %v1791
    %2059 = vrot.lane.b32.xlu0 %v2056, 64
    %v2060 = vpop.permute.xlu0 %2059
    %v2062 = vmul.f32 %v2054, %v2060
    %2064 = vrot.lane.b32.xlu0 %v2062, 32
    %v2065 = vpop.permute.xlu0 %2064
    %v2067 = vadd.f32 %v2057, %v2065
    %v2068 = vtanh.pop %v2067
    %2070 = vrot.lane.b32.xlu0 %v2068, 64
    %v2071 = vpop.permute.xlu0 %2070
    %v2073 = vmul.f32 %v2054, %v2071
    %v2074 = vpack.c.bf16 %v2073, %v2073
    %2075 = vmatprep.subr.bf16.mxu0 0
    %2076 = vmatpush1.bf16.msra.mxu0 %v1810
    %2077 = vmatprep.subr.bf16.mxu0 0
    %2078 = vmatpush1.bf16.msra.mxu0 %v1811
    %2079 = vmatprep.subr.bf16.mxu0 0
    %2080 = vmatpush1.bf16.msra.mxu0 0
    %2081 = vmatprep.subr.bf16.mxu0 0
    %2082 = vmatpush1.bf16.msra.mxu0 0
    %2083 = vmatprep.subr.bf16.mxu0 0
    %2084 = vmatpush1.bf16.msra.mxu0 0
    %2085 = vmatprep.subr.bf16.mxu0 0
    %2086 = vmatpush1.bf16.msra.mxu0 0
    %2087 = vmatprep.subr.bf16.mxu0 0
    %2088 = vmatpush1.bf16.msra.mxu0 0
    %2089 = vmatprep.subr.bf16.mxu0 0
    %2090 = vmatpush1.bf16.msra.mxu0 0
    %2091 = vmatprep.subr.bf16.mxu0 0
    %2092 = vmatpush1.bf16.msra.mxu0 0
    %2093 = vmatprep.subr.bf16.mxu0 0
    %2094 = vmatpush1.bf16.msra.mxu0 0
    %2095 = vmatprep.subr.bf16.mxu0 0
    %2096 = vmatpush1.bf16.msra.mxu0 0
    %2097 = vmatprep.subr.bf16.mxu0 0
    %2098 = vmatpush1.bf16.msra.mxu0 0
    %2099 = vmatprep.subr.bf16.mxu0 0
    %2100 = vmatpush1.bf16.msra.mxu0 0
    %2101 = vmatprep.subr.bf16.mxu0 0
    %2102 = vmatpush1.bf16.msra.mxu0 0
    %2103 = vmatprep.subr.bf16.mxu0 0
    %2104 = vmatpush1.bf16.msra.mxu0 0
    %2105 = vmatprep.subr.bf16.mxu0 0
    %2106 = vmatpush1.bf16.msra.mxu0 0
    %2107 = vmatprep.mubr.bf16.mxu0 0
    %2108 = vmatmul.mubr.bf16.gmra.mrb[0].mxu0 %v2002
    %v2109 = vpop.f32.mrb[0].mxu0
    %v2110 = vadd.f32 0.0, %v2109
    %v2111 = vpop.f32.mrb[0].mxu0
    %v2112 = vpop.f32.mrb[0].mxu0
    %v2113 = vpop.f32.mrb[0].mxu0
    %2114 = vdwg.mxu0
    %2116 = vrot.lane.b32.xlu0 %v2074, 32
    %v2117 = vpop.permute.xlu0 %2116
    %v2119 = vsel %vm83, %v2117, 0
    %2121 = vmatprep.subr.bf16.mxu0 0
    %2122 = vmatpush1.bf16.msra.mxu0 %v1868
    %2123 = vmatprep.subr.bf16.mxu0 0
    %2124 = vmatpush1.bf16.msra.mxu0 %v1869
    %2125 = vmatprep.subr.bf16.mxu0 0
    %2126 = vmatpush1.bf16.msra.mxu0 0
    %2127 = vmatprep.subr.bf16.mxu0 0
    %2128 = vmatpush1.bf16.msra.mxu0 0
    %2129 = vmatprep.subr.bf16.mxu0 0
    %2130 = vmatpush1.bf16.msra.mxu0 0
    %2131 = vmatprep.subr.bf16.mxu0 0
    %2132 = vmatpush1.bf16.msra.mxu0 0
    %2133 = vmatprep.subr.bf16.mxu0 0
    %2134 = vmatpush1.bf16.msra.mxu0 0
    %2135 = vmatprep.subr.bf16.mxu0 0
    %2136 = vmatpush1.bf16.msra.mxu0 0
    %2137 = vmatprep.subr.bf16.mxu0 0
    %2138 = vmatpush1.bf16.msra.mxu0 0
    %2139 = vmatprep.subr.bf16.mxu0 0
    %2140 = vmatpush1.bf16.msra.mxu0 0
    %2141 = vmatprep.subr.bf16.mxu0 0
    %2142 = vmatpush1.bf16.msra.mxu0 0
    %2143 = vmatprep.subr.bf16.mxu0 0
    %2144 = vmatpush1.bf16.msra.mxu0 0
    %2145 = vmatprep.subr.bf16.mxu0 0
    %2146 = vmatpush1.bf16.msra.mxu0 0
    %2147 = vmatprep.subr.bf16.mxu0 0
    %2148 = vmatpush1.bf16.msra.mxu0 0
    %2149 = vmatprep.subr.bf16.mxu0 0
    %2150 = vmatpush1.bf16.msra.mxu0 0
    %2151 = vmatprep.subr.bf16.mxu0 0
    %2152 = vmatpush1.bf16.msra.mxu0 0
    %2153 = vmatprep.mubr.bf16.mxu0 0
    %2154 = vmatmul.mubr.bf16.gmra.mrb[0].mxu0 %v2119
    %v2155 = vpop.f32.mrb[0].mxu0
    %v2156 = vadd.f32 %v2110, %v2155
    %v2157 = vpop.f32.mrb[0].mxu0
    %v2158 = vpop.f32.mrb[0].mxu0
    %v2159 = vpop.f32.mrb[0].mxu0
    %2160 = vdwg.mxu0
    %v2161 = vadd.f32 %v2156, %v1918
    %v2162 = vxor.u32 %v2161, 2147483648
    %v2163 = vmul.f32 %v2162, 1.442695
    %v2164 = vpow.pop %v2163
    %v2165 = vadd.f32 %v2164, 1.0
    %v2166 = vrcp.pop %v2165
    %v2167 = vmul.f32 1.0, %v2166
    %v2168 = vmul.f32 %v2167, 2.0
    %v2169 = vsub.f32 %v2168, 1.0
    %v2170 = vmul.f32 %v2167, %v1938
    %2172 = vrot.lane.b32.xlu0 %v2169, 64
    %v2173 = vpop.permute.xlu0 %2172
    %v2175 = vmul.f32 %v2167, %v2173
    %2177 = vrot.lane.b32.xlu0 %v2175, 32
    %v2178 = vpop.permute.xlu0 %2177
    %v2180 = vadd.f32 %v2170, %v2178
    %v2181 = vtanh.pop %v2180
    %2183 = vrot.lane.b32.xlu0 %v2181, 64
    %v2184 = vpop.permute.xlu0 %2183
    %v2186 = vmul.f32 %v2167, %v2184
    %v2187 = vpack.c.bf16 %v2186, %v2186
    %2188 = vmatprep.subr.bf16.mxu0 0
    %2189 = vmatpush1.bf16.msra.mxu0 %v1725
    %2190 = vmatprep.subr.bf16.mxu0 0
    %2191 = vmatpush1.bf16.msra.mxu0 %v1726
    %2192 = vmatprep.subr.bf16.mxu0 0
    %2193 = vmatpush1.bf16.msra.mxu0 0
    %2194 = vmatprep.subr.bf16.mxu0 0
    %2195 = vmatpush1.bf16.msra.mxu0 0
    %2196 = vmatprep.subr.bf16.mxu0 0
    %2197 = vmatpush1.bf16.msra.mxu0 0
    %2198 = vmatprep.subr.bf16.mxu0 0
    %2199 = vmatpush1.bf16.msra.mxu0 0
    %2200 = vmatprep.subr.bf16.mxu0 0
    %2201 = vmatpush1.bf16.msra.mxu0 0
    %2202 = vmatprep.subr.bf16.mxu0 0
    %2203 = vmatpush1.bf16.msra.mxu0 0
    %2204 = vmatprep.subr.bf16.mxu0 0
    %2205 = vmatpush1.bf16.msra.mxu0 0
    %2206 = vmatprep.subr.bf16.mxu0 0
    %2207 = vmatpush1.bf16.msra.mxu0 0
    %2208 = vmatprep.subr.bf16.mxu0 0
    %2209 = vmatpush1.bf16.msra.mxu0 0
    %2210 = vmatprep.subr.bf16.mxu0 0
    %2211 = vmatpush1.bf16.msra.mxu0 0
    %2212 = vmatprep.subr.bf16.mxu0 0
    %2213 = vmatpush1.bf16.msra.mxu0 0
    %2214 = vmatprep.subr.bf16.mxu0 0
    %2215 = vmatpush1.bf16.msra.mxu0 0
    %2216 = vmatprep.subr.bf16.mxu0 0
    %2217 = vmatpush1.bf16.msra.mxu0 0
    %2218 = vmatprep.subr.bf16.mxu0 0
    %2219 = vmatpush1.bf16.msra.mxu0 0
    %2220 = vmatprep.mubr.bf16.mxu0 0
    %2221 = vmatmul.mubr.bf16.gmra.mrb[0].mxu0 %v2119
    %v2222 = vpop.f32.mrb[0].mxu0
    %v2223 = vadd.f32 0.0, %v2222
    %v2224 = vpop.f32.mrb[0].mxu0
    %v2225 = vpop.f32.mrb[0].mxu0
    %v2226 = vpop.f32.mrb[0].mxu0
    %2227 = vdwg.mxu0
    %2229 = vrot.lane.b32.xlu0 %v2187, 32
    %v2230 = vpop.permute.xlu0 %2229
    %v2232 = vsel %vm83, %v2230, 0
    %2234 = vmatprep.subr.bf16.mxu0 0
    %2235 = vmatpush1.bf16.msra.mxu0 %v1997
    %2236 = vmatprep.subr.bf16.mxu0 0
    %2237 = vmatpush1.bf16.msra.mxu0 %v1998
    %2238 = vmatprep.subr.bf16.mxu0 0
    %2239 = vmatpush1.bf16.msra.mxu0 0
    %2240 = vmatprep.subr.bf16.mxu0 0
    %2241 = vmatpush1.bf16.msra.mxu0 0
    %2242 = vmatprep.subr.bf16.mxu0 0
    %2243 = vmatpush1.bf16.msra.mxu0 0
    %2244 = vmatprep.subr.bf16.mxu0 0
    %2245 = vmatpush1.bf16.msra.mxu0 0
    %2246 = vmatprep.subr.bf16.mxu0 0
    %2247 = vmatpush1.bf16.msra.mxu0 0
    %2248 = vmatprep.subr.bf16.mxu0 0
    %2249 = vmatpush1.bf16.msra.mxu0 0
    %2250 = vmatprep.subr.bf16.mxu0 0
    %2251 = vmatpush1.bf16.msra.mxu0 0
    %2252 = vmatprep.subr.bf16.mxu0 0
    %2253 = vmatpush1.bf16.msra.mxu0 0
    %2254 = vmatprep.subr.bf16.mxu0 0
    %2255 = vmatpush1.bf16.msra.mxu0 0
    %2256 = vmatprep.subr.bf16.mxu0 0
    %2257 = vmatpush1.bf16.msra.mxu0 0
    %2258 = vmatprep.subr.bf16.mxu0 0
    %2259 = vmatpush1.bf16.msra.mxu0 0
    %2260 = vmatprep.subr.bf16.mxu0 0
    %2261 = vmatpush1.bf16.msra.mxu0 0
    %2262 = vmatprep.subr.bf16.mxu0 0
    %2263 = vmatpush1.bf16.msra.mxu0 0
    %2264 = vmatprep.subr.bf16.mxu0 0
    %2265 = vmatpush1.bf16.msra.mxu0 0
    %2266 = vmatprep.mubr.bf16.mxu0 0
    %2267 = vmatmul.mubr.bf16.gmra.mrb[0].mxu0 %v2232
    %v2268 = vpop.f32.mrb[0].mxu0
    %v2269 = vadd.f32 %v2223, %v2268
    %v2270 = vpop.f32.mrb[0].mxu0
    %v2271 = vpop.f32.mrb[0].mxu0
    %v2272 = vpop.f32.mrb[0].mxu0
    %2273 = vdwg.mxu0
    %v2274 = vadd.f32 %v2269, %v2047
    %v2275 = vxor.u32 %v2274, 2147483648
    %v2276 = vmul.f32 %v2275, 1.442695
    %v2277 = vpow.pop %v2276
    %v2278 = vadd.f32 %v2277, 1.0
    %v2279 = vrcp.pop %v2278
    %v2280 = vmul.f32 1.0, %v2279
    %v2281 = vmul.f32 %v2280, 2.0
    %v2282 = vsub.f32 %v2281, 1.0
    %v2283 = vmul.f32 %v2280, %v2067
    %2285 = vrot.lane.b32.xlu0 %v2282, 64
    %v2286 = vpop.permute.xlu0 %2285
    %v2288 = vmul.f32 %v2280, %v2286
    %2290 = vrot.lane.b32.xlu0 %v2288, 32
    %v2291 = vpop.permute.xlu0 %2290
    %v2293 = vadd.f32 %v2283, %v2291
    %v2294 = vtanh.pop %v2293
    %2296 = vrot.lane.b32.xlu0 %v2294, 64
    %v2297 = vpop.permute.xlu0 %2296
    %v2299 = vmul.f32 %v2280, %v2297
    %v2300 = vpack.c.bf16 %v2299, %v2299
    %2301 = vmatprep.subr.bf16.mxu0 0
    %2302 = vmatpush1.bf16.msra.mxu0 %v1810
    %2303 = vmatprep.subr.bf16.mxu0 0
    %2304 = vmatpush1.bf16.msra.mxu0 %v1811
    %2305 = vmatprep.subr.bf16.mxu0 0
    %2306 = vmatpush1.bf16.msra.mxu0 0
    %2307 = vmatprep.subr.bf16.mxu0 0
    %2308 = vmatpush1.bf16.msra.mxu0 0
    %2309 = vmatprep.subr.bf16.mxu0 0
    %2310 = vmatpush1.bf16.msra.mxu0 0
    %2311 = vmatprep.subr.bf16.mxu0 0
    %2312 = vmatpush1.bf16.msra.mxu0 0
    %2313 = vmatprep.subr.bf16.mxu0 0
    %2314 = vmatpush1.bf16.msra.mxu0 0
    %2315 = vmatprep.subr.bf16.mxu0 0
    %2316 = vmatpush1.bf16.msra.mxu0 0
    %2317 = vmatprep.subr.bf16.mxu0 0
    %2318 = vmatpush1.bf16.msra.mxu0 0
    %2319 = vmatprep.subr.bf16.mxu0 0
    %2320 = vmatpush1.bf16.msra.mxu0 0
    %2321 = vmatprep.subr.bf16.mxu0 0
    %2322 = vmatpush1.bf16.msra.mxu0 0
    %2323 = vmatprep.subr.bf16.mxu0 0
    %2324 = vmatpush1.bf16.msra.mxu0 0
    %2325 = vmatprep.subr.bf16.mxu0 0
    %2326 = vmatpush1.bf16.msra.mxu0 0
    %2327 = vmatprep.subr.bf16.mxu0 0
    %2328 = vmatpush1.bf16.msra.mxu0 0
    %2329 = vmatprep.subr.bf16.mxu0 0
    %2330 = vmatpush1.bf16.msra.mxu0 0
    %2331 = vmatprep.subr.bf16.mxu0 0
    %2332 = vmatpush1.bf16.msra.mxu0 0
    %2333 = vmatprep.mubr.bf16.mxu0 0
    %2334 = vmatmul.mubr.bf16.gmra.mrb[0].mxu0 %v2232
    %v2335 = vpop.f32.mrb[0].mxu0
    %v2336 = vadd.f32 0.0, %v2335
    %v2337 = vpop.f32.mrb[0].mxu0
    %v2338 = vpop.f32.mrb[0].mxu0
    %v2339 = vpop.f32.mrb[0].mxu0
    %2340 = vdwg.mxu0
    %2342 = vrot.lane.b32.xlu0 %v2300, 32
    %v2343 = vpop.permute.xlu0 %2342
    %v2345 = vsel %vm83, %v2343, 0
    %2347 = vmatprep.subr.bf16.mxu0 0
    %2348 = vmatpush1.bf16.msra.mxu0 %v1868
    %2349 = vmatprep.subr.bf16.mxu0 0
    %2350 = vmatpush1.bf16.msra.mxu0 %v1869
    %2351 = vmatprep.subr.bf16.mxu0 0
    %2352 = vmatpush1.bf16.msra.mxu0 0
    %2353 = vmatprep.subr.bf16.mxu0 0
    %2354 = vmatpush1.bf16.msra.mxu0 0
    %2355 = vmatprep.subr.bf16.mxu0 0
    %2356 = vmatpush1.bf16.msra.mxu0 0
    %2357 = vmatprep.subr.bf16.mxu0 0
    %2358 = vmatpush1.bf16.msra.mxu0 0
    %2359 = vmatprep.subr.bf16.mxu0 0
    %2360 = vmatpush1.bf16.msra.mxu0 0
    %2361 = vmatprep.subr.bf16.mxu0 0
    %2362 = vmatpush1.bf16.msra.mxu0 0
    %2363 = vmatprep.subr.bf16.mxu0 0
    %2364 = vmatpush1.bf16.msra.mxu0 0
    %2365 = vmatprep.subr.bf16.mxu0 0
    %2366 = vmatpush1.bf16.msra.mxu0 0
    %2367 = vmatprep.subr.bf16.mxu0 0
    %2368 = vmatpush1.bf16.msra.mxu0 0
    %2369 = vmatprep.subr.bf16.mxu0 0
    %2370 = vmatpush1.bf16.msra.mxu0 0
    %2371 = vmatprep.subr.bf16.mxu0 0
    %2372 = vmatpush1.bf16.msra.mxu0 0
    %2373 = vmatprep.subr.bf16.mxu0 0
    %2374 = vmatpush1.bf16.msra.mxu0 0
    %2375 = vmatprep.subr.bf16.mxu0 0
    %2376 = vmatpush1.bf16.msra.mxu0 0
    %2377 = vmatprep.subr.bf16.mxu0 0
    %2378 = vmatpush1.bf16.msra.mxu0 0
    %2379 = vmatprep.mubr.bf16.mxu0 0
    %2380 = vmatmul.mubr.bf16.gmra.mrb[0].mxu0 %v2345
    %v2381 = vpop.f32.mrb[0].mxu0
    %v2382 = vadd.f32 %v2336, %v2381
    %v2383 = vpop.f32.mrb[0].mxu0
    %v2384 = vpop.f32.mrb[0].mxu0
    %v2385 = vpop.f32.mrb[0].mxu0
    %2386 = vdwg.mxu0
    %v2387 = vadd.f32 %v2382, %v1918
    %v2388 = vxor.u32 %v2387, 2147483648
    %v2389 = vmul.f32 %v2388, 1.442695
    %v2390 = vpow.pop %v2389
    %v2391 = vadd.f32 %v2390, 1.0
    %v2392 = vrcp.pop %v2391
    %v2393 = vmul.f32 1.0, %v2392
    %v2394 = vmul.f32 %v2393, 2.0
    %v2395 = vsub.f32 %v2394, 1.0
    %v2396 = vmul.f32 %v2393, %v2180
    %2398 = vrot.lane.b32.xlu0 %v2395, 64
    %v2399 = vpop.permute.xlu0 %2398
    %v2401 = vmul.f32 %v2393, %v2399
    %2403 = vrot.lane.b32.xlu0 %v2401, 32
    %v2404 = vpop.permute.xlu0 %2403
    %v2406 = vadd.f32 %v2396, %v2404
    %v2407 = vtanh.pop %v2406
    %2409 = vrot.lane.b32.xlu0 %v2407, 64
    %v2410 = vpop.permute.xlu0 %2409
    %v2412 = vmul.f32 %v2393, %v2410
    %v2413 = vpack.c.bf16 %v2412, %v2412
    %2414 = vmatprep.subr.bf16.mxu0 0
    %2415 = vmatpush1.bf16.msra.mxu0 %v1725
    %2416 = vmatprep.subr.bf16.mxu0 0
    %2417 = vmatpush1.bf16.msra.mxu0 %v1726
    %2418 = vmatprep.subr.bf16.mxu0 0
    %2419 = vmatpush1.bf16.msra.mxu0 0
    %2420 = vmatprep.subr.bf16.mxu0 0
    %2421 = vmatpush1.bf16.msra.mxu0 0
    %2422 = vmatprep.subr.bf16.mxu0 0
    %2423 = vmatpush1.bf16.msra.mxu0 0
    %2424 = vmatprep.subr.bf16.mxu0 0
    %2425 = vmatpush1.bf16.msra.mxu0 0
    %2426 = vmatprep.subr.bf16.mxu0 0
    %2427 = vmatpush1.bf16.msra.mxu0 0
    %2428 = vmatprep.subr.bf16.mxu0 0
    %2429 = vmatpush1.bf16.msra.mxu0 0
    %2430 = vmatprep.subr.bf16.mxu0 0
    %2431 = vmatpush1.bf16.msra.mxu0 0
    %2432 = vmatprep.subr.bf16.mxu0 0
    %2433 = vmatpush1.bf16.msra.mxu0 0
    %2434 = vmatprep.subr.bf16.mxu0 0
    %2435 = vmatpush1.bf16.msra.mxu0 0
    %2436 = vmatprep.subr.bf16.mxu0 0
    %2437 = vmatpush1.bf16.msra.mxu0 0
    %2438 = vmatprep.subr.bf16.mxu0 0
    %2439 = vmatpush1.bf16.msra.mxu0 0
    %2440 = vmatprep.subr.bf16.mxu0 0
    %2441 = vmatpush1.bf16.msra.mxu0 0
    %2442 = vmatprep.subr.bf16.mxu0 0
    %2443 = vmatpush1.bf16.msra.mxu0 0
    %2444 = vmatprep.subr.bf16.mxu0 0
    %2445 = vmatpush1.bf16.msra.mxu0 0
    %2446 = vmatprep.mubr.bf16.mxu0 0
    %2447 = vmatmul.mubr.bf16.gmra.mrb[0].mxu0 %v2345
    %v2448 = vpop.f32.mrb[0].mxu0
    %v2449 = vadd.f32 0.0, %v2448
    %v2450 = vpop.f32.mrb[0].mxu0
    %v2451 = vpop.f32.mrb[0].mxu0
    %v2452 = vpop.f32.mrb[0].mxu0
    %2453 = vdwg.mxu0
    %2455 = vrot.lane.b32.xlu0 %v2413, 32
    %v2456 = vpop.permute.xlu0 %2455
    %v2458 = vsel %vm83, %v2456, 0
    %2460 = vmatprep.subr.bf16.mxu0 0
    %2461 = vmatpush1.bf16.msra.mxu0 %v1997
    %2462 = vmatprep.subr.bf16.mxu0 0
    %2463 = vmatpush1.bf16.msra.mxu0 %v1998
    %2464 = vmatprep.subr.bf16.mxu0 0
    %2465 = vmatpush1.bf16.msra.mxu0 0
    %2466 = vmatprep.subr.bf16.mxu0 0
    %2467 = vmatpush1.bf16.msra.mxu0 0
    %2468 = vmatprep.subr.bf16.mxu0 0
    %2469 = vmatpush1.bf16.msra.mxu0 0
    %2470 = vmatprep.subr.bf16.mxu0 0
    %2471 = vmatpush1.bf16.msra.mxu0 0
    %2472 = vmatprep.subr.bf16.mxu0 0
    %2473 = vmatpush1.bf16.msra.mxu0 0
    %2474 = vmatprep.subr.bf16.mxu0 0
    %2475 = vmatpush1.bf16.msra.mxu0 0
    %2476 = vmatprep.subr.bf16.mxu0 0
    %2477 = vmatpush1.bf16.msra.mxu0 0
    %2478 = vmatprep.subr.bf16.mxu0 0
    %2479 = vmatpush1.bf16.msra.mxu0 0
    %2480 = vmatprep.subr.bf16.mxu0 0
    %2481 = vmatpush1.bf16.msra.mxu0 0
    %2482 = vmatprep.subr.bf16.mxu0 0
    %2483 = vmatpush1.bf16.msra.mxu0 0
    %2484 = vmatprep.subr.bf16.mxu0 0
    %2485 = vmatpush1.bf16.msra.mxu0 0
    %2486 = vmatprep.subr.bf16.mxu0 0
    %2487 = vmatpush1.bf16.msra.mxu0 0
    %2488 = vmatprep.subr.bf16.mxu0 0
    %2489 = vmatpush1.bf16.msra.mxu0 0
    %2490 = vmatprep.subr.bf16.mxu0 0
    %2491 = vmatpush1.bf16.msra.mxu0 0
    %2492 = vmatprep.mubr.bf16.mxu0 0
    %2493 = vmatmul.mubr.bf16.gmra.mrb[0].mxu0 %v2458
    %v2494 = vpop.f32.mrb[0].mxu0
    %v2495 = vadd.f32 %v2449, %v2494
    %v2496 = vpop.f32.mrb[0].mxu0
    %v2497 = vpop.f32.mrb[0].mxu0
    %v2498 = vpop.f32.mrb[0].mxu0
    %2499 = vdwg.mxu0
    %v2500 = vadd.f32 %v2495, %v2047
    %v2501 = vxor.u32 %v2500, 2147483648
    %v2502 = vmul.f32 %v2501, 1.442695
    %v2503 = vpow.pop %v2502
    %v2504 = vadd.f32 %v2503, 1.0
    %v2505 = vrcp.pop %v2504
    %v2506 = vmul.f32 1.0, %v2505
    %v2507 = vmul.f32 %v2506, 2.0
    %v2508 = vsub.f32 %v2507, 1.0
    %v2509 = vmul.f32 %v2506, %v2293
    %2511 = vrot.lane.b32.xlu0 %v2508, 64
    %v2512 = vpop.permute.xlu0 %2511
    %v2514 = vmul.f32 %v2506, %v2512
    %2516 = vrot.lane.b32.xlu0 %v2514, 32
    %v2517 = vpop.permute.xlu0 %2516
    %v2519 = vadd.f32 %v2509, %v2517
    %v2520 = vtanh.pop %v2519
    %2522 = vrot.lane.b32.xlu0 %v2520, 64
    %v2523 = vpop.permute.xlu0 %2522
    %v2525 = vmul.f32 %v2506, %v2523
    %v2526 = vpack.c.bf16 %v2525, %v2525
    %2527 = vmatprep.subr.bf16.mxu0 0
    %2528 = vmatpush1.bf16.msra.mxu0 %v1810
    %2529 = vmatprep.subr.bf16.mxu0 0
    %2530 = vmatpush1.bf16.msra.mxu0 %v1811
    %2531 = vmatprep.subr.bf16.mxu0 0
    %2532 = vmatpush1.bf16.msra.mxu0 0
    %2533 = vmatprep.subr.bf16.mxu0 0
    %2534 = vmatpush1.bf16.msra.mxu0 0
    %2535 = vmatprep.subr.bf16.mxu0 0
    %2536 = vmatpush1.bf16.msra.mxu0 0
    %2537 = vmatprep.subr.bf16.mxu0 0
    %2538 = vmatpush1.bf16.msra.mxu0 0
    %2539 = vmatprep.subr.bf16.mxu0 0
    %2540 = vmatpush1.bf16.msra.mxu0 0
    %2541 = vmatprep.subr.bf16.mxu0 0
    %2542 = vmatpush1.bf16.msra.mxu0 0
    %2543 = vmatprep.subr.bf16.mxu0 0
    %2544 = vmatpush1.bf16.msra.mxu0 0
    %2545 = vmatprep.subr.bf16.mxu0 0
    %2546 = vmatpush1.bf16.msra.mxu0 0
    %2547 = vmatprep.subr.bf16.mxu0 0
    %2548 = vmatpush1.bf16.msra.mxu0 0
    %2549 = vmatprep.subr.bf16.mxu0 0
    %2550 = vmatpush1.bf16.msra.mxu0 0
    %2551 = vmatprep.subr.bf16.mxu0 0
    %2552 = vmatpush1.bf16.msra.mxu0 0
    %2553 = vmatprep.subr.bf16.mxu0 0
    %2554 = vmatpush1.bf16.msra.mxu0 0
    %2555 = vmatprep.subr.bf16.mxu0 0
    %2556 = vmatpush1.bf16.msra.mxu0 0
    %2557 = vmatprep.subr.bf16.mxu0 0
    %2558 = vmatpush1.bf16.msra.mxu0 0
    %2559 = vmatprep.mubr.bf16.mxu0 0
    %2560 = vmatmul.mubr.bf16.gmra.mrb[0].mxu0 %v2458
    %v2561 = vpop.f32.mrb[0].mxu0
    %v2562 = vadd.f32 0.0, %v2561
    %v2563 = vpop.f32.mrb[0].mxu0
    %v2564 = vpop.f32.mrb[0].mxu0
    %v2565 = vpop.f32.mrb[0].mxu0
    %2566 = vdwg.mxu0
    %2568 = vrot.lane.b32.xlu0 %v2526, 32
    %v2569 = vpop.permute.xlu0 %2568
    %v2571 = vsel %vm83, %v2569, 0
    %2573 = vmatprep.subr.bf16.mxu0 0
    %2574 = vmatpush1.bf16.msra.mxu0 %v1868
    %2575 = vmatprep.subr.bf16.mxu0 0
    %2576 = vmatpush1.bf16.msra.mxu0 %v1869
    %2577 = vmatprep.subr.bf16.mxu0 0
    %2578 = vmatpush1.bf16.msra.mxu0 0
    %2579 = vmatprep.subr.bf16.mxu0 0
    %2580 = vmatpush1.bf16.msra.mxu0 0
    %2581 = vmatprep.subr.bf16.mxu0 0
    %2582 = vmatpush1.bf16.msra.mxu0 0
    %2583 = vmatprep.subr.bf16.mxu0 0
    %2584 = vmatpush1.bf16.msra.mxu0 0
    %2585 = vmatprep.subr.bf16.mxu0 0
    %2586 = vmatpush1.bf16.msra.mxu0 0
    %2587 = vmatprep.subr.bf16.mxu0 0
    %2588 = vmatpush1.bf16.msra.mxu0 0
    %2589 = vmatprep.subr.bf16.mxu0 0
    %2590 = vmatpush1.bf16.msra.mxu0 0
    %2591 = vmatprep.subr.bf16.mxu0 0
    %2592 = vmatpush1.bf16.msra.mxu0 0
    %2593 = vmatprep.subr.bf16.mxu0 0
    %2594 = vmatpush1.bf16.msra.mxu0 0
    %2595 = vmatprep.subr.bf16.mxu0 0
    %2596 = vmatpush1.bf16.msra.mxu0 0
    %2597 = vmatprep.subr.bf16.mxu0 0
    %2598 = vmatpush1.bf16.msra.mxu0 0
    %2599 = vmatprep.subr.bf16.mxu0 0
    %2600 = vmatpush1.bf16.msra.mxu0 0
    %2601 = vmatprep.subr.bf16.mxu0 0
    %2602 = vmatpush1.bf16.msra.mxu0 0
    %2603 = vmatprep.subr.bf16.mxu0 0
    %2604 = vmatpush1.bf16.msra.mxu0 0
    %2605 = vmatprep.mubr.bf16.mxu0 0
    %2606 = vmatmul.mubr.bf16.gmra.mrb[0].mxu0 %v2571
    %v2607 = vpop.f32.mrb[0].mxu0
    %v2608 = vadd.f32 %v2562, %v2607
    %v2609 = vpop.f32.mrb[0].mxu0
    %v2610 = vpop.f32.mrb[0].mxu0
    %v2611 = vpop.f32.mrb[0].mxu0
    %2612 = vdwg.mxu0
    %v2613 = vadd.f32 %v2608, %v1918
    %v2614 = vxor.u32 %v2613, 2147483648
    %v2615 = vmul.f32 %v2614, 1.442695
    %v2616 = vpow.pop %v2615
    %v2617 = vadd.f32 %v2616, 1.0
    %v2618 = vrcp.pop %v2617
    %v2619 = vmul.f32 1.0, %v2618
    %v2620 = vmul.f32 %v2619, 2.0
    %v2621 = vsub.f32 %v2620, 1.0
    %v2622 = vmul.f32 %v2619, %v2406
    %2624 = vrot.lane.b32.xlu0 %v2621, 64
    %v2625 = vpop.permute.xlu0 %2624
    %v2627 = vmul.f32 %v2619, %v2625
    %2629 = vrot.lane.b32.xlu0 %v2627, 32
    %v2630 = vpop.permute.xlu0 %2629
    %v2632 = vadd.f32 %v2622, %v2630
    %v2633 = vtanh.pop %v2632
    %2635 = vrot.lane.b32.xlu0 %v2633, 64
    %v2636 = vpop.permute.xlu0 %2635
    %v2638 = vmul.f32 %v2619, %v2636
    %v2639 = vpack.c.bf16 %v2638, %v2638
    %v2640 = vrot.slane %v2187, 7
    %v2641 = vrot.slane %v2413, 6
    %v2643 = vrot.slane %v2639, 5
    %vm2644 = vcmask 1040384
    %v2647 = vsel %vm2644, %v1945, %v2640
    %vm2648 = vcmask 1041408
    %v2650 = vsel %vm2648, %v2647, %v2641
    %vm2651 = vcmask 1042432
    %v2653 = vsel %vm2651, %v2650, %v2643
    %s2654 = scalar_lea.vmem [#allocation5], 144
    %v2655 = vld [vmem:[%s2654] sm:$0xf]
    %v2656 = vld [vmem:[%s2654 + $0x4] sm:$0xf]
    %v2657 = vld [vmem:[%s2654 + $0x8] sm:$0xf]
    %v2658 = vld [vmem:[%s2654 + $0xc] sm:$0xf]
    %v2659 = vld [vmem:[#allocation7 + $0x5] sm:$0x1]
    %v2660 = vlaneseq
    %v2661 = vshrl.u32 %v2660, 7
    %v2662 = vsub.s32 0, %v2661
    %v2663 = vrot.slane %v2659, %v2662
    %2665 = vrot.lane.b32.xlu0 %v2653, 32
    %v2666 = vpop.permute.xlu0 %2665
    %v2671 = vunpack.c.l.b16 %v2655
    %v2672 = vunpack.c.l.b16 %v2656
    %v2673 = vunpack.c.l.b16 %v2657
    %v2674 = vunpack.c.l.b16 %v2658
    %v2675 = vpack.c.b16 %v2672, %v2671
    %v2676 = vpack.c.b16 %v2674, %v2673
    %v2680 = vsel %vm83, %v2666, 0
    %2682 = vmatprep.subr.bf16.mxu0 0
    %2683 = vmatpush1.bf16.msra.mxu0 %v2675
    %2684 = vmatprep.subr.bf16.mxu0 0
    %2685 = vmatpush1.bf16.msra.mxu0 %v2676
    %2686 = vmatprep.subr.bf16.mxu0 0
    %2687 = vmatpush1.bf16.msra.mxu0 0
    %2688 = vmatprep.subr.bf16.mxu0 0
    %2689 = vmatpush1.bf16.msra.mxu0 0
    %2690 = vmatprep.subr.bf16.mxu0 0
    %2691 = vmatpush1.bf16.msra.mxu0 0
    %2692 = vmatprep.subr.bf16.mxu0 0
    %2693 = vmatpush1.bf16.msra.mxu0 0
    %2694 = vmatprep.subr.bf16.mxu0 0
    %2695 = vmatpush1.bf16.msra.mxu0 0
    %2696 = vmatprep.subr.bf16.mxu0 0
    %2697 = vmatpush1.bf16.msra.mxu0 0
    %2698 = vmatprep.subr.bf16.mxu0 0
    %2699 = vmatpush1.bf16.msra.mxu0 0
    %2700 = vmatprep.subr.bf16.mxu0 0
    %2701 = vmatpush1.bf16.msra.mxu0 0
    %2702 = vmatprep.subr.bf16.mxu0 0
    %2703 = vmatpush1.bf16.msra.mxu0 0
    %2704 = vmatprep.subr.bf16.mxu0 0
    %2705 = vmatpush1.bf16.msra.mxu0 0
    %2706 = vmatprep.subr.bf16.mxu0 0
    %2707 = vmatpush1.bf16.msra.mxu0 0
    %2708 = vmatprep.subr.bf16.mxu0 0
    %2709 = vmatpush1.bf16.msra.mxu0 0
    %2710 = vmatprep.subr.bf16.mxu0 0
    %2711 = vmatpush1.bf16.msra.mxu0 0
    %2712 = vmatprep.subr.bf16.mxu0 0
    %2713 = vmatpush1.bf16.msra.mxu0 0
    %2714 = vmatprep.mubr.bf16.mxu0 0
    %2715 = vmatmul.mubr.bf16.gmra.mrb[0].mxu0 %v2680
    %v2716 = vpop.f32.mrb[0].mxu0
    %v2717 = vadd.f32 %v2663, %v2716
    %v2718 = vpop.f32.mrb[0].mxu0
    %v2719 = vpop.f32.mrb[0].mxu0
    %v2720 = vpop.f32.mrb[0].mxu0
    %2721 = vdwg.mxu0
    %2722 = vst [vmem:[#allocation8] sm:$0xff] %v2717
    // Predicated region
    $region26: #{tpu_custom_call.1} parent=1 // pred_check
      _
    $region27: #{tpu_custom_call.1} parent=1 // pred_check_branch
      %2724 = sbr.rel (0) target = $region29
    $region28: #{tpu_custom_call.1} parent=1 // pred_region
      %s2726 = ssub.s32 128, 128
      %2727 = vsyncadd [#allocation4], %s2726
      %s2729 = sshll.u32 [#allocation8], 4
      %s2730 = int_to_ptr.vmem [resolvable:$true] %s2729
      %2732 = dma.vmem_to_hbm [thread:$0]  %s2730, 128, %s3, [#allocation4]
    $region29: #{tpu_custom_call.1} parent=1 // pred_fallthru
      _
    // Predicated region
    $region30: #{tpu_custom_call.1} parent=1 // pred_check
      _
    $region31: #{tpu_custom_call.1} parent=1 // pred_check_branch
      %2734 = sbr.rel (0) target = $region33
    $region32: #{tpu_custom_call.1} parent=1 // pred_region
      %2735 = dma.done [#allocation4], 128
    $region33: #{tpu_custom_call.1} parent=1 // pred_fallthru
      _
    %2736 = vsyncpa [#allocation3], 1
    %2737 = vsyncpa [#allocation6], 1
    %2738 = vsyncpa [#allocation4], 1

</llo_original>
